<compile_context>
chip_gen: v7x
topology: tpu7x:2x2x1
jax: 0.10.0
libtpu: 0.0.40
codegen_flags: <defaults>
</compile_context>

<pallas_src>
import functools

import jax
import jax.numpy as jnp
import numpy as np
from jax import lax
from jax.experimental import pallas as pl
from jax.experimental.pallas import tpu as pltpu


def _round_up(x: int, m: int) -> int:
    return (x + m - 1) // m * m


def _layer_vmem_bytes(t_chunk, b_p, in_p, h_p, act_bytes, gx_bytes):
    """Approximate per-layer VMEM footprint of the LSTM kernel."""
    G = 4 * h_p
    return ((in_p + h_p) * G * act_bytes          # resident W_ih, W_hh
            + G * 4                               # resident bias (f32)
            + t_chunk * b_p * G * gx_bytes        # chunk gate pre-activations
            + 2 * t_chunk * b_p * in_p * act_bytes  # x double-buffer
            + 2 * t_chunk * b_p * h_p * act_bytes   # y double-buffer
            + 4 * b_p * h_p * 4)                    # resident h/c outputs


def _pick_t_chunk(T, b_p, in_p, h_p, act_bytes, gx_bytes, *, cap, budget):
    """Largest time chunk whose VMEM need fits the per-generation budget."""
    tc = max(1, min(T, cap))
    while tc > 1 and _layer_vmem_bytes(tc, b_p, in_p, h_p,
                                       act_bytes, gx_bytes) > budget:
        tc = (tc + 1) // 2
    return tc


# ----------------------------------------------------------------------------
# Per-layer LSTM Pallas kernel (layer-major / cuDNN style)
# ----------------------------------------------------------------------------
def _make_lstm_layer_kernel(t_chunk, b_p, in_p, h_p, t_total, mask_tail,
                            out_dtype, unroll):
    """Ref order:
       x_ref, w_ih_hbm, w_hh_hbm, b_hbm,            (inputs)
       y_ref, h_ref, c_ref,                         (outputs; h/c carry state)
       w_ih_sc, w_hh_sc, b_sc, gx_sc, sem           (scratch)
    """
    G = 4 * h_p

    def kernel(x_ref, w_ih_hbm, w_hh_hbm, b_hbm,
               y_ref, h_ref, c_ref,
               w_ih_sc, w_hh_sc, b_sc, gx_sc, sem):
        t = pl.program_id(0)

        # ---- grid step 0: zero the recurrent state (carried in the resident
        #      output blocks) and kick off the one-time weight DMAs.
        @pl.when(t == 0)
        def _():
            h_ref[...] = jnp.zeros_like(h_ref)
            c_ref[...] = jnp.zeros_like(c_ref)
            pltpu.make_async_copy(w_ih_hbm, w_ih_sc, sem.at[0]).start()
            pltpu.make_async_copy(w_hh_hbm, w_hh_sc, sem.at[1]).start()
            pltpu.make_async_copy(b_hbm, b_sc, sem.at[2]).start()

        # Only W_ih is needed before the chunk projection matmul.
        @pl.when(t == 0)
        def _():
            pltpu.make_async_copy(w_ih_hbm, w_ih_sc, sem.at[0]).wait()

        # ---- Time-independent input projection for the whole chunk:
        #      one MXU matmul with M = t_chunk * b_p.
        x_chunk = x_ref[...].reshape(t_chunk * b_p, in_p)
        gx = jnp.dot(x_chunk, w_ih_sc[...], preferred_element_type=jnp.float32)

        # Bias DMA is tiny; wait just before the bias add.
        @pl.when(t == 0)
        def _():
            pltpu.make_async_copy(b_hbm, b_sc, sem.at[2]).wait()

        gx_sc[...] = (gx + b_sc[...]).reshape(t_chunk, b_p, G).astype(gx_sc.dtype)

        # W_hh (largest copy) is hidden behind the chunk matmul above.
        @pl.when(t == 0)
        def _():
            pltpu.make_async_copy(w_hh_hbm, w_hh_sc, sem.at[1]).wait()

        w_hh = w_hh_sc[...]

        # TODO(synk): hold W_hh in MXU staging registers across the chunk via
        # pltpu.matmul_push_rhs / matmul_acc_lhs / matmul_pop to avoid
        # re-streaming the RHS every timestep.
        def step(i, carry):
            h, c = carry
            gates = gx_sc[i].astype(jnp.float32) + jnp.dot(
                h.astype(w_hh.dtype), w_hh, preferred_element_type=jnp.float32)
            # Gate order (i, f, o, g): one contiguous sigmoid + one tanh.
            sig = jax.nn.sigmoid(gates[:, :3 * h_p])
            i_g = sig[:, 0 * h_p:1 * h_p]
            f_g = sig[:, 1 * h_p:2 * h_p]
            o_g = sig[:, 2 * h_p:3 * h_p]
            g_g = jnp.tanh(gates[:, 3 * h_p:])
            c_new = f_g * c + i_g * g_g
            h_new = o_g * jnp.tanh(c_new)
            if mask_tail:
                keep = (t * t_chunk + i) < t_total
                c_new = jnp.where(keep, c_new, c)
                h_new = jnp.where(keep, h_new, h)
            y_ref[i] = h_new.astype(out_dtype)  # hidden sequence for next layer
            return (h_new, c_new)

        h, c = lax.fori_loop(0, t_chunk, step, (h_ref[...], c_ref[...]),
                             unroll=unroll)
        h_ref[...] = h
        c_ref[...] = c

    return kernel


def _lstm_layer(x_tm, w_ih_t, w_hh_t, b, *, t_chunk, t_total,
                gx_dtype=jnp.float32):
    """x_tm: (T_pad, B_p, in_p) time-major.  Returns (y, h_T, c_T)."""
    T_pad, b_p, in_p = x_tm.shape
    h_p = w_hh_t.shape[0]
    G = 4 * h_p
    dt = x_tm.dtype
    n_chunks = T_pad // t_chunk
    mask_tail = T_pad != t_total
    unroll = min(t_chunk, 8)   # always partially unroll the recurrence

    act_bytes = jnp.dtype(dt).itemsize
    gx_bytes = jnp.dtype(gx_dtype).itemsize
    need = _layer_vmem_bytes(t_chunk, b_p, in_p, h_p, act_bytes, gx_bytes)
    vmem_limit = int(min(max(need * 5 // 4 + (2 << 20), 16 << 20), 64 << 20))

    kernel = _make_lstm_layer_kernel(t_chunk, b_p, in_p, h_p, t_total,
                                     mask_tail, dt, unroll)

    y, h, c = pl.pallas_call(
        kernel,
        out_shape=(
            jax.ShapeDtypeStruct((T_pad, b_p, h_p), dt),       # hidden sequence
            jax.ShapeDtypeStruct((b_p, h_p), jnp.float32),     # h_T
            jax.ShapeDtypeStruct((b_p, h_p), jnp.float32),     # c_T
        ),
        grid_spec=pltpu.PrefetchScalarGridSpec(
            num_scalar_prefetch=0,
            grid=(n_chunks,),
            in_specs=[
                # streamed activations: one time chunk per grid step
                pl.BlockSpec((t_chunk, b_p, in_p), lambda t: (t, 0, 0)),
                # resident weights: left in HBM, DMA'd once at t == 0
                pl.BlockSpec(memory_space=pl.ANY),   # w_ih_t (in_p, 4H_p)
                pl.BlockSpec(memory_space=pl.ANY),   # w_hh_t (H_p, 4H_p)
                pl.BlockSpec(memory_space=pl.ANY),   # bias   (1, 4H_p)
            ],
            out_specs=(
                pl.BlockSpec((t_chunk, b_p, h_p), lambda t: (t, 0, 0)),
                pl.BlockSpec((b_p, h_p), lambda t: (0, 0)),    # state-carrying
                pl.BlockSpec((b_p, h_p), lambda t: (0, 0)),    # state-carrying
            ),
            scratch_shapes=[
                pltpu.VMEM((in_p, G), w_ih_t.dtype),          # resident w_ih
                pltpu.VMEM((h_p, G), w_hh_t.dtype),           # resident w_hh
                pltpu.VMEM((1, G), jnp.float32),              # resident bias
                pltpu.VMEM((t_chunk, b_p, G), gx_dtype),      # chunk gate pre-acts
                pltpu.SemaphoreType.DMA((3,)),
            ],
        ),
        compiler_params=pltpu.CompilerParams(
            dimension_semantics=("arbitrary",),   # true time recurrence
            vmem_limit_bytes=vmem_limit),
    )(x_tm, w_ih_t, w_hh_t, b)
    return y, h, c


# ----------------------------------------------------------------------------
# Forward pass (wrapper)
# ----------------------------------------------------------------------------
def encoder_forward(src, kparams, *, n_layers: int, hid_dim: int,
                    t_chunk_cap: int = 256,
                    vmem_budget_bytes: int = 48 << 20,
                    gx_dtype=jnp.float32):
    """src: (B, T, input_dim) float32 -> (hidden, cell), each (n_layers, B, H)."""
    B, T, D = src.shape
    dt = kparams["w_hh_t_0"].dtype
    act_bytes = jnp.dtype(dt).itemsize
    gx_bytes = jnp.dtype(gx_dtype).itemsize

    # Batch padded to the dtype-native sublane tile (f32: 8, bf16: 16, int8: 32).
    sub = {4: 8, 2: 16, 1: 32}[act_bytes]
    b_p = _round_up(B, sub)

    D_p = kparams["w_ih_t_0"].shape[0]   # folded layer-0 input width (padded)
    H_p = kparams["w_hh_t_0"].shape[0]

    tc = _pick_t_chunk(T, b_p, max(D_p, H_p), H_p, act_bytes, gx_bytes,
                       cap=t_chunk_cap, budget=vmem_budget_bytes)
    T_pad = _round_up(T, tc)

    # Embedding Linear is folded into layer 0 (eval-mode dropout == identity),
    # so layer 0 consumes the (padded, time-major) source directly.
    src_p = jnp.pad(src, ((0, b_p - B), (0, T_pad - T), (0, D_p - D)))
    x = jnp.transpose(src_p, (1, 0, 2)).astype(dt)       # (T_pad, b_p, D_p)
    # dropout(embedded) -> identity (eval mode)

    hs, cs = [], []
    for l in range(n_layers):
        x, h, c = _lstm_layer(x, kparams[f"w_ih_t_{l}"], kparams[f"w_hh_t_{l}"],
                              kparams[f"b_{l}"], t_chunk=tc, t_total=T,
                              gx_dtype=gx_dtype)
        # inter-layer dropout -> identity (eval mode)
        hs.append(h)
        cs.append(c)

    hidden = jnp.stack(hs)[:, :B, :hid_dim]
    cell = jnp.stack(cs)[:, :B, :hid_dim]
    return hidden, cell


# ----------------------------------------------------------------------------
# Parameter handling
# ----------------------------------------------------------------------------
def init_params(key, input_dim, emb_dim, hid_dim, n_layers):
    """Canonical PyTorch-layout parameters (uniform(-1/sqrt(fan), 1/sqrt(fan)))."""
    params = {}
    ke = 1.0 / np.sqrt(input_dim)
    k = 1.0 / np.sqrt(hid_dim)
    keys = jax.random.split(key, 2 + 4 * n_layers)

    params["w_emb"] = jax.random.uniform(keys[0], (emb_dim, input_dim),
                                         jnp.float32, -ke, ke)
    params["b_emb"] = jax.random.uniform(keys[1], (emb_dim,), jnp.float32, -ke, ke)
    for l in range(n_layers):
        in_dim = emb_dim if l == 0 else hid_dim
        kw = keys[2 + 4 * l:2 + 4 * (l + 1)]
        params[f"w_ih_{l}"] = jax.random.uniform(kw[0], (4 * hid_dim, in_dim),
                                                 jnp.float32, -k, k)
        params[f"w_hh_{l}"] = jax.random.uniform(kw[1], (4 * hid_dim, hid_dim),
                                                 jnp.float32, -k, k)
        params[f"b_ih_{l}"] = jax.random.uniform(kw[2], (4 * hid_dim,),
                                                 jnp.float32, -k, k)
        params[f"b_hh_{l}"] = jax.random.uniform(kw[3], (4 * hid_dim,),
                                                 jnp.float32, -k, k)
    return params


def prepare_kernel_params(params, *, input_dim, emb_dim, hid_dim, n_layers,
                          param_dtype=jnp.float32):
    """Kernel-ready params:
       - embedding Linear folded into layer 0 (eval-mode / identity dropout),
       - gates reordered (i, f, g, o) -> (i, f, o, g),
       - gate blocks zero-padded to H_p = ceil128(H), input dims padded,
       - transposed to (in_p, 4*H_p), biases pre-summed, biases kept f32."""
    del emb_dim  # folded away
    H = hid_dim
    H_p = _round_up(H, 128)
    D_p = _round_up(input_dim, 128)
    perm = np.array([0, 1, 3, 2])   # (i, f, g, o) -> (i, f, o, g)

    def pad_gate_mat(w, in_dim, in_p):
        w4 = w.reshape(4, H, in_dim)[perm]
        w4 = jnp.pad(w4, ((0, 0), (0, H_p - H), (0, in_p - in_dim)))
        return jnp.transpose(w4.reshape(4 * H_p, in_p))

    def pad_gate_vec(b):
        b4 = jnp.pad(b.reshape(4, H)[perm], ((0, 0), (0, H_p - H)))
        return b4.reshape(1, 4 * H_p)

    kp = {}
    # ---- layer 0 with folded embedding ----
    w_fold = params["w_ih_0"] @ params["w_emb"]                       # (4H, D_in)
    b_fold = (params["w_ih_0"] @ params["b_emb"]
              + params["b_ih_0"] + params["b_hh_0"])
    kp["w_ih_t_0"] = pad_gate_mat(w_fold, input_dim, D_p).astype(param_dtype)
    kp["w_hh_t_0"] = pad_gate_mat(params["w_hh_0"], H, H_p).astype(param_dtype)
    kp["b_0"] = pad_gate_vec(b_fold).astype(jnp.float32)

    # ---- layers 1..n-1 ----
    for l in range(1, n_layers):
        kp[f"w_ih_t_{l}"] = pad_gate_mat(params[f"w_ih_{l}"], H,
                                         H_p).astype(param_dtype)
        kp[f"w_hh_t_{l}"] = pad_gate_mat(params[f"w_hh_{l}"], H,
                                         H_p).astype(param_dtype)
        kp[f"b_{l}"] = pad_gate_vec(params[f"b_ih_{l}"]
                                    + params[f"b_hh_{l}"]).astype(jnp.float32)
    return kp


# ----------------------------------------------------------------------------
# Pure-JAX reference (for correctness check)
# ----------------------------------------------------------------------------
def reference_encoder(src, params, *, n_layers, hid_dim):
    B, T, _ = src.shape
    H = hid_dim
    x = src @ params["w_emb"].T + params["b_emb"]
    hs, cs = [], []
    for l in range(n_layers):
        w_ih_t = params[f"w_ih_{l}"].T
        w_hh_t = params[f"w_hh_{l}"].T
        b = params[f"b_ih_{l}"] + params[f"b_hh_{l}"]

        def step(carry, x_t):
            h, c = carry
            gates = x_t @ w_ih_t + h @ w_hh_t + b
            i_g = jax.nn.sigmoid(gates[:, 0 * H:1 * H])
            f_g = jax.nn.sigmoid(gates[:, 1 * H:2 * H])
            g_g = jnp.tanh(gates[:, 2 * H:3 * H])
            o_g = jax.nn.sigmoid(gates[:, 3 * H:4 * H])
            c_new = f_g * c + i_g * g_g
            h_new = o_g * jnp.tanh(c_new)
            return (h_new, c_new), h_new

        init = (jnp.zeros((B, H), jnp.float32), jnp.zeros((B, H), jnp.float32))
        (h, c), ys = lax.scan(step, init, jnp.transpose(x, (1, 0, 2)))
        x = jnp.transpose(ys, (1, 0, 2))
        hs.append(h)
        cs.append(c)
    return jnp.stack(hs), jnp.stack(cs)


# ----------------------------------------------------------------------------
if __name__ == "__main__":
    input_dim, emb_dim, hid_dim, n_layers = 16, 32, 32, 2
    B, T = 2, 8

    key = jax.random.PRNGKey(0)
    k_src, k_src2, k_par = jax.random.split(key, 3)
    src = jax.random.normal(k_src, (B, T, input_dim), jnp.float32)
    params = init_params(k_par, input_dim, emb_dim, hid_dim, n_layers)

    # float32 weights: tight check against the pure-JAX reference.
    # (bf16 weights/activations remain supported via param_dtype=jnp.bfloat16
    #  for real-TPU production runs, but are not exercised here because the
    #  interpret/CPU execution path has no BF16xBF16=F32 dot support.)
    kp = prepare_kernel_params(params, input_dim=input_dim, emb_dim=emb_dim,
                               hid_dim=hid_dim, n_layers=n_layers,
                               param_dtype=jnp.float32)

    h_ref, c_ref = reference_encoder(src, params, n_layers=n_layers,
                                     hid_dim=hid_dim)
    fwd = jax.jit(functools.partial(encoder_forward, n_layers=n_layers,
                                    hid_dim=hid_dim))
    hidden, cell = jax.block_until_ready(fwd(src, kp))
    assert hidden.shape == (n_layers, B, hid_dim)
    assert cell.shape == (n_layers, B, hid_dim)
    np.testing.assert_allclose(np.asarray(hidden), np.asarray(h_ref),
                               rtol=1e-4, atol=1e-4)
    np.testing.assert_allclose(np.asarray(cell), np.asarray(c_ref),
                               rtol=1e-4, atol=1e-4)

    # Awkward T + small chunk cap: exercises the multi-chunk pipeline and the
    # padded-time masked-tail path (T=6 -> T_pad=8 with t_chunk=4).
    T2 = 6
    src2 = jax.random.normal(k_src2, (B, T2, input_dim), jnp.float32)
    h_ref2, c_ref2 = reference_encoder(src2, params, n_layers=n_layers,
                                       hid_dim=hid_dim)
    fwd2 = jax.jit(functools.partial(encoder_forward, n_layers=n_layers,
                                     hid_dim=hid_dim, t_chunk_cap=4))
    hidden2, cell2 = jax.block_until_ready(fwd2(src2, kp))
    np.testing.assert_allclose(np.asarray(hidden2), np.asarray(h_ref2),
                               rtol=1e-4, atol=1e-4)
    np.testing.assert_allclose(np.asarray(cell2), np.asarray(c_ref2),
                               rtol=1e-4, atol=1e-4)

    print("KERNEL_OK")
</pallas_src>

<mosaic_0001>
module attributes {stable_mosaic.version = 11 : i64} {
  func.func @kernel(%arg0: i32, %arg1: memref<8x8x128xf32, #tpu.memory_space<vmem>>, %arg2: memref<128x512xf32, #tpu.memory_space<any>>, %arg3: memref<128x512xf32, #tpu.memory_space<any>>, %arg4: memref<1x512xf32, #tpu.memory_space<any>>, %arg5: memref<8x8x128xf32, #tpu.memory_space<vmem>>, %arg6: memref<8x128xf32, #tpu.memory_space<vmem>>, %arg7: memref<8x128xf32, #tpu.memory_space<vmem>>, %arg8: memref<128x512xf32, #tpu.memory_space<vmem>>, %arg9: memref<128x512xf32, #tpu.memory_space<vmem>>, %arg10: memref<1x512xf32, #tpu.memory_space<vmem>>, %arg11: memref<8x8x512xf32, #tpu.memory_space<vmem>>, %arg12: memref<3x!tpu.dma_semaphore, #tpu.memory_space<semaphore_mem>>) attributes {dimension_semantics = [#tpu.dimension_semantics<arbitrary>], iteration_bounds = array<i64: 1>, scalar_prefetch = 0 : i64, scratch_operands = 5 : i64, tpu.core_type = #tpu.core_type<tc>, window_params = [{transform_indices = @transform_0, window_bounds = array<i64: 8, 8, 128>}, {}, {}, {}, {transform_indices = @transform_4, window_bounds = array<i64: 8, 8, 128>}, {pipeline_mode = #tpu.pipeline_mode<synchronous>, transform_indices = @transform_5, window_bounds = array<i64: 8, 128>}, {pipeline_mode = #tpu.pipeline_mode<synchronous>, transform_indices = @transform_6, window_bounds = array<i64: 8, 128>}]} {
    %c0_i32 = arith.constant 0 : i32
    %0 = arith.cmpi eq, %arg0, %c0_i32 : i32
    %1 = arith.extui %0 : i1 to i32
    %c0_i32_0 = arith.constant 0 : i32
    %2 = arith.cmpi ne, %1, %c0_i32_0 : i32
    scf.if %2 {
      %cst_75 = arith.constant 0.000000e+00 : f32
      %226 = vector.broadcast %cst_75 : f32 to vector<8x128xf32>
      %c0_76 = arith.constant 0 : index
      %c0_77 = arith.constant 0 : index
      %227 = vector.load %arg6[%c0_76, %c0_77] : memref<8x128xf32, #tpu.memory_space<vmem>>, vector<8x128xf32>
      tpu.vector_store %arg6[%c0_76, %c0_77], %226 {strides = array<i32>} : memref<8x128xf32, #tpu.memory_space<vmem>>, vector<8x128xf32>,
      %cst_78 = arith.constant 0.000000e+00 : f32
      %228 = vector.broadcast %cst_78 : f32 to vector<8x128xf32>
      %c0_79 = arith.constant 0 : index
      %c0_80 = arith.constant 0 : index
      %229 = vector.load %arg7[%c0_79, %c0_80] : memref<8x128xf32, #tpu.memory_space<vmem>>, vector<8x128xf32>
      tpu.vector_store %arg7[%c0_79, %c0_80], %228 {strides = array<i32>} : memref<8x128xf32, #tpu.memory_space<vmem>>, vector<8x128xf32>,
      %c0_i32_81 = arith.constant 0 : i32
      %230 = tpu.memref_slice %arg12[%c0_i32_81] : memref<3x!tpu.dma_semaphore, #tpu.memory_space<semaphore_mem>> -> memref<1x!tpu.dma_semaphore, #tpu.memory_space<semaphore_mem>>
      %231 = tpu.memref_squeeze %230 : memref<1x!tpu.dma_semaphore, #tpu.memory_space<semaphore_mem>> -> memref<!tpu.dma_semaphore, #tpu.memory_space<semaphore_mem>>
      tpu.enqueue_dma source(%arg2 : memref<128x512xf32, #tpu.memory_space<any>>) target(%arg8 : memref<128x512xf32, #tpu.memory_space<vmem>>) target_semaphore(%231 : memref<!tpu.dma_semaphore, #tpu.memory_space<semaphore_mem>>)
      %c1_i32_82 = arith.constant 1 : i32
      %232 = tpu.memref_slice %arg12[%c1_i32_82] : memref<3x!tpu.dma_semaphore, #tpu.memory_space<semaphore_mem>> -> memref<1x!tpu.dma_semaphore, #tpu.memory_space<semaphore_mem>>
      %233 = tpu.memref_squeeze %232 : memref<1x!tpu.dma_semaphore, #tpu.memory_space<semaphore_mem>> -> memref<!tpu.dma_semaphore, #tpu.memory_space<semaphore_mem>>
      tpu.enqueue_dma source(%arg3 : memref<128x512xf32, #tpu.memory_space<any>>) target(%arg9 : memref<128x512xf32, #tpu.memory_space<vmem>>) target_semaphore(%233 : memref<!tpu.dma_semaphore, #tpu.memory_space<semaphore_mem>>)
      %c2_i32_83 = arith.constant 2 : i32
      %234 = tpu.memref_slice %arg12[%c2_i32_83] : memref<3x!tpu.dma_semaphore, #tpu.memory_space<semaphore_mem>> -> memref<1x!tpu.dma_semaphore, #tpu.memory_space<semaphore_mem>>
      %235 = tpu.memref_squeeze %234 : memref<1x!tpu.dma_semaphore, #tpu.memory_space<semaphore_mem>> -> memref<!tpu.dma_semaphore, #tpu.memory_space<semaphore_mem>>
      tpu.enqueue_dma source(%arg4 : memref<1x512xf32, #tpu.memory_space<any>>) target(%arg10 : memref<1x512xf32, #tpu.memory_space<vmem>>) target_semaphore(%235 : memref<!tpu.dma_semaphore, #tpu.memory_space<semaphore_mem>>)
    } else {
    }
    %c0_i32_1 = arith.constant 0 : i32
    %3 = arith.cmpi eq, %arg0, %c0_i32_1 : i32
    %4 = arith.extui %3 : i1 to i32
    %c0_i32_2 = arith.constant 0 : i32
    %5 = arith.cmpi ne, %4, %c0_i32_2 : i32
    scf.if %5 {
      %c0_i32_75 = arith.constant 0 : i32
      %226 = tpu.memref_slice %arg12[%c0_i32_75] : memref<3x!tpu.dma_semaphore, #tpu.memory_space<semaphore_mem>> -> memref<1x!tpu.dma_semaphore, #tpu.memory_space<semaphore_mem>>
      %227 = tpu.memref_squeeze %226 : memref<1x!tpu.dma_semaphore, #tpu.memory_space<semaphore_mem>> -> memref<!tpu.dma_semaphore, #tpu.memory_space<semaphore_mem>>
      tpu.wait_dma2 semaphore(%227 : memref<!tpu.dma_semaphore, #tpu.memory_space<semaphore_mem>>) src(%arg2 : memref<128x512xf32, #tpu.memory_space<any>>) dst(%arg8 : memref<128x512xf32, #tpu.memory_space<vmem>>)
    } else {
    }
    %c0 = arith.constant 0 : index
    %c0_3 = arith.constant 0 : index
    %c0_4 = arith.constant 0 : index
    %6 = vector.load %arg1[%c0, %c0_3, %c0_4] : memref<8x8x128xf32, #tpu.memory_space<vmem>>, vector<8x8x128xf32>
    %7 = vector.shape_cast %6 : vector<8x8x128xf32> to vector<64x128xf32>
    %c0_5 = arith.constant 0 : index
    %c0_6 = arith.constant 0 : index
    %8 = vector.load %arg8[%c0_5, %c0_6] : memref<128x512xf32, #tpu.memory_space<vmem>>, vector<128x512xf32>
    %cst = arith.constant dense<0.000000e+00> : vector<64x512xf32>
    %9 = tpu.matmul %7, %8, %cst {dimension_numbers = #tpu.dot_dimension_numbers<[1], [0], [0], [1], [0, 0, 1, 1], [], []>} : vector<64x128xf32>, vector<128x512xf32>, vector<64x512xf32> -> vector<64x512xf32>
    %c0_i32_7 = arith.constant 0 : i32
    %10 = arith.cmpi eq, %arg0, %c0_i32_7 : i32
    %11 = arith.extui %10 : i1 to i32
    %c0_i32_8 = arith.constant 0 : i32
    %12 = arith.cmpi ne, %11, %c0_i32_8 : i32
    scf.if %12 {
      %c2_i32_75 = arith.constant 2 : i32
      %226 = tpu.memref_slice %arg12[%c2_i32_75] : memref<3x!tpu.dma_semaphore, #tpu.memory_space<semaphore_mem>> -> memref<1x!tpu.dma_semaphore, #tpu.memory_space<semaphore_mem>>
      %227 = tpu.memref_squeeze %226 : memref<1x!tpu.dma_semaphore, #tpu.memory_space<semaphore_mem>> -> memref<!tpu.dma_semaphore, #tpu.memory_space<semaphore_mem>>
      tpu.wait_dma2 semaphore(%227 : memref<!tpu.dma_semaphore, #tpu.memory_space<semaphore_mem>>) src(%arg4 : memref<1x512xf32, #tpu.memory_space<any>>) dst(%arg10 : memref<1x512xf32, #tpu.memory_space<vmem>>)
    } else {
    }
    %c0_9 = arith.constant 0 : index
    %c0_10 = arith.constant 0 : index
    %13 = vector.load %arg10[%c0_9, %c0_10] : memref<1x512xf32, #tpu.memory_space<vmem>>, vector<1x512xf32>
    %14 = vector.broadcast %13 : vector<1x512xf32> to vector<64x512xf32>
    %15 = arith.addf %9, %14 : vector<64x512xf32>
    %16 = vector.shape_cast %15 : vector<64x512xf32> to vector<8x8x512xf32>
    %c0_11 = arith.constant 0 : index
    %c0_12 = arith.constant 0 : index
    %c0_13 = arith.constant 0 : index
    %17 = vector.load %arg11[%c0_11, %c0_12, %c0_13] : memref<8x8x512xf32, #tpu.memory_space<vmem>>, vector<8x8x512xf32>
    tpu.vector_store %arg11[%c0_11, %c0_12, %c0_13], %16 {strides = array<i32>} : memref<8x8x512xf32, #tpu.memory_space<vmem>>, vector<8x8x512xf32>,
    %c0_i32_14 = arith.constant 0 : i32
    %18 = arith.cmpi eq, %arg0, %c0_i32_14 : i32
    %19 = arith.extui %18 : i1 to i32
    %c0_i32_15 = arith.constant 0 : i32
    %20 = arith.cmpi ne, %19, %c0_i32_15 : i32
    scf.if %20 {
      %c1_i32_75 = arith.constant 1 : i32
      %226 = tpu.memref_slice %arg12[%c1_i32_75] : memref<3x!tpu.dma_semaphore, #tpu.memory_space<semaphore_mem>> -> memref<1x!tpu.dma_semaphore, #tpu.memory_space<semaphore_mem>>
      %227 = tpu.memref_squeeze %226 : memref<1x!tpu.dma_semaphore, #tpu.memory_space<semaphore_mem>> -> memref<!tpu.dma_semaphore, #tpu.memory_space<semaphore_mem>>
      tpu.wait_dma2 semaphore(%227 : memref<!tpu.dma_semaphore, #tpu.memory_space<semaphore_mem>>) src(%arg3 : memref<128x512xf32, #tpu.memory_space<any>>) dst(%arg9 : memref<128x512xf32, #tpu.memory_space<vmem>>)
    } else {
    }
    %c0_16 = arith.constant 0 : index
    %c0_17 = arith.constant 0 : index
    %21 = vector.load %arg9[%c0_16, %c0_17] : memref<128x512xf32, #tpu.memory_space<vmem>>, vector<128x512xf32>
    %c0_18 = arith.constant 0 : index
    %c0_19 = arith.constant 0 : index
    %22 = vector.load %arg6[%c0_18, %c0_19] : memref<8x128xf32, #tpu.memory_space<vmem>>, vector<8x128xf32>
    %c0_20 = arith.constant 0 : index
    %c0_21 = arith.constant 0 : index
    %23 = vector.load %arg7[%c0_20, %c0_21] : memref<8x128xf32, #tpu.memory_space<vmem>>, vector<8x128xf32>
    %c0_i32_22 = arith.constant 0 : i32
    %24 = arith.index_cast %c0_i32_22 : i32 to index
    %c0_23 = arith.constant 0 : index
    %c0_24 = arith.constant 0 : index
    %25 = vector.load %arg11[%24, %c0_23, %c0_24] : memref<8x8x512xf32, #tpu.memory_space<vmem>>, vector<1x8x512xf32>
    %26 = vector.shape_cast %25 : vector<1x8x512xf32> to vector<8x512xf32>
    %cst_25 = arith.constant dense<0.000000e+00> : vector<8x512xf32>
    %27 = tpu.matmul %22, %21, %cst_25 {dimension_numbers = #tpu.dot_dimension_numbers<[1], [0], [0], [1], [0, 0, 1, 1], [], []>} : vector<8x128xf32>, vector<128x512xf32>, vector<8x512xf32> -> vector<8x512xf32>
    %28 = arith.addf %26, %27 : vector<8x512xf32>
    %29 = vector.extract_strided_slice %28 {offsets = [0, 0], sizes = [8, 384], strides = [1, 1]} : vector<8x512xf32> to vector<8x384xf32>
    %30 = arith.negf %29 : vector<8x384xf32>
    %31 = math.exp %30 : vector<8x384xf32>
    %cst_26 = arith.constant 1.000000e+00 : f32
    %32 = vector.broadcast %cst_26 : f32 to vector<8x384xf32>
    %33 = arith.addf %32, %31 : vector<8x384xf32>
    %34 = arith.divf %32, %33 : vector<8x384xf32>
    %35 = vector.extract_strided_slice %34 {offsets = [0, 0], sizes = [8, 128], strides = [1, 1]} : vector<8x384xf32> to vector<8x128xf32>
    %36 = vector.extract_strided_slice %34 {offsets = [0, 128], sizes = [8, 128], strides = [1, 1]} : vector<8x384xf32> to vector<8x128xf32>
    %37 = vector.extract_strided_slice %34 {offsets = [0, 256], sizes = [8, 128], strides = [1, 1]} : vector<8x384xf32> to vector<8x128xf32>
    %38 = vector.extract_strided_slice %28 {offsets = [0, 384], sizes = [8, 128], strides = [1, 1]} : vector<8x512xf32> to vector<8x128xf32>
    %39 = math.tanh %38 : vector<8x128xf32>
    %40 = arith.mulf %36, %23 : vector<8x128xf32>
    %41 = arith.mulf %35, %39 : vector<8x128xf32>
    %42 = arith.addf %40, %41 : vector<8x128xf32>
    %43 = math.tanh %42 : vector<8x128xf32>
    %44 = arith.mulf %37, %43 : vector<8x128xf32>
    %45 = arith.index_cast %c0_i32_22 : i32 to index
    %c0_27 = arith.constant 0 : index
    %c0_28 = arith.constant 0 : index
    %46 = vector.load %arg5[%45, %c0_27, %c0_28] : memref<8x8x128xf32, #tpu.memory_space<vmem>>, vector<1x8x128xf32>
    %47 = vector.shape_cast %46 : vector<1x8x128xf32> to vector<8x128xf32>
    %48 = vector.shape_cast %44 : vector<8x128xf32> to vector<1x8x128xf32>
    tpu.vector_store %arg5[%45, %c0_27, %c0_28], %48 {strides = array<i32>} : memref<8x8x128xf32, #tpu.memory_space<vmem>>, vector<1x8x128xf32>,
    %c1_i32 = arith.constant 1 : i32
    %49 = arith.index_cast %c1_i32 : i32 to index
    %c0_29 = arith.constant 0 : index
    %c0_30 = arith.constant 0 : index
    %50 = vector.load %arg11[%49, %c0_29, %c0_30] : memref<8x8x512xf32, #tpu.memory_space<vmem>>, vector<1x8x512xf32>
    %51 = vector.shape_cast %50 : vector<1x8x512xf32> to vector<8x512xf32>
    %cst_31 = arith.constant dense<0.000000e+00> : vector<8x512xf32>
    %52 = tpu.matmul %44, %21, %cst_31 {dimension_numbers = #tpu.dot_dimension_numbers<[1], [0], [0], [1], [0, 0, 1, 1], [], []>} : vector<8x128xf32>, vector<128x512xf32>, vector<8x512xf32> -> vector<8x512xf32>
    %53 = arith.addf %51, %52 : vector<8x512xf32>
    %54 = vector.extract_strided_slice %53 {offsets = [0, 0], sizes = [8, 384], strides = [1, 1]} : vector<8x512xf32> to vector<8x384xf32>
    %55 = arith.negf %54 : vector<8x384xf32>
    %56 = math.exp %55 : vector<8x384xf32>
    %cst_32 = arith.constant 1.000000e+00 : f32
    %57 = vector.broadcast %cst_32 : f32 to vector<8x384xf32>
    %58 = arith.addf %57, %56 : vector<8x384xf32>
    %59 = arith.divf %57, %58 : vector<8x384xf32>
    %60 = vector.extract_strided_slice %59 {offsets = [0, 0], sizes = [8, 128], strides = [1, 1]} : vector<8x384xf32> to vector<8x128xf32>
    %61 = vector.extract_strided_slice %59 {offsets = [0, 128], sizes = [8, 128], strides = [1, 1]} : vector<8x384xf32> to vector<8x128xf32>
    %62 = vector.extract_strided_slice %59 {offsets = [0, 256], sizes = [8, 128], strides = [1, 1]} : vector<8x384xf32> to vector<8x128xf32>
    %63 = vector.extract_strided_slice %53 {offsets = [0, 384], sizes = [8, 128], strides = [1, 1]} : vector<8x512xf32> to vector<8x128xf32>
    %64 = math.tanh %63 : vector<8x128xf32>
    %65 = arith.mulf %61, %42 : vector<8x128xf32>
    %66 = arith.mulf %60, %64 : vector<8x128xf32>
    %67 = arith.addf %65, %66 : vector<8x128xf32>
    %68 = math.tanh %67 : vector<8x128xf32>
    %69 = arith.mulf %62, %68 : vector<8x128xf32>
    %70 = arith.index_cast %c1_i32 : i32 to index
    %c0_33 = arith.constant 0 : index
    %c0_34 = arith.constant 0 : index
    %71 = vector.load %arg5[%70, %c0_33, %c0_34] : memref<8x8x128xf32, #tpu.memory_space<vmem>>, vector<1x8x128xf32>
    %72 = vector.shape_cast %71 : vector<1x8x128xf32> to vector<8x128xf32>
    %73 = vector.shape_cast %69 : vector<8x128xf32> to vector<1x8x128xf32>
    tpu.vector_store %arg5[%70, %c0_33, %c0_34], %73 {strides = array<i32>} : memref<8x8x128xf32, #tpu.memory_space<vmem>>, vector<1x8x128xf32>,
    %c2_i32 = arith.constant 2 : i32
    %74 = arith.index_cast %c2_i32 : i32 to index
    %c0_35 = arith.constant 0 : index
    %c0_36 = arith.constant 0 : index
    %75 = vector.load %arg11[%74, %c0_35, %c0_36] : memref<8x8x512xf32, #tpu.memory_space<vmem>>, vector<1x8x512xf32>
    %76 = vector.shape_cast %75 : vector<1x8x512xf32> to vector<8x512xf32>
    %cst_37 = arith.constant dense<0.000000e+00> : vector<8x512xf32>
    %77 = tpu.matmul %69, %21, %cst_37 {dimension_numbers = #tpu.dot_dimension_numbers<[1], [0], [0], [1], [0, 0, 1, 1], [], []>} : vector<8x128xf32>, vector<128x512xf32>, vector<8x512xf32> -> vector<8x512xf32>
    %78 = arith.addf %76, %77 : vector<8x512xf32>
    %79 = vector.extract_strided_slice %78 {offsets = [0, 0], sizes = [8, 384], strides = [1, 1]} : vector<8x512xf32> to vector<8x384xf32>
    %80 = arith.negf %79 : vector<8x384xf32>
    %81 = math.exp %80 : vector<8x384xf32>
    %cst_38 = arith.constant 1.000000e+00 : f32
    %82 = vector.broadcast %cst_38 : f32 to vector<8x384xf32>
    %83 = arith.addf %82, %81 : vector<8x384xf32>
    %84 = arith.divf %82, %83 : vector<8x384xf32>
    %85 = vector.extract_strided_slice %84 {offsets = [0, 0], sizes = [8, 128], strides = [1, 1]} : vector<8x384xf32> to vector<8x128xf32>
    %86 = vector.extract_strided_slice %84 {offsets = [0, 128], sizes = [8, 128], strides = [1, 1]} : vector<8x384xf32> to vector<8x128xf32>
    %87 = vector.extract_strided_slice %84 {offsets = [0, 256], sizes = [8, 128], strides = [1, 1]} : vector<8x384xf32> to vector<8x128xf32>
    %88 = vector.extract_strided_slice %78 {offsets = [0, 384], sizes = [8, 128], strides = [1, 1]} : vector<8x512xf32> to vector<8x128xf32>
    %89 = math.tanh %88 : vector<8x128xf32>
    %90 = arith.mulf %86, %67 : vector<8x128xf32>
    %91 = arith.mulf %85, %89 : vector<8x128xf32>
    %92 = arith.addf %90, %91 : vector<8x128xf32>
    %93 = math.tanh %92 : vector<8x128xf32>
    %94 = arith.mulf %87, %93 : vector<8x128xf32>
    %95 = arith.index_cast %c2_i32 : i32 to index
    %c0_39 = arith.constant 0 : index
    %c0_40 = arith.constant 0 : index
    %96 = vector.load %arg5[%95, %c0_39, %c0_40] : memref<8x8x128xf32, #tpu.memory_space<vmem>>, vector<1x8x128xf32>
    %97 = vector.shape_cast %96 : vector<1x8x128xf32> to vector<8x128xf32>
    %98 = vector.shape_cast %94 : vector<8x128xf32> to vector<1x8x128xf32>
    tpu.vector_store %arg5[%95, %c0_39, %c0_40], %98 {strides = array<i32>} : memref<8x8x128xf32, #tpu.memory_space<vmem>>, vector<1x8x128xf32>,
    %c3_i32 = arith.constant 3 : i32
    %99 = arith.index_cast %c3_i32 : i32 to index
    %c0_41 = arith.constant 0 : index
    %c0_42 = arith.constant 0 : index
    %100 = vector.load %arg11[%99, %c0_41, %c0_42] : memref<8x8x512xf32, #tpu.memory_space<vmem>>, vector<1x8x512xf32>
    %101 = vector.shape_cast %100 : vector<1x8x512xf32> to vector<8x512xf32>
    %cst_43 = arith.constant dense<0.000000e+00> : vector<8x512xf32>
    %102 = tpu.matmul %94, %21, %cst_43 {dimension_numbers = #tpu.dot_dimension_numbers<[1], [0], [0], [1], [0, 0, 1, 1], [], []>} : vector<8x128xf32>, vector<128x512xf32>, vector<8x512xf32> -> vector<8x512xf32>
    %103 = arith.addf %101, %102 : vector<8x512xf32>
    %104 = vector.extract_strided_slice %103 {offsets = [0, 0], sizes = [8, 384], strides = [1, 1]} : vector<8x512xf32> to vector<8x384xf32>
    %105 = arith.negf %104 : vector<8x384xf32>
    %106 = math.exp %105 : vector<8x384xf32>
    %cst_44 = arith.constant 1.000000e+00 : f32
    %107 = vector.broadcast %cst_44 : f32 to vector<8x384xf32>
    %108 = arith.addf %107, %106 : vector<8x384xf32>
    %109 = arith.divf %107, %108 : vector<8x384xf32>
    %110 = vector.extract_strided_slice %109 {offsets = [0, 0], sizes = [8, 128], strides = [1, 1]} : vector<8x384xf32> to vector<8x128xf32>
    %111 = vector.extract_strided_slice %109 {offsets = [0, 128], sizes = [8, 128], strides = [1, 1]} : vector<8x384xf32> to vector<8x128xf32>
    %112 = vector.extract_strided_slice %109 {offsets = [0, 256], sizes = [8, 128], strides = [1, 1]} : vector<8x384xf32> to vector<8x128xf32>
    %113 = vector.extract_strided_slice %103 {offsets = [0, 384], sizes = [8, 128], strides = [1, 1]} : vector<8x512xf32> to vector<8x128xf32>
    %114 = math.tanh %113 : vector<8x128xf32>
    %115 = arith.mulf %111, %92 : vector<8x128xf32>
    %116 = arith.mulf %110, %114 : vector<8x128xf32>
    %117 = arith.addf %115, %116 : vector<8x128xf32>
    %118 = math.tanh %117 : vector<8x128xf32>
    %119 = arith.mulf %112, %118 : vector<8x128xf32>
    %120 = arith.index_cast %c3_i32 : i32 to index
    %c0_45 = arith.constant 0 : index
    %c0_46 = arith.constant 0 : index
    %121 = vector.load %arg5[%120, %c0_45, %c0_46] : memref<8x8x128xf32, #tpu.memory_space<vmem>>, vector<1x8x128xf32>
    %122 = vector.shape_cast %121 : vector<1x8x128xf32> to vector<8x128xf32>
    %123 = vector.shape_cast %119 : vector<8x128xf32> to vector<1x8x128xf32>
    tpu.vector_store %arg5[%120, %c0_45, %c0_46], %123 {strides = array<i32>} : memref<8x8x128xf32, #tpu.memory_space<vmem>>, vector<1x8x128xf32>,
    %c4_i32 = arith.constant 4 : i32
    %124 = arith.index_cast %c4_i32 : i32 to index
    %c0_47 = arith.constant 0 : index
    %c0_48 = arith.constant 0 : index
    %125 = vector.load %arg11[%124, %c0_47, %c0_48] : memref<8x8x512xf32, #tpu.memory_space<vmem>>, vector<1x8x512xf32>
    %126 = vector.shape_cast %125 : vector<1x8x512xf32> to vector<8x512xf32>
    %cst_49 = arith.constant dense<0.000000e+00> : vector<8x512xf32>
    %127 = tpu.matmul %119, %21, %cst_49 {dimension_numbers = #tpu.dot_dimension_numbers<[1], [0], [0], [1], [0, 0, 1, 1], [], []>} : vector<8x128xf32>, vector<128x512xf32>, vector<8x512xf32> -> vector<8x512xf32>
    %128 = arith.addf %126, %127 : vector<8x512xf32>
    %129 = vector.extract_strided_slice %128 {offsets = [0, 0], sizes = [8, 384], strides = [1, 1]} : vector<8x512xf32> to vector<8x384xf32>
    %130 = arith.negf %129 : vector<8x384xf32>
    %131 = math.exp %130 : vector<8x384xf32>
    %cst_50 = arith.constant 1.000000e+00 : f32
    %132 = vector.broadcast %cst_50 : f32 to vector<8x384xf32>
    %133 = arith.addf %132, %131 : vector<8x384xf32>
    %134 = arith.divf %132, %133 : vector<8x384xf32>
    %135 = vector.extract_strided_slice %134 {offsets = [0, 0], sizes = [8, 128], strides = [1, 1]} : vector<8x384xf32> to vector<8x128xf32>
    %136 = vector.extract_strided_slice %134 {offsets = [0, 128], sizes = [8, 128], strides = [1, 1]} : vector<8x384xf32> to vector<8x128xf32>
    %137 = vector.extract_strided_slice %134 {offsets = [0, 256], sizes = [8, 128], strides = [1, 1]} : vector<8x384xf32> to vector<8x128xf32>
    %138 = vector.extract_strided_slice %128 {offsets = [0, 384], sizes = [8, 128], strides = [1, 1]} : vector<8x512xf32> to vector<8x128xf32>
    %139 = math.tanh %138 : vector<8x128xf32>
    %140 = arith.mulf %136, %117 : vector<8x128xf32>
    %141 = arith.mulf %135, %139 : vector<8x128xf32>
    %142 = arith.addf %140, %141 : vector<8x128xf32>
    %143 = math.tanh %142 : vector<8x128xf32>
    %144 = arith.mulf %137, %143 : vector<8x128xf32>
    %145 = arith.index_cast %c4_i32 : i32 to index
    %c0_51 = arith.constant 0 : index
    %c0_52 = arith.constant 0 : index
    %146 = vector.load %arg5[%145, %c0_51, %c0_52] : memref<8x8x128xf32, #tpu.memory_space<vmem>>, vector<1x8x128xf32>
    %147 = vector.shape_cast %146 : vector<1x8x128xf32> to vector<8x128xf32>
    %148 = vector.shape_cast %144 : vector<8x128xf32> to vector<1x8x128xf32>
    tpu.vector_store %arg5[%145, %c0_51, %c0_52], %148 {strides = array<i32>} : memref<8x8x128xf32, #tpu.memory_space<vmem>>, vector<1x8x128xf32>,
    %c5_i32 = arith.constant 5 : i32
    %149 = arith.index_cast %c5_i32 : i32 to index
    %c0_53 = arith.constant 0 : index
    %c0_54 = arith.constant 0 : index
    %150 = vector.load %arg11[%149, %c0_53, %c0_54] : memref<8x8x512xf32, #tpu.memory_space<vmem>>, vector<1x8x512xf32>
    %151 = vector.shape_cast %150 : vector<1x8x512xf32> to vector<8x512xf32>
    %cst_55 = arith.constant dense<0.000000e+00> : vector<8x512xf32>
    %152 = tpu.matmul %144, %21, %cst_55 {dimension_numbers = #tpu.dot_dimension_numbers<[1], [0], [0], [1], [0, 0, 1, 1], [], []>} : vector<8x128xf32>, vector<128x512xf32>, vector<8x512xf32> -> vector<8x512xf32>
    %153 = arith.addf %151, %152 : vector<8x512xf32>
    %154 = vector.extract_strided_slice %153 {offsets = [0, 0], sizes = [8, 384], strides = [1, 1]} : vector<8x512xf32> to vector<8x384xf32>
    %155 = arith.negf %154 : vector<8x384xf32>
    %156 = math.exp %155 : vector<8x384xf32>
    %cst_56 = arith.constant 1.000000e+00 : f32
    %157 = vector.broadcast %cst_56 : f32 to vector<8x384xf32>
    %158 = arith.addf %157, %156 : vector<8x384xf32>
    %159 = arith.divf %157, %158 : vector<8x384xf32>
    %160 = vector.extract_strided_slice %159 {offsets = [0, 0], sizes = [8, 128], strides = [1, 1]} : vector<8x384xf32> to vector<8x128xf32>
    %161 = vector.extract_strided_slice %159 {offsets = [0, 128], sizes = [8, 128], strides = [1, 1]} : vector<8x384xf32> to vector<8x128xf32>
    %162 = vector.extract_strided_slice %159 {offsets = [0, 256], sizes = [8, 128], strides = [1, 1]} : vector<8x384xf32> to vector<8x128xf32>
    %163 = vector.extract_strided_slice %153 {offsets = [0, 384], sizes = [8, 128], strides = [1, 1]} : vector<8x512xf32> to vector<8x128xf32>
    %164 = math.tanh %163 : vector<8x128xf32>
    %165 = arith.mulf %161, %142 : vector<8x128xf32>
    %166 = arith.mulf %160, %164 : vector<8x128xf32>
    %167 = arith.addf %165, %166 : vector<8x128xf32>
    %168 = math.tanh %167 : vector<8x128xf32>
    %169 = arith.mulf %162, %168 : vector<8x128xf32>
    %170 = arith.index_cast %c5_i32 : i32 to index
    %c0_57 = arith.constant 0 : index
    %c0_58 = arith.constant 0 : index
    %171 = vector.load %arg5[%170, %c0_57, %c0_58] : memref<8x8x128xf32, #tpu.memory_space<vmem>>, vector<1x8x128xf32>
    %172 = vector.shape_cast %171 : vector<1x8x128xf32> to vector<8x128xf32>
    %173 = vector.shape_cast %169 : vector<8x128xf32> to vector<1x8x128xf32>
    tpu.vector_store %arg5[%170, %c0_57, %c0_58], %173 {strides = array<i32>} : memref<8x8x128xf32, #tpu.memory_space<vmem>>, vector<1x8x128xf32>,
    %c6_i32 = arith.constant 6 : i32
    %174 = arith.index_cast %c6_i32 : i32 to index
    %c0_59 = arith.constant 0 : index
    %c0_60 = arith.constant 0 : index
    %175 = vector.load %arg11[%174, %c0_59, %c0_60] : memref<8x8x512xf32, #tpu.memory_space<vmem>>, vector<1x8x512xf32>
    %176 = vector.shape_cast %175 : vector<1x8x512xf32> to vector<8x512xf32>
    %cst_61 = arith.constant dense<0.000000e+00> : vector<8x512xf32>
    %177 = tpu.matmul %169, %21, %cst_61 {dimension_numbers = #tpu.dot_dimension_numbers<[1], [0], [0], [1], [0, 0, 1, 1], [], []>} : vector<8x128xf32>, vector<128x512xf32>, vector<8x512xf32> -> vector<8x512xf32>
    %178 = arith.addf %176, %177 : vector<8x512xf32>
    %179 = vector.extract_strided_slice %178 {offsets = [0, 0], sizes = [8, 384], strides = [1, 1]} : vector<8x512xf32> to vector<8x384xf32>
    %180 = arith.negf %179 : vector<8x384xf32>
    %181 = math.exp %180 : vector<8x384xf32>
    %cst_62 = arith.constant 1.000000e+00 : f32
    %182 = vector.broadcast %cst_62 : f32 to vector<8x384xf32>
    %183 = arith.addf %182, %181 : vector<8x384xf32>
    %184 = arith.divf %182, %183 : vector<8x384xf32>
    %185 = vector.extract_strided_slice %184 {offsets = [0, 0], sizes = [8, 128], strides = [1, 1]} : vector<8x384xf32> to vector<8x128xf32>
    %186 = vector.extract_strided_slice %184 {offsets = [0, 128], sizes = [8, 128], strides = [1, 1]} : vector<8x384xf32> to vector<8x128xf32>
    %187 = vector.extract_strided_slice %184 {offsets = [0, 256], sizes = [8, 128], strides = [1, 1]} : vector<8x384xf32> to vector<8x128xf32>
    %188 = vector.extract_strided_slice %178 {offsets = [0, 384], sizes = [8, 128], strides = [1, 1]} : vector<8x512xf32> to vector<8x128xf32>
    %189 = math.tanh %188 : vector<8x128xf32>
    %190 = arith.mulf %186, %167 : vector<8x128xf32>
    %191 = arith.mulf %185, %189 : vector<8x128xf32>
    %192 = arith.addf %190, %191 : vector<8x128xf32>
    %193 = math.tanh %192 : vector<8x128xf32>
    %194 = arith.mulf %187, %193 : vector<8x128xf32>
    %195 = arith.index_cast %c6_i32 : i32 to index
    %c0_63 = arith.constant 0 : index
    %c0_64 = arith.constant 0 : index
    %196 = vector.load %arg5[%195, %c0_63, %c0_64] : memref<8x8x128xf32, #tpu.memory_space<vmem>>, vector<1x8x128xf32>
    %197 = vector.shape_cast %196 : vector<1x8x128xf32> to vector<8x128xf32>
    %198 = vector.shape_cast %194 : vector<8x128xf32> to vector<1x8x128xf32>
    tpu.vector_store %arg5[%195, %c0_63, %c0_64], %198 {strides = array<i32>} : memref<8x8x128xf32, #tpu.memory_space<vmem>>, vector<1x8x128xf32>,
    %c7_i32 = arith.constant 7 : i32
    %199 = arith.index_cast %c7_i32 : i32 to index
    %c0_65 = arith.constant 0 : index
    %c0_66 = arith.constant 0 : index
    %200 = vector.load %arg11[%199, %c0_65, %c0_66] : memref<8x8x512xf32, #tpu.memory_space<vmem>>, vector<1x8x512xf32>
    %201 = vector.shape_cast %200 : vector<1x8x512xf32> to vector<8x512xf32>
    %cst_67 = arith.constant dense<0.000000e+00> : vector<8x512xf32>
    %202 = tpu.matmul %194, %21, %cst_67 {dimension_numbers = #tpu.dot_dimension_numbers<[1], [0], [0], [1], [0, 0, 1, 1], [], []>} : vector<8x128xf32>, vector<128x512xf32>, vector<8x512xf32> -> vector<8x512xf32>
    %203 = arith.addf %201, %202 : vector<8x512xf32>
    %204 = vector.extract_strided_slice %203 {offsets = [0, 0], sizes = [8, 384], strides = [1, 1]} : vector<8x512xf32> to vector<8x384xf32>
    %205 = arith.negf %204 : vector<8x384xf32>
    %206 = math.exp %205 : vector<8x384xf32>
    %cst_68 = arith.constant 1.000000e+00 : f32
    %207 = vector.broadcast %cst_68 : f32 to vector<8x384xf32>
    %208 = arith.addf %207, %206 : vector<8x384xf32>
    %209 = arith.divf %207, %208 : vector<8x384xf32>
    %210 = vector.extract_strided_slice %209 {offsets = [0, 0], sizes = [8, 128], strides = [1, 1]} : vector<8x384xf32> to vector<8x128xf32>
    %211 = vector.extract_strided_slice %209 {offsets = [0, 128], sizes = [8, 128], strides = [1, 1]} : vector<8x384xf32> to vector<8x128xf32>
    %212 = vector.extract_strided_slice %209 {offsets = [0, 256], sizes = [8, 128], strides = [1, 1]} : vector<8x384xf32> to vector<8x128xf32>
    %213 = vector.extract_strided_slice %203 {offsets = [0, 384], sizes = [8, 128], strides = [1, 1]} : vector<8x512xf32> to vector<8x128xf32>
    %214 = math.tanh %213 : vector<8x128xf32>
    %215 = arith.mulf %211, %192 : vector<8x128xf32>
    %216 = arith.mulf %210, %214 : vector<8x128xf32>
    %217 = arith.addf %215, %216 : vector<8x128xf32>
    %218 = math.tanh %217 : vector<8x128xf32>
    %219 = arith.mulf %212, %218 : vector<8x128xf32>
    %220 = arith.index_cast %c7_i32 : i32 to index
    %c0_69 = arith.constant 0 : index
    %c0_70 = arith.constant 0 : index
    %221 = vector.load %arg5[%220, %c0_69, %c0_70] : memref<8x8x128xf32, #tpu.memory_space<vmem>>, vector<1x8x128xf32>
    %222 = vector.shape_cast %221 : vector<1x8x128xf32> to vector<8x128xf32>
    %223 = vector.shape_cast %219 : vector<8x128xf32> to vector<1x8x128xf32>
    tpu.vector_store %arg5[%220, %c0_69, %c0_70], %223 {strides = array<i32>} : memref<8x8x128xf32, #tpu.memory_space<vmem>>, vector<1x8x128xf32>,
    %c8_i32 = arith.constant 8 : i32
    %c0_71 = arith.constant 0 : index
    %c0_72 = arith.constant 0 : index
    %224 = vector.load %arg6[%c0_71, %c0_72] : memref<8x128xf32, #tpu.memory_space<vmem>>, vector<8x128xf32>
    tpu.vector_store %arg6[%c0_71, %c0_72], %219 {strides = array<i32>} : memref<8x128xf32, #tpu.memory_space<vmem>>, vector<8x128xf32>,
    %c0_73 = arith.constant 0 : index
    %c0_74 = arith.constant 0 : index
    %225 = vector.load %arg7[%c0_73, %c0_74] : memref<8x128xf32, #tpu.memory_space<vmem>>, vector<8x128xf32>
    tpu.vector_store %arg7[%c0_73, %c0_74], %217 {strides = array<i32>} : memref<8x128xf32, #tpu.memory_space<vmem>>, vector<8x128xf32>,
    return
  }
  func.func @transform_0(%arg0: i32) -> (i32, i32, i32) {
    %c0_i32 = arith.constant 0 : i32
    %c0_i32_0 = arith.constant 0 : i32
    %c0_i32_1 = arith.constant 0 : i32
    return %arg0, %c0_i32, %c0_i32_0 : i32, i32, i32
  }
  func.func @transform_4(%arg0: i32) -> (i32, i32, i32) {
    %c0_i32 = arith.constant 0 : i32
    %c0_i32_0 = arith.constant 0 : i32
    %c0_i32_1 = arith.constant 0 : i32
    return %arg0, %c0_i32, %c0_i32_0 : i32, i32, i32
  }
  func.func @transform_5(%arg0: i32) -> (i32, i32) {
    %c0_i32 = arith.constant 0 : i32
    %c0_i32_0 = arith.constant 0 : i32
    %c0_i32_1 = arith.constant 0 : i32
    return %c0_i32, %c0_i32_0 : i32, i32
  }
  func.func @transform_6(%arg0: i32) -> (i32, i32) {
    %c0_i32 = arith.constant 0 : i32
    %c0_i32_0 = arith.constant 0 : i32
    %c0_i32_1 = arith.constant 0 : i32
    return %c0_i32, %c0_i32_0 : i32, i32
  }
}

module attributes {stable_mosaic.version = 11 : i64} {
  func.func @kernel(%arg0: i32, %arg1: memref<8x8x128xf32, #tpu.memory_space<vmem>>, %arg2: memref<128x512xf32, #tpu.memory_space<any>>, %arg3: memref<128x512xf32, #tpu.memory_space<any>>, %arg4: memref<1x512xf32, #tpu.memory_space<any>>, %arg5: memref<8x8x128xf32, #tpu.memory_space<vmem>>, %arg6: memref<8x128xf32, #tpu.memory_space<vmem>>, %arg7: memref<8x128xf32, #tpu.memory_space<vmem>>, %arg8: memref<128x512xf32, #tpu.memory_space<vmem>>, %arg9: memref<128x512xf32, #tpu.memory_space<vmem>>, %arg10: memref<1x512xf32, #tpu.memory_space<vmem>>, %arg11: memref<8x8x512xf32, #tpu.memory_space<vmem>>, %arg12: memref<3x!tpu.dma_semaphore, #tpu.memory_space<semaphore_mem>>) attributes {dimension_semantics = [#tpu.dimension_semantics<arbitrary>], iteration_bounds = array<i64: 1>, scalar_prefetch = 0 : i64, scratch_operands = 5 : i64, tpu.core_type = #tpu.core_type<tc>, window_params = [{transform_indices = @transform_0, window_bounds = array<i64: 8, 8, 128>}, {}, {}, {}, {transform_indices = @transform_4, window_bounds = array<i64: 8, 8, 128>}, {pipeline_mode = #tpu.pipeline_mode<synchronous>, transform_indices = @transform_5, window_bounds = array<i64: 8, 128>}, {pipeline_mode = #tpu.pipeline_mode<synchronous>, transform_indices = @transform_6, window_bounds = array<i64: 8, 128>}]} {
    %c0_i32 = arith.constant 0 : i32
    %0 = arith.cmpi eq, %arg0, %c0_i32 : i32
    %1 = arith.extui %0 : i1 to i32
    %c0_i32_0 = arith.constant 0 : i32
    %2 = arith.cmpi ne, %1, %c0_i32_0 : i32
    scf.if %2 {
      %cst_75 = arith.constant 0.000000e+00 : f32
      %226 = vector.broadcast %cst_75 : f32 to vector<8x128xf32>
      %c0_76 = arith.constant 0 : index
      %c0_77 = arith.constant 0 : index
      %227 = vector.load %arg6[%c0_76, %c0_77] : memref<8x128xf32, #tpu.memory_space<vmem>>, vector<8x128xf32>
      tpu.vector_store %arg6[%c0_76, %c0_77], %226 {strides = array<i32>} : memref<8x128xf32, #tpu.memory_space<vmem>>, vector<8x128xf32>,
      %cst_78 = arith.constant 0.000000e+00 : f32
      %228 = vector.broadcast %cst_78 : f32 to vector<8x128xf32>
      %c0_79 = arith.constant 0 : index
      %c0_80 = arith.constant 0 : index
      %229 = vector.load %arg7[%c0_79, %c0_80] : memref<8x128xf32, #tpu.memory_space<vmem>>, vector<8x128xf32>
      tpu.vector_store %arg7[%c0_79, %c0_80], %228 {strides = array<i32>} : memref<8x128xf32, #tpu.memory_space<vmem>>, vector<8x128xf32>,
      %c0_i32_81 = arith.constant 0 : i32
      %230 = tpu.memref_slice %arg12[%c0_i32_81] : memref<3x!tpu.dma_semaphore, #tpu.memory_space<semaphore_mem>> -> memref<1x!tpu.dma_semaphore, #tpu.memory_space<semaphore_mem>>
      %231 = tpu.memref_squeeze %230 : memref<1x!tpu.dma_semaphore, #tpu.memory_space<semaphore_mem>> -> memref<!tpu.dma_semaphore, #tpu.memory_space<semaphore_mem>>
      tpu.enqueue_dma source(%arg2 : memref<128x512xf32, #tpu.memory_space<any>>) target(%arg8 : memref<128x512xf32, #tpu.memory_space<vmem>>) target_semaphore(%231 : memref<!tpu.dma_semaphore, #tpu.memory_space<semaphore_mem>>)
      %c1_i32_82 = arith.constant 1 : i32
      %232 = tpu.memref_slice %arg12[%c1_i32_82] : memref<3x!tpu.dma_semaphore, #tpu.memory_space<semaphore_mem>> -> memref<1x!tpu.dma_semaphore, #tpu.memory_space<semaphore_mem>>
      %233 = tpu.memref_squeeze %232 : memref<1x!tpu.dma_semaphore, #tpu.memory_space<semaphore_mem>> -> memref<!tpu.dma_semaphore, #tpu.memory_space<semaphore_mem>>
      tpu.enqueue_dma source(%arg3 : memref<128x512xf32, #tpu.memory_space<any>>) target(%arg9 : memref<128x512xf32, #tpu.memory_space<vmem>>) target_semaphore(%233 : memref<!tpu.dma_semaphore, #tpu.memory_space<semaphore_mem>>)
      %c2_i32_83 = arith.constant 2 : i32
      %234 = tpu.memref_slice %arg12[%c2_i32_83] : memref<3x!tpu.dma_semaphore, #tpu.memory_space<semaphore_mem>> -> memref<1x!tpu.dma_semaphore, #tpu.memory_space<semaphore_mem>>
      %235 = tpu.memref_squeeze %234 : memref<1x!tpu.dma_semaphore, #tpu.memory_space<semaphore_mem>> -> memref<!tpu.dma_semaphore, #tpu.memory_space<semaphore_mem>>
      tpu.enqueue_dma source(%arg4 : memref<1x512xf32, #tpu.memory_space<any>>) target(%arg10 : memref<1x512xf32, #tpu.memory_space<vmem>>) target_semaphore(%235 : memref<!tpu.dma_semaphore, #tpu.memory_space<semaphore_mem>>)
    } else {
    }
    %c0_i32_1 = arith.constant 0 : i32
    %3 = arith.cmpi eq, %arg0, %c0_i32_1 : i32
    %4 = arith.extui %3 : i1 to i32
    %c0_i32_2 = arith.constant 0 : i32
    %5 = arith.cmpi ne, %4, %c0_i32_2 : i32
    scf.if %5 {
      %c0_i32_75 = arith.constant 0 : i32
      %226 = tpu.memref_slice %arg12[%c0_i32_75] : memref<3x!tpu.dma_semaphore, #tpu.memory_space<semaphore_mem>> -> memref<1x!tpu.dma_semaphore, #tpu.memory_space<semaphore_mem>>
      %227 = tpu.memref_squeeze %226 : memref<1x!tpu.dma_semaphore, #tpu.memory_space<semaphore_mem>> -> memref<!tpu.dma_semaphore, #tpu.memory_space<semaphore_mem>>
      tpu.wait_dma2 semaphore(%227 : memref<!tpu.dma_semaphore, #tpu.memory_space<semaphore_mem>>) src(%arg2 : memref<128x512xf32, #tpu.memory_space<any>>) dst(%arg8 : memref<128x512xf32, #tpu.memory_space<vmem>>)
    } else {
    }
    %c0 = arith.constant 0 : index
    %c0_3 = arith.constant 0 : index
    %c0_4 = arith.constant 0 : index
    %6 = vector.load %arg1[%c0, %c0_3, %c0_4] : memref<8x8x128xf32, #tpu.memory_space<vmem>>, vector<8x8x128xf32>
    %7 = vector.shape_cast %6 : vector<8x8x128xf32> to vector<64x128xf32>
    %c0_5 = arith.constant 0 : index
    %c0_6 = arith.constant 0 : index
    %8 = vector.load %arg8[%c0_5, %c0_6] : memref<128x512xf32, #tpu.memory_space<vmem>>, vector<128x512xf32>
    %cst = arith.constant dense<0.000000e+00> : vector<64x512xf32>
    %9 = tpu.matmul %7, %8, %cst {dimension_numbers = #tpu.dot_dimension_numbers<[1], [0], [0], [1], [0, 0, 1, 1], [], []>} : vector<64x128xf32>, vector<128x512xf32>, vector<64x512xf32> -> vector<64x512xf32>
    %c0_i32_7 = arith.constant 0 : i32
    %10 = arith.cmpi eq, %arg0, %c0_i32_7 : i32
    %11 = arith.extui %10 : i1 to i32
    %c0_i32_8 = arith.constant 0 : i32
    %12 = arith.cmpi ne, %11, %c0_i32_8 : i32
    scf.if %12 {
      %c2_i32_75 = arith.constant 2 : i32
      %226 = tpu.memref_slice %arg12[%c2_i32_75] : memref<3x!tpu.dma_semaphore, #tpu.memory_space<semaphore_mem>> -> memref<1x!tpu.dma_semaphore, #tpu.memory_space<semaphore_mem>>
      %227 = tpu.memref_squeeze %226 : memref<1x!tpu.dma_semaphore, #tpu.memory_space<semaphore_mem>> -> memref<!tpu.dma_semaphore, #tpu.memory_space<semaphore_mem>>
      tpu.wait_dma2 semaphore(%227 : memref<!tpu.dma_semaphore, #tpu.memory_space<semaphore_mem>>) src(%arg4 : memref<1x512xf32, #tpu.memory_space<any>>) dst(%arg10 : memref<1x512xf32, #tpu.memory_space<vmem>>)
    } else {
    }
    %c0_9 = arith.constant 0 : index
    %c0_10 = arith.constant 0 : index
    %13 = vector.load %arg10[%c0_9, %c0_10] : memref<1x512xf32, #tpu.memory_space<vmem>>, vector<1x512xf32>
    %14 = vector.broadcast %13 : vector<1x512xf32> to vector<64x512xf32>
    %15 = arith.addf %9, %14 : vector<64x512xf32>
    %16 = vector.shape_cast %15 : vector<64x512xf32> to vector<8x8x512xf32>
    %c0_11 = arith.constant 0 : index
    %c0_12 = arith.constant 0 : index
    %c0_13 = arith.constant 0 : index
    %17 = vector.load %arg11[%c0_11, %c0_12, %c0_13] : memref<8x8x512xf32, #tpu.memory_space<vmem>>, vector<8x8x512xf32>
    tpu.vector_store %arg11[%c0_11, %c0_12, %c0_13], %16 {strides = array<i32>} : memref<8x8x512xf32, #tpu.memory_space<vmem>>, vector<8x8x512xf32>,
    %c0_i32_14 = arith.constant 0 : i32
    %18 = arith.cmpi eq, %arg0, %c0_i32_14 : i32
    %19 = arith.extui %18 : i1 to i32
    %c0_i32_15 = arith.constant 0 : i32
    %20 = arith.cmpi ne, %19, %c0_i32_15 : i32
    scf.if %20 {
      %c1_i32_75 = arith.constant 1 : i32
      %226 = tpu.memref_slice %arg12[%c1_i32_75] : memref<3x!tpu.dma_semaphore, #tpu.memory_space<semaphore_mem>> -> memref<1x!tpu.dma_semaphore, #tpu.memory_space<semaphore_mem>>
      %227 = tpu.memref_squeeze %226 : memref<1x!tpu.dma_semaphore, #tpu.memory_space<semaphore_mem>> -> memref<!tpu.dma_semaphore, #tpu.memory_space<semaphore_mem>>
      tpu.wait_dma2 semaphore(%227 : memref<!tpu.dma_semaphore, #tpu.memory_space<semaphore_mem>>) src(%arg3 : memref<128x512xf32, #tpu.memory_space<any>>) dst(%arg9 : memref<128x512xf32, #tpu.memory_space<vmem>>)
    } else {
    }
    %c0_16 = arith.constant 0 : index
    %c0_17 = arith.constant 0 : index
    %21 = vector.load %arg9[%c0_16, %c0_17] : memref<128x512xf32, #tpu.memory_space<vmem>>, vector<128x512xf32>
    %c0_18 = arith.constant 0 : index
    %c0_19 = arith.constant 0 : index
    %22 = vector.load %arg6[%c0_18, %c0_19] : memref<8x128xf32, #tpu.memory_space<vmem>>, vector<8x128xf32>
    %c0_20 = arith.constant 0 : index
    %c0_21 = arith.constant 0 : index
    %23 = vector.load %arg7[%c0_20, %c0_21] : memref<8x128xf32, #tpu.memory_space<vmem>>, vector<8x128xf32>
    %c0_i32_22 = arith.constant 0 : i32
    %24 = arith.index_cast %c0_i32_22 : i32 to index
    %c0_23 = arith.constant 0 : index
    %c0_24 = arith.constant 0 : index
    %25 = vector.load %arg11[%24, %c0_23, %c0_24] : memref<8x8x512xf32, #tpu.memory_space<vmem>>, vector<1x8x512xf32>
    %26 = vector.shape_cast %25 : vector<1x8x512xf32> to vector<8x512xf32>
    %cst_25 = arith.constant dense<0.000000e+00> : vector<8x512xf32>
    %27 = tpu.matmul %22, %21, %cst_25 {dimension_numbers = #tpu.dot_dimension_numbers<[1], [0], [0], [1], [0, 0, 1, 1], [], []>} : vector<8x128xf32>, vector<128x512xf32>, vector<8x512xf32> -> vector<8x512xf32>
    %28 = arith.addf %26, %27 : vector<8x512xf32>
    %29 = vector.extract_strided_slice %28 {offsets = [0, 0], sizes = [8, 384], strides = [1, 1]} : vector<8x512xf32> to vector<8x384xf32>
    %30 = arith.negf %29 : vector<8x384xf32>
    %31 = math.exp %30 : vector<8x384xf32>
    %cst_26 = arith.constant 1.000000e+00 : f32
    %32 = vector.broadcast %cst_26 : f32 to vector<8x384xf32>
    %33 = arith.addf %32, %31 : vector<8x384xf32>
    %34 = arith.divf %32, %33 : vector<8x384xf32>
    %35 = vector.extract_strided_slice %34 {offsets = [0, 0], sizes = [8, 128], strides = [1, 1]} : vector<8x384xf32> to vector<8x128xf32>
    %36 = vector.extract_strided_slice %34 {offsets = [0, 128], sizes = [8, 128], strides = [1, 1]} : vector<8x384xf32> to vector<8x128xf32>
    %37 = vector.extract_strided_slice %34 {offsets = [0, 256], sizes = [8, 128], strides = [1, 1]} : vector<8x384xf32> to vector<8x128xf32>
    %38 = vector.extract_strided_slice %28 {offsets = [0, 384], sizes = [8, 128], strides = [1, 1]} : vector<8x512xf32> to vector<8x128xf32>
    %39 = math.tanh %38 : vector<8x128xf32>
    %40 = arith.mulf %36, %23 : vector<8x128xf32>
    %41 = arith.mulf %35, %39 : vector<8x128xf32>
    %42 = arith.addf %40, %41 : vector<8x128xf32>
    %43 = math.tanh %42 : vector<8x128xf32>
    %44 = arith.mulf %37, %43 : vector<8x128xf32>
    %45 = arith.index_cast %c0_i32_22 : i32 to index
    %c0_27 = arith.constant 0 : index
    %c0_28 = arith.constant 0 : index
    %46 = vector.load %arg5[%45, %c0_27, %c0_28] : memref<8x8x128xf32, #tpu.memory_space<vmem>>, vector<1x8x128xf32>
    %47 = vector.shape_cast %46 : vector<1x8x128xf32> to vector<8x128xf32>
    %48 = vector.shape_cast %44 : vector<8x128xf32> to vector<1x8x128xf32>
    tpu.vector_store %arg5[%45, %c0_27, %c0_28], %48 {strides = array<i32>} : memref<8x8x128xf32, #tpu.memory_space<vmem>>, vector<1x8x128xf32>,
    %c1_i32 = arith.constant 1 : i32
    %49 = arith.index_cast %c1_i32 : i32 to index
    %c0_29 = arith.constant 0 : index
    %c0_30 = arith.constant 0 : index
    %50 = vector.load %arg11[%49, %c0_29, %c0_30] : memref<8x8x512xf32, #tpu.memory_space<vmem>>, vector<1x8x512xf32>
    %51 = vector.shape_cast %50 : vector<1x8x512xf32> to vector<8x512xf32>
    %cst_31 = arith.constant dense<0.000000e+00> : vector<8x512xf32>
    %52 = tpu.matmul %44, %21, %cst_31 {dimension_numbers = #tpu.dot_dimension_numbers<[1], [0], [0], [1], [0, 0, 1, 1], [], []>} : vector<8x128xf32>, vector<128x512xf32>, vector<8x512xf32> -> vector<8x512xf32>
    %53 = arith.addf %51, %52 : vector<8x512xf32>
    %54 = vector.extract_strided_slice %53 {offsets = [0, 0], sizes = [8, 384], strides = [1, 1]} : vector<8x512xf32> to vector<8x384xf32>
    %55 = arith.negf %54 : vector<8x384xf32>
    %56 = math.exp %55 : vector<8x384xf32>
    %cst_32 = arith.constant 1.000000e+00 : f32
    %57 = vector.broadcast %cst_32 : f32 to vector<8x384xf32>
    %58 = arith.addf %57, %56 : vector<8x384xf32>
    %59 = arith.divf %57, %58 : vector<8x384xf32>
    %60 = vector.extract_strided_slice %59 {offsets = [0, 0], sizes = [8, 128], strides = [1, 1]} : vector<8x384xf32> to vector<8x128xf32>
    %61 = vector.extract_strided_slice %59 {offsets = [0, 128], sizes = [8, 128], strides = [1, 1]} : vector<8x384xf32> to vector<8x128xf32>
    %62 = vector.extract_strided_slice %59 {offsets = [0, 256], sizes = [8, 128], strides = [1, 1]} : vector<8x384xf32> to vector<8x128xf32>
    %63 = vector.extract_strided_slice %53 {offsets = [0, 384], sizes = [8, 128], strides = [1, 1]} : vector<8x512xf32> to vector<8x128xf32>
    %64 = math.tanh %63 : vector<8x128xf32>
    %65 = arith.mulf %61, %42 : vector<8x128xf32>
    %66 = arith.mulf %60, %64 : vector<8x128xf32>
    %67 = arith.addf %65, %66 : vector<8x128xf32>
    %68 = math.tanh %67 : vector<8x128xf32>
    %69 = arith.mulf %62, %68 : vector<8x128xf32>
    %70 = arith.index_cast %c1_i32 : i32 to index
    %c0_33 = arith.constant 0 : index
    %c0_34 = arith.constant 0 : index
    %71 = vector.load %arg5[%70, %c0_33, %c0_34] : memref<8x8x128xf32, #tpu.memory_space<vmem>>, vector<1x8x128xf32>
    %72 = vector.shape_cast %71 : vector<1x8x128xf32> to vector<8x128xf32>
    %73 = vector.shape_cast %69 : vector<8x128xf32> to vector<1x8x128xf32>
    tpu.vector_store %arg5[%70, %c0_33, %c0_34], %73 {strides = array<i32>} : memref<8x8x128xf32, #tpu.memory_space<vmem>>, vector<1x8x128xf32>,
    %c2_i32 = arith.constant 2 : i32
    %74 = arith.index_cast %c2_i32 : i32 to index
    %c0_35 = arith.constant 0 : index
    %c0_36 = arith.constant 0 : index
    %75 = vector.load %arg11[%74, %c0_35, %c0_36] : memref<8x8x512xf32, #tpu.memory_space<vmem>>, vector<1x8x512xf32>
    %76 = vector.shape_cast %75 : vector<1x8x512xf32> to vector<8x512xf32>
    %cst_37 = arith.constant dense<0.000000e+00> : vector<8x512xf32>
    %77 = tpu.matmul %69, %21, %cst_37 {dimension_numbers = #tpu.dot_dimension_numbers<[1], [0], [0], [1], [0, 0, 1, 1], [], []>} : vector<8x128xf32>, vector<128x512xf32>, vector<8x512xf32> -> vector<8x512xf32>
    %78 = arith.addf %76, %77 : vector<8x512xf32>
    %79 = vector.extract_strided_slice %78 {offsets = [0, 0], sizes = [8, 384], strides = [1, 1]} : vector<8x512xf32> to vector<8x384xf32>
    %80 = arith.negf %79 : vector<8x384xf32>
    %81 = math.exp %80 : vector<8x384xf32>
    %cst_38 = arith.constant 1.000000e+00 : f32
    %82 = vector.broadcast %cst_38 : f32 to vector<8x384xf32>
    %83 = arith.addf %82, %81 : vector<8x384xf32>
    %84 = arith.divf %82, %83 : vector<8x384xf32>
    %85 = vector.extract_strided_slice %84 {offsets = [0, 0], sizes = [8, 128], strides = [1, 1]} : vector<8x384xf32> to vector<8x128xf32>
    %86 = vector.extract_strided_slice %84 {offsets = [0, 128], sizes = [8, 128], strides = [1, 1]} : vector<8x384xf32> to vector<8x128xf32>
    %87 = vector.extract_strided_slice %84 {offsets = [0, 256], sizes = [8, 128], strides = [1, 1]} : vector<8x384xf32> to vector<8x128xf32>
    %88 = vector.extract_strided_slice %78 {offsets = [0, 384], sizes = [8, 128], strides = [1, 1]} : vector<8x512xf32> to vector<8x128xf32>
    %89 = math.tanh %88 : vector<8x128xf32>
    %90 = arith.mulf %86, %67 : vector<8x128xf32>
    %91 = arith.mulf %85, %89 : vector<8x128xf32>
    %92 = arith.addf %90, %91 : vector<8x128xf32>
    %93 = math.tanh %92 : vector<8x128xf32>
    %94 = arith.mulf %87, %93 : vector<8x128xf32>
    %95 = arith.index_cast %c2_i32 : i32 to index
    %c0_39 = arith.constant 0 : index
    %c0_40 = arith.constant 0 : index
    %96 = vector.load %arg5[%95, %c0_39, %c0_40] : memref<8x8x128xf32, #tpu.memory_space<vmem>>, vector<1x8x128xf32>
    %97 = vector.shape_cast %96 : vector<1x8x128xf32> to vector<8x128xf32>
    %98 = vector.shape_cast %94 : vector<8x128xf32> to vector<1x8x128xf32>
    tpu.vector_store %arg5[%95, %c0_39, %c0_40], %98 {strides = array<i32>} : memref<8x8x128xf32, #tpu.memory_space<vmem>>, vector<1x8x128xf32>,
    %c3_i32 = arith.constant 3 : i32
    %99 = arith.index_cast %c3_i32 : i32 to index
    %c0_41 = arith.constant 0 : index
    %c0_42 = arith.constant 0 : index
    %100 = vector.load %arg11[%99, %c0_41, %c0_42] : memref<8x8x512xf32, #tpu.memory_space<vmem>>, vector<1x8x512xf32>
    %101 = vector.shape_cast %100 : vector<1x8x512xf32> to vector<8x512xf32>
    %cst_43 = arith.constant dense<0.000000e+00> : vector<8x512xf32>
    %102 = tpu.matmul %94, %21, %cst_43 {dimension_numbers = #tpu.dot_dimension_numbers<[1], [0], [0], [1], [0, 0, 1, 1], [], []>} : vector<8x128xf32>, vector<128x512xf32>, vector<8x512xf32> -> vector<8x512xf32>
    %103 = arith.addf %101, %102 : vector<8x512xf32>
    %104 = vector.extract_strided_slice %103 {offsets = [0, 0], sizes = [8, 384], strides = [1, 1]} : vector<8x512xf32> to vector<8x384xf32>
    %105 = arith.negf %104 : vector<8x384xf32>
    %106 = math.exp %105 : vector<8x384xf32>
    %cst_44 = arith.constant 1.000000e+00 : f32
    %107 = vector.broadcast %cst_44 : f32 to vector<8x384xf32>
    %108 = arith.addf %107, %106 : vector<8x384xf32>
    %109 = arith.divf %107, %108 : vector<8x384xf32>
    %110 = vector.extract_strided_slice %109 {offsets = [0, 0], sizes = [8, 128], strides = [1, 1]} : vector<8x384xf32> to vector<8x128xf32>
    %111 = vector.extract_strided_slice %109 {offsets = [0, 128], sizes = [8, 128], strides = [1, 1]} : vector<8x384xf32> to vector<8x128xf32>
    %112 = vector.extract_strided_slice %109 {offsets = [0, 256], sizes = [8, 128], strides = [1, 1]} : vector<8x384xf32> to vector<8x128xf32>
    %113 = vector.extract_strided_slice %103 {offsets = [0, 384], sizes = [8, 128], strides = [1, 1]} : vector<8x512xf32> to vector<8x128xf32>
    %114 = math.tanh %113 : vector<8x128xf32>
    %115 = arith.mulf %111, %92 : vector<8x128xf32>
    %116 = arith.mulf %110, %114 : vector<8x128xf32>
    %117 = arith.addf %115, %116 : vector<8x128xf32>
    %118 = math.tanh %117 : vector<8x128xf32>
    %119 = arith.mulf %112, %118 : vector<8x128xf32>
    %120 = arith.index_cast %c3_i32 : i32 to index
    %c0_45 = arith.constant 0 : index
    %c0_46 = arith.constant 0 : index
    %121 = vector.load %arg5[%120, %c0_45, %c0_46] : memref<8x8x128xf32, #tpu.memory_space<vmem>>, vector<1x8x128xf32>
    %122 = vector.shape_cast %121 : vector<1x8x128xf32> to vector<8x128xf32>
    %123 = vector.shape_cast %119 : vector<8x128xf32> to vector<1x8x128xf32>
    tpu.vector_store %arg5[%120, %c0_45, %c0_46], %123 {strides = array<i32>} : memref<8x8x128xf32, #tpu.memory_space<vmem>>, vector<1x8x128xf32>,
    %c4_i32 = arith.constant 4 : i32
    %124 = arith.index_cast %c4_i32 : i32 to index
    %c0_47 = arith.constant 0 : index
    %c0_48 = arith.constant 0 : index
    %125 = vector.load %arg11[%124, %c0_47, %c0_48] : memref<8x8x512xf32, #tpu.memory_space<vmem>>, vector<1x8x512xf32>
    %126 = vector.shape_cast %125 : vector<1x8x512xf32> to vector<8x512xf32>
    %cst_49 = arith.constant dense<0.000000e+00> : vector<8x512xf32>
    %127 = tpu.matmul %119, %21, %cst_49 {dimension_numbers = #tpu.dot_dimension_numbers<[1], [0], [0], [1], [0, 0, 1, 1], [], []>} : vector<8x128xf32>, vector<128x512xf32>, vector<8x512xf32> -> vector<8x512xf32>
    %128 = arith.addf %126, %127 : vector<8x512xf32>
    %129 = vector.extract_strided_slice %128 {offsets = [0, 0], sizes = [8, 384], strides = [1, 1]} : vector<8x512xf32> to vector<8x384xf32>
    %130 = arith.negf %129 : vector<8x384xf32>
    %131 = math.exp %130 : vector<8x384xf32>
    %cst_50 = arith.constant 1.000000e+00 : f32
    %132 = vector.broadcast %cst_50 : f32 to vector<8x384xf32>
    %133 = arith.addf %132, %131 : vector<8x384xf32>
    %134 = arith.divf %132, %133 : vector<8x384xf32>
    %135 = vector.extract_strided_slice %134 {offsets = [0, 0], sizes = [8, 128], strides = [1, 1]} : vector<8x384xf32> to vector<8x128xf32>
    %136 = vector.extract_strided_slice %134 {offsets = [0, 128], sizes = [8, 128], strides = [1, 1]} : vector<8x384xf32> to vector<8x128xf32>
    %137 = vector.extract_strided_slice %134 {offsets = [0, 256], sizes = [8, 128], strides = [1, 1]} : vector<8x384xf32> to vector<8x128xf32>
    %138 = vector.extract_strided_slice %128 {offsets = [0, 384], sizes = [8, 128], strides = [1, 1]} : vector<8x512xf32> to vector<8x128xf32>
    %139 = math.tanh %138 : vector<8x128xf32>
    %140 = arith.mulf %136, %117 : vector<8x128xf32>
    %141 = arith.mulf %135, %139 : vector<8x128xf32>
    %142 = arith.addf %140, %141 : vector<8x128xf32>
    %143 = math.tanh %142 : vector<8x128xf32>
    %144 = arith.mulf %137, %143 : vector<8x128xf32>
    %145 = arith.index_cast %c4_i32 : i32 to index
    %c0_51 = arith.constant 0 : index
    %c0_52 = arith.constant 0 : index
    %146 = vector.load %arg5[%145, %c0_51, %c0_52] : memref<8x8x128xf32, #tpu.memory_space<vmem>>, vector<1x8x128xf32>
    %147 = vector.shape_cast %146 : vector<1x8x128xf32> to vector<8x128xf32>
    %148 = vector.shape_cast %144 : vector<8x128xf32> to vector<1x8x128xf32>
    tpu.vector_store %arg5[%145, %c0_51, %c0_52], %148 {strides = array<i32>} : memref<8x8x128xf32, #tpu.memory_space<vmem>>, vector<1x8x128xf32>,
    %c5_i32 = arith.constant 5 : i32
    %149 = arith.index_cast %c5_i32 : i32 to index
    %c0_53 = arith.constant 0 : index
    %c0_54 = arith.constant 0 : index
    %150 = vector.load %arg11[%149, %c0_53, %c0_54] : memref<8x8x512xf32, #tpu.memory_space<vmem>>, vector<1x8x512xf32>
    %151 = vector.shape_cast %150 : vector<1x8x512xf32> to vector<8x512xf32>
    %cst_55 = arith.constant dense<0.000000e+00> : vector<8x512xf32>
    %152 = tpu.matmul %144, %21, %cst_55 {dimension_numbers = #tpu.dot_dimension_numbers<[1], [0], [0], [1], [0, 0, 1, 1], [], []>} : vector<8x128xf32>, vector<128x512xf32>, vector<8x512xf32> -> vector<8x512xf32>
    %153 = arith.addf %151, %152 : vector<8x512xf32>
    %154 = vector.extract_strided_slice %153 {offsets = [0, 0], sizes = [8, 384], strides = [1, 1]} : vector<8x512xf32> to vector<8x384xf32>
    %155 = arith.negf %154 : vector<8x384xf32>
    %156 = math.exp %155 : vector<8x384xf32>
    %cst_56 = arith.constant 1.000000e+00 : f32
    %157 = vector.broadcast %cst_56 : f32 to vector<8x384xf32>
    %158 = arith.addf %157, %156 : vector<8x384xf32>
    %159 = arith.divf %157, %158 : vector<8x384xf32>
    %160 = vector.extract_strided_slice %159 {offsets = [0, 0], sizes = [8, 128], strides = [1, 1]} : vector<8x384xf32> to vector<8x128xf32>
    %161 = vector.extract_strided_slice %159 {offsets = [0, 128], sizes = [8, 128], strides = [1, 1]} : vector<8x384xf32> to vector<8x128xf32>
    %162 = vector.extract_strided_slice %159 {offsets = [0, 256], sizes = [8, 128], strides = [1, 1]} : vector<8x384xf32> to vector<8x128xf32>
    %163 = vector.extract_strided_slice %153 {offsets = [0, 384], sizes = [8, 128], strides = [1, 1]} : vector<8x512xf32> to vector<8x128xf32>
    %164 = math.tanh %163 : vector<8x128xf32>
    %165 = arith.mulf %161, %142 : vector<8x128xf32>
    %166 = arith.mulf %160, %164 : vector<8x128xf32>
    %167 = arith.addf %165, %166 : vector<8x128xf32>
    %168 = math.tanh %167 : vector<8x128xf32>
    %169 = arith.mulf %162, %168 : vector<8x128xf32>
    %170 = arith.index_cast %c5_i32 : i32 to index
    %c0_57 = arith.constant 0 : index
    %c0_58 = arith.constant 0 : index
    %171 = vector.load %arg5[%170, %c0_57, %c0_58] : memref<8x8x128xf32, #tpu.memory_space<vmem>>, vector<1x8x128xf32>
    %172 = vector.shape_cast %171 : vector<1x8x128xf32> to vector<8x128xf32>
    %173 = vector.shape_cast %169 : vector<8x128xf32> to vector<1x8x128xf32>
    tpu.vector_store %arg5[%170, %c0_57, %c0_58], %173 {strides = array<i32>} : memref<8x8x128xf32, #tpu.memory_space<vmem>>, vector<1x8x128xf32>,
    %c6_i32 = arith.constant 6 : i32
    %174 = arith.index_cast %c6_i32 : i32 to index
    %c0_59 = arith.constant 0 : index
    %c0_60 = arith.constant 0 : index
    %175 = vector.load %arg11[%174, %c0_59, %c0_60] : memref<8x8x512xf32, #tpu.memory_space<vmem>>, vector<1x8x512xf32>
    %176 = vector.shape_cast %175 : vector<1x8x512xf32> to vector<8x512xf32>
    %cst_61 = arith.constant dense<0.000000e+00> : vector<8x512xf32>
    %177 = tpu.matmul %169, %21, %cst_61 {dimension_numbers = #tpu.dot_dimension_numbers<[1], [0], [0], [1], [0, 0, 1, 1], [], []>} : vector<8x128xf32>, vector<128x512xf32>, vector<8x512xf32> -> vector<8x512xf32>
    %178 = arith.addf %176, %177 : vector<8x512xf32>
    %179 = vector.extract_strided_slice %178 {offsets = [0, 0], sizes = [8, 384], strides = [1, 1]} : vector<8x512xf32> to vector<8x384xf32>
    %180 = arith.negf %179 : vector<8x384xf32>
    %181 = math.exp %180 : vector<8x384xf32>
    %cst_62 = arith.constant 1.000000e+00 : f32
    %182 = vector.broadcast %cst_62 : f32 to vector<8x384xf32>
    %183 = arith.addf %182, %181 : vector<8x384xf32>
    %184 = arith.divf %182, %183 : vector<8x384xf32>
    %185 = vector.extract_strided_slice %184 {offsets = [0, 0], sizes = [8, 128], strides = [1, 1]} : vector<8x384xf32> to vector<8x128xf32>
    %186 = vector.extract_strided_slice %184 {offsets = [0, 128], sizes = [8, 128], strides = [1, 1]} : vector<8x384xf32> to vector<8x128xf32>
    %187 = vector.extract_strided_slice %184 {offsets = [0, 256], sizes = [8, 128], strides = [1, 1]} : vector<8x384xf32> to vector<8x128xf32>
    %188 = vector.extract_strided_slice %178 {offsets = [0, 384], sizes = [8, 128], strides = [1, 1]} : vector<8x512xf32> to vector<8x128xf32>
    %189 = math.tanh %188 : vector<8x128xf32>
    %190 = arith.mulf %186, %167 : vector<8x128xf32>
    %191 = arith.mulf %185, %189 : vector<8x128xf32>
    %192 = arith.addf %190, %191 : vector<8x128xf32>
    %193 = math.tanh %192 : vector<8x128xf32>
    %194 = arith.mulf %187, %193 : vector<8x128xf32>
    %195 = arith.index_cast %c6_i32 : i32 to index
    %c0_63 = arith.constant 0 : index
    %c0_64 = arith.constant 0 : index
    %196 = vector.load %arg5[%195, %c0_63, %c0_64] : memref<8x8x128xf32, #tpu.memory_space<vmem>>, vector<1x8x128xf32>
    %197 = vector.shape_cast %196 : vector<1x8x128xf32> to vector<8x128xf32>
    %198 = vector.shape_cast %194 : vector<8x128xf32> to vector<1x8x128xf32>
    tpu.vector_store %arg5[%195, %c0_63, %c0_64], %198 {strides = array<i32>} : memref<8x8x128xf32, #tpu.memory_space<vmem>>, vector<1x8x128xf32>,
    %c7_i32 = arith.constant 7 : i32
    %199 = arith.index_cast %c7_i32 : i32 to index
    %c0_65 = arith.constant 0 : index
    %c0_66 = arith.constant 0 : index
    %200 = vector.load %arg11[%199, %c0_65, %c0_66] : memref<8x8x512xf32, #tpu.memory_space<vmem>>, vector<1x8x512xf32>
    %201 = vector.shape_cast %200 : vector<1x8x512xf32> to vector<8x512xf32>
    %cst_67 = arith.constant dense<0.000000e+00> : vector<8x512xf32>
    %202 = tpu.matmul %194, %21, %cst_67 {dimension_numbers = #tpu.dot_dimension_numbers<[1], [0], [0], [1], [0, 0, 1, 1], [], []>} : vector<8x128xf32>, vector<128x512xf32>, vector<8x512xf32> -> vector<8x512xf32>
    %203 = arith.addf %201, %202 : vector<8x512xf32>
    %204 = vector.extract_strided_slice %203 {offsets = [0, 0], sizes = [8, 384], strides = [1, 1]} : vector<8x512xf32> to vector<8x384xf32>
    %205 = arith.negf %204 : vector<8x384xf32>
    %206 = math.exp %205 : vector<8x384xf32>
    %cst_68 = arith.constant 1.000000e+00 : f32
    %207 = vector.broadcast %cst_68 : f32 to vector<8x384xf32>
    %208 = arith.addf %207, %206 : vector<8x384xf32>
    %209 = arith.divf %207, %208 : vector<8x384xf32>
    %210 = vector.extract_strided_slice %209 {offsets = [0, 0], sizes = [8, 128], strides = [1, 1]} : vector<8x384xf32> to vector<8x128xf32>
    %211 = vector.extract_strided_slice %209 {offsets = [0, 128], sizes = [8, 128], strides = [1, 1]} : vector<8x384xf32> to vector<8x128xf32>
    %212 = vector.extract_strided_slice %209 {offsets = [0, 256], sizes = [8, 128], strides = [1, 1]} : vector<8x384xf32> to vector<8x128xf32>
    %213 = vector.extract_strided_slice %203 {offsets = [0, 384], sizes = [8, 128], strides = [1, 1]} : vector<8x512xf32> to vector<8x128xf32>
    %214 = math.tanh %213 : vector<8x128xf32>
    %215 = arith.mulf %211, %192 : vector<8x128xf32>
    %216 = arith.mulf %210, %214 : vector<8x128xf32>
    %217 = arith.addf %215, %216 : vector<8x128xf32>
    %218 = math.tanh %217 : vector<8x128xf32>
    %219 = arith.mulf %212, %218 : vector<8x128xf32>
    %220 = arith.index_cast %c7_i32 : i32 to index
    %c0_69 = arith.constant 0 : index
    %c0_70 = arith.constant 0 : index
    %221 = vector.load %arg5[%220, %c0_69, %c0_70] : memref<8x8x128xf32, #tpu.memory_space<vmem>>, vector<1x8x128xf32>
    %222 = vector.shape_cast %221 : vector<1x8x128xf32> to vector<8x128xf32>
    %223 = vector.shape_cast %219 : vector<8x128xf32> to vector<1x8x128xf32>
    tpu.vector_store %arg5[%220, %c0_69, %c0_70], %223 {strides = array<i32>} : memref<8x8x128xf32, #tpu.memory_space<vmem>>, vector<1x8x128xf32>,
    %c8_i32 = arith.constant 8 : i32
    %c0_71 = arith.constant 0 : index
    %c0_72 = arith.constant 0 : index
    %224 = vector.load %arg6[%c0_71, %c0_72] : memref<8x128xf32, #tpu.memory_space<vmem>>, vector<8x128xf32>
    tpu.vector_store %arg6[%c0_71, %c0_72], %219 {strides = array<i32>} : memref<8x128xf32, #tpu.memory_space<vmem>>, vector<8x128xf32>,
    %c0_73 = arith.constant 0 : index
    %c0_74 = arith.constant 0 : index
    %225 = vector.load %arg7[%c0_73, %c0_74] : memref<8x128xf32, #tpu.memory_space<vmem>>, vector<8x128xf32>
    tpu.vector_store %arg7[%c0_73, %c0_74], %217 {strides = array<i32>} : memref<8x128xf32, #tpu.memory_space<vmem>>, vector<8x128xf32>,
    return
  }
  func.func @transform_0(%arg0: i32) -> (i32, i32, i32) {
    %c0_i32 = arith.constant 0 : i32
    %c0_i32_0 = arith.constant 0 : i32
    %c0_i32_1 = arith.constant 0 : i32
    return %arg0, %c0_i32, %c0_i32_0 : i32, i32, i32
  }
  func.func @transform_4(%arg0: i32) -> (i32, i32, i32) {
    %c0_i32 = arith.constant 0 : i32
    %c0_i32_0 = arith.constant 0 : i32
    %c0_i32_1 = arith.constant 0 : i32
    return %arg0, %c0_i32, %c0_i32_0 : i32, i32, i32
  }
  func.func @transform_5(%arg0: i32) -> (i32, i32) {
    %c0_i32 = arith.constant 0 : i32
    %c0_i32_0 = arith.constant 0 : i32
    %c0_i32_1 = arith.constant 0 : i32
    return %c0_i32, %c0_i32_0 : i32, i32
  }
  func.func @transform_6(%arg0: i32) -> (i32, i32) {
    %c0_i32 = arith.constant 0 : i32
    %c0_i32_0 = arith.constant 0 : i32
    %c0_i32_1 = arith.constant 0 : i32
    return %c0_i32, %c0_i32_0 : i32, i32
  }
}

</mosaic_0001>

<llo_original>
// kernel: encoder_forward.2
$region0: #{encoder_forward.2}
  #allocation0 [shape = 'u32[]', space=smem, size = 0x4, offset = 0x4, fixed_abs, tag = 'smem constant byte address 0x4 - core index']
  #allocation1 [shape = 'u32[144,128]{1,0:T(1,128)}', space=vmem, size = 0x12000, scoped, tag = 'internal scratch']
  #allocation2 [shape = 'f32[128,512]{1,0:T(8,128)}', space=vmem, size = 0x40000, scoped, tag = 'scratch operand']
  #allocation3 [shape = 'f32[128,512]{1,0:T(8,128)}', space=vmem, size = 0x40000, scoped, tag = 'scratch operand']
  #allocation4 [shape = 'f32[1,512]{1,0:T(1,128)}', space=vmem, size = 0x800, scoped, tag = 'scratch operand']
  #allocation5 [shape = 'f32[8,8,512]{2,1,0:T(8,128)}', space=vmem, size = 0x20000, scoped, tag = 'scratch operand']
  #allocation6 [shape = 's32[3]{0}', space=sflag, size = 0xc, scoped, tag = 'scratch operand']
  #allocation7 [shape = 's32[]', space=sflag, size = 0x4, offset = 0, fixed_abs, tag = 'sflag constant byte address 0x0 - dummy sync flag']
  #allocation8 [shape = 's32[]', space=sflag, size = 0x4, offset = 0, fixed_abs, tag = 'sflag constant byte address 0x0 - dummy sync flag']
  #allocation9 [shape = 'u32[]', space=smem, size = 0x4, offset = 0x44, fixed_abs, tag = 'smem constant byte address 0x44 - assertion arg 0']
  #allocation10 [shape = 'u32[]', space=smem, size = 0x4, offset = 0x48, fixed_abs, tag = 'smem constant byte address 0x48 - assertion arg 1']
  #allocation11 [shape = 's32[]', space=sflag, size = 0x4, offset = 0, fixed_abs, tag = 'sflag constant byte address 0x0 - dummy sync flag']
  #allocation12 [shape = 's32[]', space=sflag, size = 0x4, offset = 0, fixed_abs, tag = 'sflag constant byte address 0x0 - dummy sync flag']
  #allocation13 [shape = 's32[]', space=sflag, size = 0x4, offset = 0, fixed_abs, tag = 'sflag constant byte address 0x0 - dummy sync flag']
  %s0 = inlined_call_operand.vmem [shape: f32[8,8,128], index: 0, kind: input, shape index: {}]
  %s1 = inlined_call_operand.hbm [shape: f32[128,512], index: 1, kind: input, shape index: {}]
  %s2 = inlined_call_operand.hbm [shape: f32[128,512], index: 2, kind: input, shape index: {}]
  %s3 = inlined_call_operand.vmem [shape: f32[1,512], index: 3, kind: input, shape index: {}]
  %s4 = inlined_call_operand.vmem [shape: f32[8,8,128], index: 4, kind: output, shape index: {0}]
  %s5 = inlined_call_operand.vmem [shape: f32[8,128], index: 5, kind: output, shape index: {1}]
  %s6 = inlined_call_operand.vmem [shape: f32[8,128], index: 6, kind: output, shape index: {2}]
  %7 = xla_tuple %s4, %s5, %s6
  %s8 = sld [smem:[#allocation0]]
  $region80: #{encoder_forward.2} parent=0
    _
  %s10 = ssub.s32 1, %s8
  %s11 = scalar_select 0, %s10, %s8
  // Predicated region
  $region2: #{encoder_forward.2} parent=0 // pred_check
    _
  $region3: #{encoder_forward.2} parent=0 // pred_check_branch
    %13 = sbr.rel (0) target = $region5
  $region4: #{encoder_forward.2} parent=0 // pred_region
    _
  $region5: #{encoder_forward.2} parent=0 // pred_fallthru
    _
  %p14 = scmp.eq.s32.totalorder 0, 0
  // Predicated region
  $region6: #{encoder_forward.2} parent=0 // pred_check
    %p15 = pneg %p14
  $region7: #{encoder_forward.2} parent=0 // pred_check_branch
    %17 = sbr.rel (%p15) target = $region9
  $region8: #{encoder_forward.2} parent=0 // pred_region
    %18 = vst [vmem:[%s5] sm:$0xff] 0.0
    %19 = vst [vmem:[%s6] sm:$0xff] 0.0
    // Predicated region
    $region10: #{encoder_forward.2} parent=8 // pred_check
      _
    $region11: #{encoder_forward.2} parent=8 // pred_check_branch
      %21 = sbr.rel target = $region13
    $region12: #{encoder_forward.2} parent=8 // pred_region
      %22 = sst [smem:[#allocation9]] [#allocation8]
      %23 = sst [smem:[#allocation10]] [#allocation7]
    $region13: #{encoder_forward.2} parent=8 // pred_fallthru
      _
    %25 = shalt.err (0)
    %s27 = sshll.u32 [#allocation2], 4
    %s28 = int_to_ptr.vmem [resolvable:$true] %s27
    %30 = dma.hbm_to_vmem [thread:$0]  %s1, 8192, %s28, [#allocation6]
    %s31 = scalar_lea.sflag [#allocation6], 1
    // Predicated region
    $region14: #{encoder_forward.2} parent=8 // pred_check
      _
    $region15: #{encoder_forward.2} parent=8 // pred_check_branch
      %33 = sbr.rel target = $region17
    $region16: #{encoder_forward.2} parent=8 // pred_region
      %34 = sst [smem:[#allocation9]] [#allocation12]
      %35 = sst [smem:[#allocation10]] [#allocation11]
    $region17: #{encoder_forward.2} parent=8 // pred_fallthru
      _
    %37 = shalt.err (0)
    %s39 = sshll.u32 [#allocation3], 4
    %s40 = int_to_ptr.vmem [resolvable:$true] %s39
    %42 = dma.hbm_to_vmem [thread:$0]  %s2, 8192, %s40, %s31
    %s43 = scalar_lea.sflag [#allocation6], 2
    %p45 = scmp.lt.u32.totalorder 4, 8
    %p46 = pneg %p45
    // Predicated region
    $region18: #{encoder_forward.2} parent=8 // pred_check
      _
    $region19: #{encoder_forward.2} parent=8 // pred_check_branch
      %48 = sbr.rel (%p45) target = $region21
    $region20: #{encoder_forward.2} parent=8 // pred_region
      %s63 = sand.u32 4, 7
      %p64 = scmp.eq.s32.totalorder %s63, 0
      %p65 = pneg %p64
      // Predicated region
      $region33: #{encoder_forward.2} parent=20 // pred_check
        _
      $region34: #{encoder_forward.2} parent=20 // pred_check_branch
        %67 = sbr.rel (%p64) target = $region36
      $region35: #{encoder_forward.2} parent=20 // pred_region
        %s68 = sand.u32 4, 7
        %s69 = ssub.s32 4, %s68
        %s70 = scalar_lea.vmem %s3, %s69
        %s71 = ssub.s32 4, %s68
        %s72 = scalar_lea.vmem [#allocation4], %s71
        %s73 = sshllo.u32 0, %s68
        loop: start=0, step=1, limit=1
        $region37: #{encoder_forward.2} parent=35 // loop_pre_header
          _
        $region38: #{encoder_forward.2} parent=35 // loop_header
          %s75 = sphi 0, %s79
          %p76 = scmp.ge.s32.totalorder %s75, 1
          %s80 = sphi %s70, %s70
          %s81 = sphi %s72, %s72
        $region39: #{encoder_forward.2} parent=35 // loop_header_branch
          %78 = sbr.rel (%p76) target = $region43
        $region40: #{encoder_forward.2} parent=35 // loop_body
          %v82 = vld [vmem:[%s80] sm:%s73]
          %83 = vst [vmem:[%s81] sm:%s73] %v82
        $region41: #{encoder_forward.2} parent=35 // loop_footer
          %s79 = sadd.s32 1, %s75
        $region42: #{encoder_forward.2} parent=35 // loop_footer_branch
          %74 = sbr.rel target = $region38
        $region43: #{encoder_forward.2} parent=35 // loop_exit
          _
      $region36: #{encoder_forward.2} parent=20 // pred_fallthru
        _
    $region21: #{encoder_forward.2} parent=8 // pred_fallthru
      _
    // Predicated region
    $region22: #{encoder_forward.2} parent=8 // pred_check
      %p49 = pneg %p45
    $region23: #{encoder_forward.2} parent=8 // pred_check_branch
      %51 = sbr.rel (%p49) target = $region25
    $region24: #{encoder_forward.2} parent=8 // pred_region
      %s52 = sshllo.u32 0, 4
      loop: start=0, step=1, limit=1
      $region26: #{encoder_forward.2} parent=24 // loop_pre_header
        _
      $region27: #{encoder_forward.2} parent=24 // loop_header
        %s54 = sphi 0, %s58
        %p55 = scmp.ge.s32.totalorder %s54, 1
        %s59 = sphi %s3, %s3
        %s60 = sphi [#allocation4], [#allocation4]
      $region28: #{encoder_forward.2} parent=24 // loop_header_branch
        %57 = sbr.rel (%p55) target = $region32
      $region29: #{encoder_forward.2} parent=24 // loop_body
        %v61 = vld [vmem:[%s59] sm:%s52]
        %62 = vst [vmem:[%s60] sm:%s52] %v61
      $region30: #{encoder_forward.2} parent=24 // loop_footer
        %s58 = sadd.s32 1, %s54
      $region31: #{encoder_forward.2} parent=24 // loop_footer_branch
        %53 = sbr.rel target = $region27
      $region32: #{encoder_forward.2} parent=24 // loop_exit
        _
    $region25: #{encoder_forward.2} parent=8 // pred_fallthru
      _
    // Predicated region
    $region44: #{encoder_forward.2} parent=8 // pred_check
      _
    $region45: #{encoder_forward.2} parent=8 // pred_check_branch
      %86 = sbr.rel (0) target = $region47
    $region46: #{encoder_forward.2} parent=8 // pred_region
      %87 = vsyncadd %s43, 64
    $region47: #{encoder_forward.2} parent=8 // pred_fallthru
      _
    %s88 = smul.u32 8, 16
    %s89 = smul.u32 %s88, 4
    %s90 = sshll.u32 %s89, 4
    %91 = dma.done [#allocation6], %s90
  $region9: #{encoder_forward.2} parent=0 // pred_fallthru
    _
  %v92 = vld [vmem:[%s0] sm:$0xff]
  %v93 = vld [vmem:[%s0 + $0x8] sm:$0xff]
  %v94 = vld [vmem:[%s0 + $0x10] sm:$0xff]
  %v95 = vld [vmem:[%s0 + $0x18] sm:$0xff]
  %v96 = vld [vmem:[%s0 + $0x20] sm:$0xff]
  %v97 = vld [vmem:[%s0 + $0x28] sm:$0xff]
  %v98 = vld [vmem:[%s0 + $0x30] sm:$0xff]
  %v99 = vld [vmem:[%s0 + $0x38] sm:$0xff]
  %v100 = vld [vmem:[#allocation2] sm:$0xff]
  %v101 = vld [vmem:[#allocation2 + $0x8] sm:$0xff]
  %v102 = vld [vmem:[#allocation2 + $0x10] sm:$0xff]
  %v103 = vld [vmem:[#allocation2 + $0x18] sm:$0xff]
  %v104 = vld [vmem:[#allocation2 + $0x20] sm:$0xff]
  %v105 = vld [vmem:[#allocation2 + $0x28] sm:$0xff]
  %v106 = vld [vmem:[#allocation2 + $0x30] sm:$0xff]
  %v107 = vld [vmem:[#allocation2 + $0x38] sm:$0xff]
  %v108 = vld [vmem:[#allocation2 + $0x40] sm:$0xff]
  %v109 = vld [vmem:[#allocation2 + $0x48] sm:$0xff]
  %v110 = vld [vmem:[#allocation2 + $0x50] sm:$0xff]
  %v111 = vld [vmem:[#allocation2 + $0x58] sm:$0xff]
  %v112 = vld [vmem:[#allocation2 + $0x60] sm:$0xff]
  %v113 = vld [vmem:[#allocation2 + $0x68] sm:$0xff]
  %v114 = vld [vmem:[#allocation2 + $0x70] sm:$0xff]
  %v115 = vld [vmem:[#allocation2 + $0x78] sm:$0xff]
  %v116 = vld [vmem:[#allocation2 + $0x80] sm:$0xff]
  %v117 = vld [vmem:[#allocation2 + $0x88] sm:$0xff]
  %v118 = vld [vmem:[#allocation2 + $0x90] sm:$0xff]
  %v119 = vld [vmem:[#allocation2 + $0x98] sm:$0xff]
  %v120 = vld [vmem:[#allocation2 + $0xa0] sm:$0xff]
  %v121 = vld [vmem:[#allocation2 + $0xa8] sm:$0xff]
  %v122 = vld [vmem:[#allocation2 + $0xb0] sm:$0xff]
  %v123 = vld [vmem:[#allocation2 + $0xb8] sm:$0xff]
  %v124 = vld [vmem:[#allocation2 + $0xc0] sm:$0xff]
  %v125 = vld [vmem:[#allocation2 + $0xc8] sm:$0xff]
  %v126 = vld [vmem:[#allocation2 + $0xd0] sm:$0xff]
  %v127 = vld [vmem:[#allocation2 + $0xd8] sm:$0xff]
  %v128 = vld [vmem:[#allocation2 + $0xe0] sm:$0xff]
  %v129 = vld [vmem:[#allocation2 + $0xe8] sm:$0xff]
  %v130 = vld [vmem:[#allocation2 + $0xf0] sm:$0xff]
  %v131 = vld [vmem:[#allocation2 + $0xf8] sm:$0xff]
  %v132 = vld [vmem:[#allocation2 + $0x100] sm:$0xff]
  %v133 = vld [vmem:[#allocation2 + $0x108] sm:$0xff]
  %v134 = vld [vmem:[#allocation2 + $0x110] sm:$0xff]
  %v135 = vld [vmem:[#allocation2 + $0x118] sm:$0xff]
  %v136 = vld [vmem:[#allocation2 + $0x120] sm:$0xff]
  %v137 = vld [vmem:[#allocation2 + $0x128] sm:$0xff]
  %v138 = vld [vmem:[#allocation2 + $0x130] sm:$0xff]
  %v139 = vld [vmem:[#allocation2 + $0x138] sm:$0xff]
  %v140 = vld [vmem:[#allocation2 + $0x140] sm:$0xff]
  %v141 = vld [vmem:[#allocation2 + $0x148] sm:$0xff]
  %v142 = vld [vmem:[#allocation2 + $0x150] sm:$0xff]
  %v143 = vld [vmem:[#allocation2 + $0x158] sm:$0xff]
  %v144 = vld [vmem:[#allocation2 + $0x160] sm:$0xff]
  %v145 = vld [vmem:[#allocation2 + $0x168] sm:$0xff]
  %v146 = vld [vmem:[#allocation2 + $0x170] sm:$0xff]
  %v147 = vld [vmem:[#allocation2 + $0x178] sm:$0xff]
  %v148 = vld [vmem:[#allocation2 + $0x180] sm:$0xff]
  %v149 = vld [vmem:[#allocation2 + $0x188] sm:$0xff]
  %v150 = vld [vmem:[#allocation2 + $0x190] sm:$0xff]
  %v151 = vld [vmem:[#allocation2 + $0x198] sm:$0xff]
  %v152 = vld [vmem:[#allocation2 + $0x1a0] sm:$0xff]
  %v153 = vld [vmem:[#allocation2 + $0x1a8] sm:$0xff]
  %v154 = vld [vmem:[#allocation2 + $0x1b0] sm:$0xff]
  %v155 = vld [vmem:[#allocation2 + $0x1b8] sm:$0xff]
  %v156 = vld [vmem:[#allocation2 + $0x1c0] sm:$0xff]
  %v157 = vld [vmem:[#allocation2 + $0x1c8] sm:$0xff]
  %v158 = vld [vmem:[#allocation2 + $0x1d0] sm:$0xff]
  %v159 = vld [vmem:[#allocation2 + $0x1d8] sm:$0xff]
  %v160 = vld [vmem:[#allocation2 + $0x1e0] sm:$0xff]
  %v161 = vld [vmem:[#allocation2 + $0x1e8] sm:$0xff]
  %v162 = vld [vmem:[#allocation2 + $0x1f0] sm:$0xff]
  %v163 = vld [vmem:[#allocation2 + $0x1f8] sm:$0xff]
  // Predicated region
  $region48: #{encoder_forward.2} parent=0 // pred_check
    %p164 = pneg %p14
  $region49: #{encoder_forward.2} parent=0 // pred_check_branch
    %166 = sbr.rel (%p164) target = $region51
  $region50: #{encoder_forward.2} parent=0 // pred_region
    %s167 = scalar_lea.sflag [#allocation6], 2
    %s168 = smul.u32 1, 4
    %s169 = sshll.u32 %s168, 4
    %170 = dma.done %s167, %s169
  $region51: #{encoder_forward.2} parent=0 // pred_fallthru
    _
  %v171 = vld [vmem:[#allocation4] sm:$0xf]
  %v173 = vlaneseq
  %v174 = vshrl.u32 %v173, 7
  %v175 = vsub.s32 0, %v174
  %v176 = vrot.slane %v171, %v175
  %v177 = vlaneseq
  %v178 = vshrl.u32 %v177, 7
  %v179 = vsub.s32 1, %v178
  %v180 = vrot.slane %v171, %v179
  %v181 = vlaneseq
  %v182 = vshrl.u32 %v181, 7
  %v183 = vsub.s32 2, %v182
  %v184 = vrot.slane %v171, %v183
  %v185 = vlaneseq
  %v186 = vshrl.u32 %v185, 7
  %v187 = vsub.s32 3, %v186
  %v188 = vrot.slane %v171, %v187
  %193 = vmatprep.subr.mxu0 %v101
  %194 = vmatpush1.msra.mxu0 %v100
  %195 = vmatprep.subr.mxu0 %v105
  %196 = vmatpush1.msra.mxu0 %v104
  %197 = vmatprep.subr.mxu0 %v109
  %198 = vmatpush1.msra.mxu0 %v108
  %199 = vmatprep.subr.mxu0 %v113
  %200 = vmatpush1.msra.mxu0 %v112
  %201 = vmatprep.subr.mxu0 %v117
  %202 = vmatpush1.msra.mxu0 %v116
  %203 = vmatprep.subr.mxu0 %v121
  %204 = vmatpush1.msra.mxu0 %v120
  %205 = vmatprep.subr.mxu0 %v125
  %206 = vmatpush1.msra.mxu0 %v124
  %207 = vmatprep.subr.mxu0 %v129
  %208 = vmatpush1.msra.mxu0 %v128
  %209 = vmatprep.subr.mxu0 %v133
  %210 = vmatpush1.msra.mxu0 %v132
  %211 = vmatprep.subr.mxu0 %v137
  %212 = vmatpush1.msra.mxu0 %v136
  %213 = vmatprep.subr.mxu0 %v141
  %214 = vmatpush1.msra.mxu0 %v140
  %215 = vmatprep.subr.mxu0 %v145
  %216 = vmatpush1.msra.mxu0 %v144
  %217 = vmatprep.subr.mxu0 %v149
  %218 = vmatpush1.msra.mxu0 %v148
  %219 = vmatprep.subr.mxu0 %v153
  %220 = vmatpush1.msra.mxu0 %v152
  %221 = vmatprep.subr.mxu0 %v157
  %222 = vmatpush1.msra.mxu0 %v156
  %223 = vmatprep.subr.mxu0 %v161
  %224 = vmatpush1.msra.mxu0 %v160
  %225 = vmatprep.subr.mxu0 0.0
  %226 = vmatpush1.msra.mxu0 0.0
  %227 = vmatprep.subr.mxu0 0.0
  %228 = vmatpush1.msra.mxu0 0.0
  %229 = vmatprep.subr.mxu0 0.0
  %230 = vmatpush1.msra.mxu0 0.0
  %231 = vmatprep.subr.mxu0 0.0
  %232 = vmatpush1.msra.mxu0 0.0
  %233 = vmatprep.subr.mxu0 0.0
  %234 = vmatpush1.msra.mxu0 0.0
  %235 = vmatprep.subr.mxu0 0.0
  %236 = vmatpush1.msra.mxu0 0.0
  %237 = vmatprep.subr.mxu0 0.0
  %238 = vmatpush1.msra.mxu0 0.0
  %239 = vmatprep.subr.mxu0 0.0
  %240 = vmatpush1.msra.mxu0 0.0
  %241 = vmatprep.subr.mxu0 0.0
  %242 = vmatpush1.msra.mxu0 0.0
  %243 = vmatprep.subr.mxu0 0.0
  %244 = vmatpush1.msra.mxu0 0.0
  %245 = vmatprep.subr.mxu0 0.0
  %246 = vmatpush1.msra.mxu0 0.0
  %247 = vmatprep.subr.mxu0 0.0
  %248 = vmatpush1.msra.mxu0 0.0
  %249 = vmatprep.subr.mxu0 0.0
  %250 = vmatpush1.msra.mxu0 0.0
  %251 = vmatprep.subr.mxu0 0.0
  %252 = vmatpush1.msra.mxu0 0.0
  %253 = vmatprep.subr.mxu0 0.0
  %254 = vmatpush1.msra.mxu0 0.0
  %255 = vmatprep.subr.mxu0 0.0
  %256 = vmatpush1.msra.mxu0 0.0
  %257 = vmatprep.mubr.f32.mxu0 0.0
  %258 = vmatmul.mubr.f32.gmra.mrb[0].mxu0 %v92
  %v259 = vpop.f32.mrb[0].mxu0
  %v260 = vadd.f32 %v176, %v259
  %v261 = vpop.f32.mrb[0].mxu0
  %v262 = vadd.f32 %v180, %v261
  %263 = vmatprep.mubr.f32.mxu0 0.0
  %264 = vmatmul.mubr.f32.gmra.mrb[0].mxu0 %v93
  %v265 = vpop.f32.mrb[0].mxu0
  %v266 = vadd.f32 %v176, %v265
  %v267 = vpop.f32.mrb[0].mxu0
  %v268 = vadd.f32 %v180, %v267
  %269 = vmatprep.mubr.f32.mxu0 0.0
  %270 = vmatmul.mubr.f32.gmra.mrb[0].mxu0 %v94
  %v271 = vpop.f32.mrb[0].mxu0
  %v272 = vadd.f32 %v176, %v271
  %v273 = vpop.f32.mrb[0].mxu0
  %v274 = vadd.f32 %v180, %v273
  %275 = vmatprep.mubr.f32.mxu0 0.0
  %276 = vmatmul.mubr.f32.gmra.mrb[0].mxu0 %v95
  %v277 = vpop.f32.mrb[0].mxu0
  %v278 = vadd.f32 %v176, %v277
  %v279 = vpop.f32.mrb[0].mxu0
  %v280 = vadd.f32 %v180, %v279
  %281 = vmatprep.mubr.f32.mxu0 0.0
  %282 = vmatmul.mubr.f32.gmra.mrb[0].mxu0 %v96
  %v283 = vpop.f32.mrb[0].mxu0
  %v284 = vadd.f32 %v176, %v283
  %v285 = vpop.f32.mrb[0].mxu0
  %v286 = vadd.f32 %v180, %v285
  %287 = vmatprep.mubr.f32.mxu0 0.0
  %288 = vmatmul.mubr.f32.gmra.mrb[0].mxu0 %v97
  %v289 = vpop.f32.mrb[0].mxu0
  %v290 = vadd.f32 %v176, %v289
  %v291 = vpop.f32.mrb[0].mxu0
  %v292 = vadd.f32 %v180, %v291
  %293 = vmatprep.mubr.f32.mxu0 0.0
  %294 = vmatmul.mubr.f32.gmra.mrb[0].mxu0 %v98
  %v295 = vpop.f32.mrb[0].mxu0
  %v296 = vadd.f32 %v176, %v295
  %v297 = vpop.f32.mrb[0].mxu0
  %v298 = vadd.f32 %v180, %v297
  %299 = vmatprep.mubr.f32.mxu0 0.0
  %300 = vmatmul.mubr.f32.gmra.mrb[0].mxu0 %v99
  %v301 = vpop.f32.mrb[0].mxu0
  %v302 = vadd.f32 %v176, %v301
  %v303 = vpop.f32.mrb[0].mxu0
  %v304 = vadd.f32 %v180, %v303
  %305 = vdwg.mxu0
  %306 = vmatprep.subr.mxu0 %v103
  %307 = vmatpush1.msra.mxu0 %v102
  %308 = vmatprep.subr.mxu0 %v107
  %309 = vmatpush1.msra.mxu0 %v106
  %310 = vmatprep.subr.mxu0 %v111
  %311 = vmatpush1.msra.mxu0 %v110
  %312 = vmatprep.subr.mxu0 %v115
  %313 = vmatpush1.msra.mxu0 %v114
  %314 = vmatprep.subr.mxu0 %v119
  %315 = vmatpush1.msra.mxu0 %v118
  %316 = vmatprep.subr.mxu0 %v123
  %317 = vmatpush1.msra.mxu0 %v122
  %318 = vmatprep.subr.mxu0 %v127
  %319 = vmatpush1.msra.mxu0 %v126
  %320 = vmatprep.subr.mxu0 %v131
  %321 = vmatpush1.msra.mxu0 %v130
  %322 = vmatprep.subr.mxu0 %v135
  %323 = vmatpush1.msra.mxu0 %v134
  %324 = vmatprep.subr.mxu0 %v139
  %325 = vmatpush1.msra.mxu0 %v138
  %326 = vmatprep.subr.mxu0 %v143
  %327 = vmatpush1.msra.mxu0 %v142
  %328 = vmatprep.subr.mxu0 %v147
  %329 = vmatpush1.msra.mxu0 %v146
  %330 = vmatprep.subr.mxu0 %v151
  %331 = vmatpush1.msra.mxu0 %v150
  %332 = vmatprep.subr.mxu0 %v155
  %333 = vmatpush1.msra.mxu0 %v154
  %334 = vmatprep.subr.mxu0 %v159
  %335 = vmatpush1.msra.mxu0 %v158
  %336 = vmatprep.subr.mxu0 %v163
  %337 = vmatpush1.msra.mxu0 %v162
  %338 = vmatprep.subr.mxu0 0.0
  %339 = vmatpush1.msra.mxu0 0.0
  %340 = vmatprep.subr.mxu0 0.0
  %341 = vmatpush1.msra.mxu0 0.0
  %342 = vmatprep.subr.mxu0 0.0
  %343 = vmatpush1.msra.mxu0 0.0
  %344 = vmatprep.subr.mxu0 0.0
  %345 = vmatpush1.msra.mxu0 0.0
  %346 = vmatprep.subr.mxu0 0.0
  %347 = vmatpush1.msra.mxu0 0.0
  %348 = vmatprep.subr.mxu0 0.0
  %349 = vmatpush1.msra.mxu0 0.0
  %350 = vmatprep.subr.mxu0 0.0
  %351 = vmatpush1.msra.mxu0 0.0
  %352 = vmatprep.subr.mxu0 0.0
  %353 = vmatpush1.msra.mxu0 0.0
  %354 = vmatprep.subr.mxu0 0.0
  %355 = vmatpush1.msra.mxu0 0.0
  %356 = vmatprep.subr.mxu0 0.0
  %357 = vmatpush1.msra.mxu0 0.0
  %358 = vmatprep.subr.mxu0 0.0
  %359 = vmatpush1.msra.mxu0 0.0
  %360 = vmatprep.subr.mxu0 0.0
  %361 = vmatpush1.msra.mxu0 0.0
  %362 = vmatprep.subr.mxu0 0.0
  %363 = vmatpush1.msra.mxu0 0.0
  %364 = vmatprep.subr.mxu0 0.0
  %365 = vmatpush1.msra.mxu0 0.0
  %366 = vmatprep.subr.mxu0 0.0
  %367 = vmatpush1.msra.mxu0 0.0
  %368 = vmatprep.subr.mxu0 0.0
  %369 = vmatpush1.msra.mxu0 0.0
  %370 = vmatprep.mubr.f32.mxu0 0.0
  %371 = vmatmul.mubr.f32.gmra.mrb[0].mxu0 %v92
  %v372 = vpop.f32.mrb[0].mxu0
  %v373 = vadd.f32 %v184, %v372
  %v374 = vpop.f32.mrb[0].mxu0
  %v375 = vadd.f32 %v188, %v374
  %376 = vmatprep.mubr.f32.mxu0 0.0
  %377 = vmatmul.mubr.f32.gmra.mrb[0].mxu0 %v93
  %v378 = vpop.f32.mrb[0].mxu0
  %v379 = vadd.f32 %v184, %v378
  %v380 = vpop.f32.mrb[0].mxu0
  %v381 = vadd.f32 %v188, %v380
  %382 = vmatprep.mubr.f32.mxu0 0.0
  %383 = vmatmul.mubr.f32.gmra.mrb[0].mxu0 %v94
  %v384 = vpop.f32.mrb[0].mxu0
  %v385 = vadd.f32 %v184, %v384
  %v386 = vpop.f32.mrb[0].mxu0
  %v387 = vadd.f32 %v188, %v386
  %388 = vmatprep.mubr.f32.mxu0 0.0
  %389 = vmatmul.mubr.f32.gmra.mrb[0].mxu0 %v95
  %v390 = vpop.f32.mrb[0].mxu0
  %v391 = vadd.f32 %v184, %v390
  %v392 = vpop.f32.mrb[0].mxu0
  %v393 = vadd.f32 %v188, %v392
  %394 = vmatprep.mubr.f32.mxu0 0.0
  %395 = vmatmul.mubr.f32.gmra.mrb[0].mxu0 %v96
  %v396 = vpop.f32.mrb[0].mxu0
  %v397 = vadd.f32 %v184, %v396
  %v398 = vpop.f32.mrb[0].mxu0
  %v399 = vadd.f32 %v188, %v398
  %400 = vmatprep.mubr.f32.mxu0 0.0
  %401 = vmatmul.mubr.f32.gmra.mrb[0].mxu0 %v97
  %v402 = vpop.f32.mrb[0].mxu0
  %v403 = vadd.f32 %v184, %v402
  %v404 = vpop.f32.mrb[0].mxu0
  %v405 = vadd.f32 %v188, %v404
  %406 = vmatprep.mubr.f32.mxu0 0.0
  %407 = vmatmul.mubr.f32.gmra.mrb[0].mxu0 %v98
  %v408 = vpop.f32.mrb[0].mxu0
  %v409 = vadd.f32 %v184, %v408
  %v410 = vpop.f32.mrb[0].mxu0
  %v411 = vadd.f32 %v188, %v410
  %412 = vmatprep.mubr.f32.mxu0 0.0
  %413 = vmatmul.mubr.f32.gmra.mrb[0].mxu0 %v99
  %v414 = vpop.f32.mrb[0].mxu0
  %v415 = vadd.f32 %v184, %v414
  %v416 = vpop.f32.mrb[0].mxu0
  %v417 = vadd.f32 %v188, %v416
  %418 = vdwg.mxu0
  %419 = vst [vmem:[#allocation5] sm:$0xff] %v260
  %420 = vst [vmem:[#allocation5 + $0x8] sm:$0xff] %v262
  %421 = vst [vmem:[#allocation5 + $0x10] sm:$0xff] %v373
  %422 = vst [vmem:[#allocation5 + $0x18] sm:$0xff] %v375
  %423 = vst [vmem:[#allocation5 + $0x20] sm:$0xff] %v266
  %424 = vst [vmem:[#allocation5 + $0x28] sm:$0xff] %v268
  %425 = vst [vmem:[#allocation5 + $0x30] sm:$0xff] %v379
  %426 = vst [vmem:[#allocation5 + $0x38] sm:$0xff] %v381
  %427 = vst [vmem:[#allocation5 + $0x40] sm:$0xff] %v272
  %428 = vst [vmem:[#allocation5 + $0x48] sm:$0xff] %v274
  %429 = vst [vmem:[#allocation5 + $0x50] sm:$0xff] %v385
  %430 = vst [vmem:[#allocation5 + $0x58] sm:$0xff] %v387
  %431 = vst [vmem:[#allocation5 + $0x60] sm:$0xff] %v278
  %432 = vst [vmem:[#allocation5 + $0x68] sm:$0xff] %v280
  %433 = vst [vmem:[#allocation5 + $0x70] sm:$0xff] %v391
  %434 = vst [vmem:[#allocation5 + $0x78] sm:$0xff] %v393
  %435 = vst [vmem:[#allocation5 + $0x80] sm:$0xff] %v284
  %436 = vst [vmem:[#allocation5 + $0x88] sm:$0xff] %v286
  %437 = vst [vmem:[#allocation5 + $0x90] sm:$0xff] %v397
  %438 = vst [vmem:[#allocation5 + $0x98] sm:$0xff] %v399
  %439 = vst [vmem:[#allocation5 + $0xa0] sm:$0xff] %v290
  %440 = vst [vmem:[#allocation5 + $0xa8] sm:$0xff] %v292
  %441 = vst [vmem:[#allocation5 + $0xb0] sm:$0xff] %v403
  %442 = vst [vmem:[#allocation5 + $0xb8] sm:$0xff] %v405
  %443 = vst [vmem:[#allocation5 + $0xc0] sm:$0xff] %v296
  %444 = vst [vmem:[#allocation5 + $0xc8] sm:$0xff] %v298
  %445 = vst [vmem:[#allocation5 + $0xd0] sm:$0xff] %v409
  %446 = vst [vmem:[#allocation5 + $0xd8] sm:$0xff] %v411
  %447 = vst [vmem:[#allocation5 + $0xe0] sm:$0xff] %v302
  %448 = vst [vmem:[#allocation5 + $0xe8] sm:$0xff] %v304
  %449 = vst [vmem:[#allocation5 + $0xf0] sm:$0xff] %v415
  %450 = vst [vmem:[#allocation5 + $0xf8] sm:$0xff] %v417
  // Predicated region
  $region52: #{encoder_forward.2} parent=0 // pred_check
    %p451 = pneg %p14
  $region53: #{encoder_forward.2} parent=0 // pred_check_branch
    %453 = sbr.rel (%p451) target = $region55
  $region54: #{encoder_forward.2} parent=0 // pred_region
    %s454 = scalar_lea.sflag [#allocation6], 1
    %s455 = smul.u32 8, 16
    %s456 = smul.u32 %s455, 4
    %s457 = sshll.u32 %s456, 4
    %458 = dma.done %s454, %s457
  $region55: #{encoder_forward.2} parent=0 // pred_fallthru
    _
  %v459 = vld [vmem:[#allocation3] sm:$0xff]
  %v460 = vld [vmem:[#allocation3 + $0x8] sm:$0xff]
  %v461 = vld [vmem:[#allocation3 + $0x10] sm:$0xff]
  %v462 = vld [vmem:[#allocation3 + $0x18] sm:$0xff]
  %v463 = vld [vmem:[#allocation3 + $0x20] sm:$0xff]
  %v464 = vld [vmem:[#allocation3 + $0x28] sm:$0xff]
  %v465 = vld [vmem:[#allocation3 + $0x30] sm:$0xff]
  %v466 = vld [vmem:[#allocation3 + $0x38] sm:$0xff]
  %v467 = vld [vmem:[#allocation3 + $0x40] sm:$0xff]
  %v468 = vld [vmem:[#allocation3 + $0x48] sm:$0xff]
  %v469 = vld [vmem:[#allocation3 + $0x50] sm:$0xff]
  %v470 = vld [vmem:[#allocation3 + $0x58] sm:$0xff]
  %v471 = vld [vmem:[#allocation3 + $0x60] sm:$0xff]
  %v472 = vld [vmem:[#allocation3 + $0x68] sm:$0xff]
  %v473 = vld [vmem:[#allocation3 + $0x70] sm:$0xff]
  %v474 = vld [vmem:[#allocation3 + $0x78] sm:$0xff]
  %v475 = vld [vmem:[#allocation3 + $0x80] sm:$0xff]
  %v476 = vld [vmem:[#allocation3 + $0x88] sm:$0xff]
  %v477 = vld [vmem:[#allocation3 + $0x90] sm:$0xff]
  %v478 = vld [vmem:[#allocation3 + $0x98] sm:$0xff]
  %v479 = vld [vmem:[#allocation3 + $0xa0] sm:$0xff]
  %v480 = vld [vmem:[#allocation3 + $0xa8] sm:$0xff]
  %v481 = vld [vmem:[#allocation3 + $0xb0] sm:$0xff]
  %v482 = vld [vmem:[#allocation3 + $0xb8] sm:$0xff]
  %v483 = vld [vmem:[#allocation3 + $0xc0] sm:$0xff]
  %v484 = vld [vmem:[#allocation3 + $0xc8] sm:$0xff]
  %v485 = vld [vmem:[#allocation3 + $0xd0] sm:$0xff]
  %v486 = vld [vmem:[#allocation3 + $0xd8] sm:$0xff]
  %v487 = vld [vmem:[#allocation3 + $0xe0] sm:$0xff]
  %v488 = vld [vmem:[#allocation3 + $0xe8] sm:$0xff]
  %v489 = vld [vmem:[#allocation3 + $0xf0] sm:$0xff]
  %v490 = vld [vmem:[#allocation3 + $0xf8] sm:$0xff]
  %v491 = vld [vmem:[#allocation3 + $0x100] sm:$0xff]
  %v492 = vld [vmem:[#allocation3 + $0x108] sm:$0xff]
  %v493 = vld [vmem:[#allocation3 + $0x110] sm:$0xff]
  %v494 = vld [vmem:[#allocation3 + $0x118] sm:$0xff]
  %v495 = vld [vmem:[#allocation3 + $0x120] sm:$0xff]
  %v496 = vld [vmem:[#allocation3 + $0x128] sm:$0xff]
  %v497 = vld [vmem:[#allocation3 + $0x130] sm:$0xff]
  %v498 = vld [vmem:[#allocation3 + $0x138] sm:$0xff]
  %v499 = vld [vmem:[#allocation3 + $0x140] sm:$0xff]
  %v500 = vld [vmem:[#allocation3 + $0x148] sm:$0xff]
  %v501 = vld [vmem:[#allocation3 + $0x150] sm:$0xff]
  %v502 = vld [vmem:[#allocation3 + $0x158] sm:$0xff]
  %v503 = vld [vmem:[#allocation3 + $0x160] sm:$0xff]
  %v504 = vld [vmem:[#allocation3 + $0x168] sm:$0xff]
  %v505 = vld [vmem:[#allocation3 + $0x170] sm:$0xff]
  %v506 = vld [vmem:[#allocation3 + $0x178] sm:$0xff]
  %v507 = vld [vmem:[#allocation3 + $0x180] sm:$0xff]
  %v508 = vld [vmem:[#allocation3 + $0x188] sm:$0xff]
  %v509 = vld [vmem:[#allocation3 + $0x190] sm:$0xff]
  %v510 = vld [vmem:[#allocation3 + $0x198] sm:$0xff]
  %v511 = vld [vmem:[#allocation3 + $0x1a0] sm:$0xff]
  %v512 = vld [vmem:[#allocation3 + $0x1a8] sm:$0xff]
  %v513 = vld [vmem:[#allocation3 + $0x1b0] sm:$0xff]
  %v514 = vld [vmem:[#allocation3 + $0x1b8] sm:$0xff]
  %v515 = vld [vmem:[#allocation3 + $0x1c0] sm:$0xff]
  %v516 = vld [vmem:[#allocation3 + $0x1c8] sm:$0xff]
  %v517 = vld [vmem:[#allocation3 + $0x1d0] sm:$0xff]
  %v518 = vld [vmem:[#allocation3 + $0x1d8] sm:$0xff]
  %v519 = vld [vmem:[#allocation3 + $0x1e0] sm:$0xff]
  %v520 = vld [vmem:[#allocation3 + $0x1e8] sm:$0xff]
  %v521 = vld [vmem:[#allocation3 + $0x1f0] sm:$0xff]
  %v522 = vld [vmem:[#allocation3 + $0x1f8] sm:$0xff]
  %v523 = vld [vmem:[%s5] sm:$0xff]
  %v524 = vld [vmem:[%s6] sm:$0xff]
  %v525 = vld [vmem:[#allocation5] sm:$0xff]
  %v526 = vld [vmem:[#allocation5 + $0x8] sm:$0xff]
  %v527 = vld [vmem:[#allocation5 + $0x10] sm:$0xff]
  %v528 = vld [vmem:[#allocation5 + $0x18] sm:$0xff]
  %529 = vmatprep.subr.mxu0 %v460
  %530 = vmatpush1.msra.mxu0 %v459
  %531 = vmatprep.subr.mxu0 %v464
  %532 = vmatpush1.msra.mxu0 %v463
  %533 = vmatprep.subr.mxu0 %v468
  %534 = vmatpush1.msra.mxu0 %v467
  %535 = vmatprep.subr.mxu0 %v472
  %536 = vmatpush1.msra.mxu0 %v471
  %537 = vmatprep.subr.mxu0 %v476
  %538 = vmatpush1.msra.mxu0 %v475
  %539 = vmatprep.subr.mxu0 %v480
  %540 = vmatpush1.msra.mxu0 %v479
  %541 = vmatprep.subr.mxu0 %v484
  %542 = vmatpush1.msra.mxu0 %v483
  %543 = vmatprep.subr.mxu0 %v488
  %544 = vmatpush1.msra.mxu0 %v487
  %545 = vmatprep.subr.mxu0 %v492
  %546 = vmatpush1.msra.mxu0 %v491
  %547 = vmatprep.subr.mxu0 %v496
  %548 = vmatpush1.msra.mxu0 %v495
  %549 = vmatprep.subr.mxu0 %v500
  %550 = vmatpush1.msra.mxu0 %v499
  %551 = vmatprep.subr.mxu0 %v504
  %552 = vmatpush1.msra.mxu0 %v503
  %553 = vmatprep.subr.mxu0 %v508
  %554 = vmatpush1.msra.mxu0 %v507
  %555 = vmatprep.subr.mxu0 %v512
  %556 = vmatpush1.msra.mxu0 %v511
  %557 = vmatprep.subr.mxu0 %v516
  %558 = vmatpush1.msra.mxu0 %v515
  %559 = vmatprep.subr.mxu0 %v520
  %560 = vmatpush1.msra.mxu0 %v519
  %561 = vmatprep.subr.mxu0 0.0
  %562 = vmatpush1.msra.mxu0 0.0
  %563 = vmatprep.subr.mxu0 0.0
  %564 = vmatpush1.msra.mxu0 0.0
  %565 = vmatprep.subr.mxu0 0.0
  %566 = vmatpush1.msra.mxu0 0.0
  %567 = vmatprep.subr.mxu0 0.0
  %568 = vmatpush1.msra.mxu0 0.0
  %569 = vmatprep.subr.mxu0 0.0
  %570 = vmatpush1.msra.mxu0 0.0
  %571 = vmatprep.subr.mxu0 0.0
  %572 = vmatpush1.msra.mxu0 0.0
  %573 = vmatprep.subr.mxu0 0.0
  %574 = vmatpush1.msra.mxu0 0.0
  %575 = vmatprep.subr.mxu0 0.0
  %576 = vmatpush1.msra.mxu0 0.0
  %577 = vmatprep.subr.mxu0 0.0
  %578 = vmatpush1.msra.mxu0 0.0
  %579 = vmatprep.subr.mxu0 0.0
  %580 = vmatpush1.msra.mxu0 0.0
  %581 = vmatprep.subr.mxu0 0.0
  %582 = vmatpush1.msra.mxu0 0.0
  %583 = vmatprep.subr.mxu0 0.0
  %584 = vmatpush1.msra.mxu0 0.0
  %585 = vmatprep.subr.mxu0 0.0
  %586 = vmatpush1.msra.mxu0 0.0
  %587 = vmatprep.subr.mxu0 0.0
  %588 = vmatpush1.msra.mxu0 0.0
  %589 = vmatprep.subr.mxu0 0.0
  %590 = vmatpush1.msra.mxu0 0.0
  %591 = vmatprep.subr.mxu0 0.0
  %592 = vmatpush1.msra.mxu0 0.0
  %593 = vmatprep.mubr.f32.mxu0 0.0
  %594 = vmatmul.mubr.f32.gmra.mrb[0].mxu0 %v523
  %v595 = vpop.f32.mrb[0].mxu0
  %v596 = vadd.f32 0.0, %v595
  %v597 = vpop.f32.mrb[0].mxu0
  %v598 = vadd.f32 0.0, %v597
  %599 = vdwg.mxu0
  %600 = vmatprep.subr.mxu0 %v462
  %601 = vmatpush1.msra.mxu0 %v461
  %602 = vmatprep.subr.mxu0 %v466
  %603 = vmatpush1.msra.mxu0 %v465
  %604 = vmatprep.subr.mxu0 %v470
  %605 = vmatpush1.msra.mxu0 %v469
  %606 = vmatprep.subr.mxu0 %v474
  %607 = vmatpush1.msra.mxu0 %v473
  %608 = vmatprep.subr.mxu0 %v478
  %609 = vmatpush1.msra.mxu0 %v477
  %610 = vmatprep.subr.mxu0 %v482
  %611 = vmatpush1.msra.mxu0 %v481
  %612 = vmatprep.subr.mxu0 %v486
  %613 = vmatpush1.msra.mxu0 %v485
  %614 = vmatprep.subr.mxu0 %v490
  %615 = vmatpush1.msra.mxu0 %v489
  %616 = vmatprep.subr.mxu0 %v494
  %617 = vmatpush1.msra.mxu0 %v493
  %618 = vmatprep.subr.mxu0 %v498
  %619 = vmatpush1.msra.mxu0 %v497
  %620 = vmatprep.subr.mxu0 %v502
  %621 = vmatpush1.msra.mxu0 %v501
  %622 = vmatprep.subr.mxu0 %v506
  %623 = vmatpush1.msra.mxu0 %v505
  %624 = vmatprep.subr.mxu0 %v510
  %625 = vmatpush1.msra.mxu0 %v509
  %626 = vmatprep.subr.mxu0 %v514
  %627 = vmatpush1.msra.mxu0 %v513
  %628 = vmatprep.subr.mxu0 %v518
  %629 = vmatpush1.msra.mxu0 %v517
  %630 = vmatprep.subr.mxu0 %v522
  %631 = vmatpush1.msra.mxu0 %v521
  %632 = vmatprep.subr.mxu0 0.0
  %633 = vmatpush1.msra.mxu0 0.0
  %634 = vmatprep.subr.mxu0 0.0
  %635 = vmatpush1.msra.mxu0 0.0
  %636 = vmatprep.subr.mxu0 0.0
  %637 = vmatpush1.msra.mxu0 0.0
  %638 = vmatprep.subr.mxu0 0.0
  %639 = vmatpush1.msra.mxu0 0.0
  %640 = vmatprep.subr.mxu0 0.0
  %641 = vmatpush1.msra.mxu0 0.0
  %642 = vmatprep.subr.mxu0 0.0
  %643 = vmatpush1.msra.mxu0 0.0
  %644 = vmatprep.subr.mxu0 0.0
  %645 = vmatpush1.msra.mxu0 0.0
  %646 = vmatprep.subr.mxu0 0.0
  %647 = vmatpush1.msra.mxu0 0.0
  %648 = vmatprep.subr.mxu0 0.0
  %649 = vmatpush1.msra.mxu0 0.0
  %650 = vmatprep.subr.mxu0 0.0
  %651 = vmatpush1.msra.mxu0 0.0
  %652 = vmatprep.subr.mxu0 0.0
  %653 = vmatpush1.msra.mxu0 0.0
  %654 = vmatprep.subr.mxu0 0.0
  %655 = vmatpush1.msra.mxu0 0.0
  %656 = vmatprep.subr.mxu0 0.0
  %657 = vmatpush1.msra.mxu0 0.0
  %658 = vmatprep.subr.mxu0 0.0
  %659 = vmatpush1.msra.mxu0 0.0
  %660 = vmatprep.subr.mxu0 0.0
  %661 = vmatpush1.msra.mxu0 0.0
  %662 = vmatprep.subr.mxu0 0.0
  %663 = vmatpush1.msra.mxu0 0.0
  %664 = vmatprep.mubr.f32.mxu0 0.0
  %665 = vmatmul.mubr.f32.gmra.mrb[0].mxu0 %v523
  %v666 = vpop.f32.mrb[0].mxu0
  %v667 = vadd.f32 0.0, %v666
  %v668 = vpop.f32.mrb[0].mxu0
  %v669 = vadd.f32 0.0, %v668
  %670 = vdwg.mxu0
  %v671 = vadd.f32 %v525, %v596
  %v672 = vadd.f32 %v526, %v598
  %v673 = vadd.f32 %v527, %v667
  %v674 = vadd.f32 %v528, %v669
  %v675 = vxor.u32 %v671, 2147483648
  %v676 = vxor.u32 %v672, 2147483648
  %v677 = vxor.u32 %v673, 2147483648
  %v678 = vmul.f32 %v675, 1.442695
  %v679 = vpow.pop %v678
  %v680 = vmul.f32 %v676, 1.442695
  %v681 = vpow.pop %v680
  %v682 = vmul.f32 %v677, 1.442695
  %v683 = vpow.pop %v682
  %v684 = vadd.f32 %v679, 1.0
  %v685 = vadd.f32 %v681, 1.0
  %v686 = vadd.f32 %v683, 1.0
  %v687 = vrcp.pop %v684
  %v688 = vmul.f32 1.0, %v687
  %v689 = vrcp.pop %v685
  %v690 = vmul.f32 1.0, %v689
  %v691 = vrcp.pop %v686
  %v692 = vmul.f32 1.0, %v691
  %v693 = vtanh.pop %v674
  %v694 = vmul.f32 %v690, %v524
  %v695 = vmul.f32 %v688, %v693
  %v696 = vadd.f32 %v694, %v695
  %v697 = vtanh.pop %v696
  %v698 = vmul.f32 %v692, %v697
  %699 = vst [vmem:[%s4] sm:$0xff] %v698
  %s700 = scalar_lea.vmem [#allocation5], 32
  %v701 = vld [vmem:[%s700] sm:$0xff]
  %v702 = vld [vmem:[%s700 + $0x8] sm:$0xff]
  %v703 = vld [vmem:[%s700 + $0x10] sm:$0xff]
  %v704 = vld [vmem:[%s700 + $0x18] sm:$0xff]
  %705 = vmatprep.subr.mxu0 %v460
  %706 = vmatpush1.msra.mxu0 %v459
  %707 = vmatprep.subr.mxu0 %v464
  %708 = vmatpush1.msra.mxu0 %v463
  %709 = vmatprep.subr.mxu0 %v468
  %710 = vmatpush1.msra.mxu0 %v467
  %711 = vmatprep.subr.mxu0 %v472
  %712 = vmatpush1.msra.mxu0 %v471
  %713 = vmatprep.subr.mxu0 %v476
  %714 = vmatpush1.msra.mxu0 %v475
  %715 = vmatprep.subr.mxu0 %v480
  %716 = vmatpush1.msra.mxu0 %v479
  %717 = vmatprep.subr.mxu0 %v484
  %718 = vmatpush1.msra.mxu0 %v483
  %719 = vmatprep.subr.mxu0 %v488
  %720 = vmatpush1.msra.mxu0 %v487
  %721 = vmatprep.subr.mxu0 %v492
  %722 = vmatpush1.msra.mxu0 %v491
  %723 = vmatprep.subr.mxu0 %v496
  %724 = vmatpush1.msra.mxu0 %v495
  %725 = vmatprep.subr.mxu0 %v500
  %726 = vmatpush1.msra.mxu0 %v499
  %727 = vmatprep.subr.mxu0 %v504
  %728 = vmatpush1.msra.mxu0 %v503
  %729 = vmatprep.subr.mxu0 %v508
  %730 = vmatpush1.msra.mxu0 %v507
  %731 = vmatprep.subr.mxu0 %v512
  %732 = vmatpush1.msra.mxu0 %v511
  %733 = vmatprep.subr.mxu0 %v516
  %734 = vmatpush1.msra.mxu0 %v515
  %735 = vmatprep.subr.mxu0 %v520
  %736 = vmatpush1.msra.mxu0 %v519
  %737 = vmatprep.subr.mxu0 0.0
  %738 = vmatpush1.msra.mxu0 0.0
  %739 = vmatprep.subr.mxu0 0.0
  %740 = vmatpush1.msra.mxu0 0.0
  %741 = vmatprep.subr.mxu0 0.0
  %742 = vmatpush1.msra.mxu0 0.0
  %743 = vmatprep.subr.mxu0 0.0
  %744 = vmatpush1.msra.mxu0 0.0
  %745 = vmatprep.subr.mxu0 0.0
  %746 = vmatpush1.msra.mxu0 0.0
  %747 = vmatprep.subr.mxu0 0.0
  %748 = vmatpush1.msra.mxu0 0.0
  %749 = vmatprep.subr.mxu0 0.0
  %750 = vmatpush1.msra.mxu0 0.0
  %751 = vmatprep.subr.mxu0 0.0
  %752 = vmatpush1.msra.mxu0 0.0
  %753 = vmatprep.subr.mxu0 0.0
  %754 = vmatpush1.msra.mxu0 0.0
  %755 = vmatprep.subr.mxu0 0.0
  %756 = vmatpush1.msra.mxu0 0.0
  %757 = vmatprep.subr.mxu0 0.0
  %758 = vmatpush1.msra.mxu0 0.0
  %759 = vmatprep.subr.mxu0 0.0
  %760 = vmatpush1.msra.mxu0 0.0
  %761 = vmatprep.subr.mxu0 0.0
  %762 = vmatpush1.msra.mxu0 0.0
  %763 = vmatprep.subr.mxu0 0.0
  %764 = vmatpush1.msra.mxu0 0.0
  %765 = vmatprep.subr.mxu0 0.0
  %766 = vmatpush1.msra.mxu0 0.0
  %767 = vmatprep.subr.mxu0 0.0
  %768 = vmatpush1.msra.mxu0 0.0
  %769 = vmatprep.mubr.f32.mxu0 0.0
  %770 = vmatmul.mubr.f32.gmra.mrb[0].mxu0 %v698
  %v771 = vpop.f32.mrb[0].mxu0
  %v772 = vadd.f32 0.0, %v771
  %v773 = vpop.f32.mrb[0].mxu0
  %v774 = vadd.f32 0.0, %v773
  %775 = vdwg.mxu0
  %776 = vmatprep.subr.mxu0 %v462
  %777 = vmatpush1.msra.mxu0 %v461
  %778 = vmatprep.subr.mxu0 %v466
  %779 = vmatpush1.msra.mxu0 %v465
  %780 = vmatprep.subr.mxu0 %v470
  %781 = vmatpush1.msra.mxu0 %v469
  %782 = vmatprep.subr.mxu0 %v474
  %783 = vmatpush1.msra.mxu0 %v473
  %784 = vmatprep.subr.mxu0 %v478
  %785 = vmatpush1.msra.mxu0 %v477
  %786 = vmatprep.subr.mxu0 %v482
  %787 = vmatpush1.msra.mxu0 %v481
  %788 = vmatprep.subr.mxu0 %v486
  %789 = vmatpush1.msra.mxu0 %v485
  %790 = vmatprep.subr.mxu0 %v490
  %791 = vmatpush1.msra.mxu0 %v489
  %792 = vmatprep.subr.mxu0 %v494
  %793 = vmatpush1.msra.mxu0 %v493
  %794 = vmatprep.subr.mxu0 %v498
  %795 = vmatpush1.msra.mxu0 %v497
  %796 = vmatprep.subr.mxu0 %v502
  %797 = vmatpush1.msra.mxu0 %v501
  %798 = vmatprep.subr.mxu0 %v506
  %799 = vmatpush1.msra.mxu0 %v505
  %800 = vmatprep.subr.mxu0 %v510
  %801 = vmatpush1.msra.mxu0 %v509
  %802 = vmatprep.subr.mxu0 %v514
  %803 = vmatpush1.msra.mxu0 %v513
  %804 = vmatprep.subr.mxu0 %v518
  %805 = vmatpush1.msra.mxu0 %v517
  %806 = vmatprep.subr.mxu0 %v522
  %807 = vmatpush1.msra.mxu0 %v521
  %808 = vmatprep.subr.mxu0 0.0
  %809 = vmatpush1.msra.mxu0 0.0
  %810 = vmatprep.subr.mxu0 0.0
  %811 = vmatpush1.msra.mxu0 0.0
  %812 = vmatprep.subr.mxu0 0.0
  %813 = vmatpush1.msra.mxu0 0.0
  %814 = vmatprep.subr.mxu0 0.0
  %815 = vmatpush1.msra.mxu0 0.0
  %816 = vmatprep.subr.mxu0 0.0
  %817 = vmatpush1.msra.mxu0 0.0
  %818 = vmatprep.subr.mxu0 0.0
  %819 = vmatpush1.msra.mxu0 0.0
  %820 = vmatprep.subr.mxu0 0.0
  %821 = vmatpush1.msra.mxu0 0.0
  %822 = vmatprep.subr.mxu0 0.0
  %823 = vmatpush1.msra.mxu0 0.0
  %824 = vmatprep.subr.mxu0 0.0
  %825 = vmatpush1.msra.mxu0 0.0
  %826 = vmatprep.subr.mxu0 0.0
  %827 = vmatpush1.msra.mxu0 0.0
  %828 = vmatprep.subr.mxu0 0.0
  %829 = vmatpush1.msra.mxu0 0.0
  %830 = vmatprep.subr.mxu0 0.0
  %831 = vmatpush1.msra.mxu0 0.0
  %832 = vmatprep.subr.mxu0 0.0
  %833 = vmatpush1.msra.mxu0 0.0
  %834 = vmatprep.subr.mxu0 0.0
  %835 = vmatpush1.msra.mxu0 0.0
  %836 = vmatprep.subr.mxu0 0.0
  %837 = vmatpush1.msra.mxu0 0.0
  %838 = vmatprep.subr.mxu0 0.0
  %839 = vmatpush1.msra.mxu0 0.0
  %840 = vmatprep.mubr.f32.mxu0 0.0
  %841 = vmatmul.mubr.f32.gmra.mrb[0].mxu0 %v698
  %v842 = vpop.f32.mrb[0].mxu0
  %v843 = vadd.f32 0.0, %v842
  %v844 = vpop.f32.mrb[0].mxu0
  %v845 = vadd.f32 0.0, %v844
  %846 = vdwg.mxu0
  %v847 = vadd.f32 %v701, %v772
  %v848 = vadd.f32 %v702, %v774
  %v849 = vadd.f32 %v703, %v843
  %v850 = vadd.f32 %v704, %v845
  %v851 = vxor.u32 %v847, 2147483648
  %v852 = vxor.u32 %v848, 2147483648
  %v853 = vxor.u32 %v849, 2147483648
  %v854 = vmul.f32 %v851, 1.442695
  %v855 = vpow.pop %v854
  %v856 = vmul.f32 %v852, 1.442695
  %v857 = vpow.pop %v856
  %v858 = vmul.f32 %v853, 1.442695
  %v859 = vpow.pop %v858
  %v860 = vadd.f32 %v855, 1.0
  %v861 = vadd.f32 %v857, 1.0
  %v862 = vadd.f32 %v859, 1.0
  %v863 = vrcp.pop %v860
  %v864 = vmul.f32 1.0, %v863
  %v865 = vrcp.pop %v861
  %v866 = vmul.f32 1.0, %v865
  %v867 = vrcp.pop %v862
  %v868 = vmul.f32 1.0, %v867
  %v869 = vtanh.pop %v850
  %v870 = vmul.f32 %v866, %v696
  %v871 = vmul.f32 %v864, %v869
  %v872 = vadd.f32 %v870, %v871
  %v873 = vtanh.pop %v872
  %v874 = vmul.f32 %v868, %v873
  %s875 = scalar_lea.vmem %s4, 8
  %876 = vst [vmem:[%s875] sm:$0xff] %v874
  %s877 = scalar_lea.vmem [#allocation5], 64
  %v878 = vld [vmem:[%s877] sm:$0xff]
  %v879 = vld [vmem:[%s877 + $0x8] sm:$0xff]
  %v880 = vld [vmem:[%s877 + $0x10] sm:$0xff]
  %v881 = vld [vmem:[%s877 + $0x18] sm:$0xff]
  %882 = vmatprep.subr.mxu0 %v460
  %883 = vmatpush1.msra.mxu0 %v459
  %884 = vmatprep.subr.mxu0 %v464
  %885 = vmatpush1.msra.mxu0 %v463
  %886 = vmatprep.subr.mxu0 %v468
  %887 = vmatpush1.msra.mxu0 %v467
  %888 = vmatprep.subr.mxu0 %v472
  %889 = vmatpush1.msra.mxu0 %v471
  %890 = vmatprep.subr.mxu0 %v476
  %891 = vmatpush1.msra.mxu0 %v475
  %892 = vmatprep.subr.mxu0 %v480
  %893 = vmatpush1.msra.mxu0 %v479
  %894 = vmatprep.subr.mxu0 %v484
  %895 = vmatpush1.msra.mxu0 %v483
  %896 = vmatprep.subr.mxu0 %v488
  %897 = vmatpush1.msra.mxu0 %v487
  %898 = vmatprep.subr.mxu0 %v492
  %899 = vmatpush1.msra.mxu0 %v491
  %900 = vmatprep.subr.mxu0 %v496
  %901 = vmatpush1.msra.mxu0 %v495
  %902 = vmatprep.subr.mxu0 %v500
  %903 = vmatpush1.msra.mxu0 %v499
  %904 = vmatprep.subr.mxu0 %v504
  %905 = vmatpush1.msra.mxu0 %v503
  %906 = vmatprep.subr.mxu0 %v508
  %907 = vmatpush1.msra.mxu0 %v507
  %908 = vmatprep.subr.mxu0 %v512
  %909 = vmatpush1.msra.mxu0 %v511
  %910 = vmatprep.subr.mxu0 %v516
  %911 = vmatpush1.msra.mxu0 %v515
  %912 = vmatprep.subr.mxu0 %v520
  %913 = vmatpush1.msra.mxu0 %v519
  %914 = vmatprep.subr.mxu0 0.0
  %915 = vmatpush1.msra.mxu0 0.0
  %916 = vmatprep.subr.mxu0 0.0
  %917 = vmatpush1.msra.mxu0 0.0
  %918 = vmatprep.subr.mxu0 0.0
  %919 = vmatpush1.msra.mxu0 0.0
  %920 = vmatprep.subr.mxu0 0.0
  %921 = vmatpush1.msra.mxu0 0.0
  %922 = vmatprep.subr.mxu0 0.0
  %923 = vmatpush1.msra.mxu0 0.0
  %924 = vmatprep.subr.mxu0 0.0
  %925 = vmatpush1.msra.mxu0 0.0
  %926 = vmatprep.subr.mxu0 0.0
  %927 = vmatpush1.msra.mxu0 0.0
  %928 = vmatprep.subr.mxu0 0.0
  %929 = vmatpush1.msra.mxu0 0.0
  %930 = vmatprep.subr.mxu0 0.0
  %931 = vmatpush1.msra.mxu0 0.0
  %932 = vmatprep.subr.mxu0 0.0
  %933 = vmatpush1.msra.mxu0 0.0
  %934 = vmatprep.subr.mxu0 0.0
  %935 = vmatpush1.msra.mxu0 0.0
  %936 = vmatprep.subr.mxu0 0.0
  %937 = vmatpush1.msra.mxu0 0.0
  %938 = vmatprep.subr.mxu0 0.0
  %939 = vmatpush1.msra.mxu0 0.0
  %940 = vmatprep.subr.mxu0 0.0
  %941 = vmatpush1.msra.mxu0 0.0
  %942 = vmatprep.subr.mxu0 0.0
  %943 = vmatpush1.msra.mxu0 0.0
  %944 = vmatprep.subr.mxu0 0.0
  %945 = vmatpush1.msra.mxu0 0.0
  %946 = vmatprep.mubr.f32.mxu0 0.0
  %947 = vmatmul.mubr.f32.gmra.mrb[0].mxu0 %v874
  %v948 = vpop.f32.mrb[0].mxu0
  %v949 = vadd.f32 0.0, %v948
  %v950 = vpop.f32.mrb[0].mxu0
  %v951 = vadd.f32 0.0, %v950
  %952 = vdwg.mxu0
  %953 = vmatprep.subr.mxu0 %v462
  %954 = vmatpush1.msra.mxu0 %v461
  %955 = vmatprep.subr.mxu0 %v466
  %956 = vmatpush1.msra.mxu0 %v465
  %957 = vmatprep.subr.mxu0 %v470
  %958 = vmatpush1.msra.mxu0 %v469
  %959 = vmatprep.subr.mxu0 %v474
  %960 = vmatpush1.msra.mxu0 %v473
  %961 = vmatprep.subr.mxu0 %v478
  %962 = vmatpush1.msra.mxu0 %v477
  %963 = vmatprep.subr.mxu0 %v482
  %964 = vmatpush1.msra.mxu0 %v481
  %965 = vmatprep.subr.mxu0 %v486
  %966 = vmatpush1.msra.mxu0 %v485
  %967 = vmatprep.subr.mxu0 %v490
  %968 = vmatpush1.msra.mxu0 %v489
  %969 = vmatprep.subr.mxu0 %v494
  %970 = vmatpush1.msra.mxu0 %v493
  %971 = vmatprep.subr.mxu0 %v498
  %972 = vmatpush1.msra.mxu0 %v497
  %973 = vmatprep.subr.mxu0 %v502
  %974 = vmatpush1.msra.mxu0 %v501
  %975 = vmatprep.subr.mxu0 %v506
  %976 = vmatpush1.msra.mxu0 %v505
  %977 = vmatprep.subr.mxu0 %v510
  %978 = vmatpush1.msra.mxu0 %v509
  %979 = vmatprep.subr.mxu0 %v514
  %980 = vmatpush1.msra.mxu0 %v513
  %981 = vmatprep.subr.mxu0 %v518
  %982 = vmatpush1.msra.mxu0 %v517
  %983 = vmatprep.subr.mxu0 %v522
  %984 = vmatpush1.msra.mxu0 %v521
  %985 = vmatprep.subr.mxu0 0.0
  %986 = vmatpush1.msra.mxu0 0.0
  %987 = vmatprep.subr.mxu0 0.0
  %988 = vmatpush1.msra.mxu0 0.0
  %989 = vmatprep.subr.mxu0 0.0
  %990 = vmatpush1.msra.mxu0 0.0
  %991 = vmatprep.subr.mxu0 0.0
  %992 = vmatpush1.msra.mxu0 0.0
  %993 = vmatprep.subr.mxu0 0.0
  %994 = vmatpush1.msra.mxu0 0.0
  %995 = vmatprep.subr.mxu0 0.0
  %996 = vmatpush1.msra.mxu0 0.0
  %997 = vmatprep.subr.mxu0 0.0
  %998 = vmatpush1.msra.mxu0 0.0
  %999 = vmatprep.subr.mxu0 0.0
  %1000 = vmatpush1.msra.mxu0 0.0
  %1001 = vmatprep.subr.mxu0 0.0
  %1002 = vmatpush1.msra.mxu0 0.0
  %1003 = vmatprep.subr.mxu0 0.0
  %1004 = vmatpush1.msra.mxu0 0.0
  %1005 = vmatprep.subr.mxu0 0.0
  %1006 = vmatpush1.msra.mxu0 0.0
  %1007 = vmatprep.subr.mxu0 0.0
  %1008 = vmatpush1.msra.mxu0 0.0
  %1009 = vmatprep.subr.mxu0 0.0
  %1010 = vmatpush1.msra.mxu0 0.0
  %1011 = vmatprep.subr.mxu0 0.0
  %1012 = vmatpush1.msra.mxu0 0.0
  %1013 = vmatprep.subr.mxu0 0.0
  %1014 = vmatpush1.msra.mxu0 0.0
  %1015 = vmatprep.subr.mxu0 0.0
  %1016 = vmatpush1.msra.mxu0 0.0
  %1017 = vmatprep.mubr.f32.mxu0 0.0
  %1018 = vmatmul.mubr.f32.gmra.mrb[0].mxu0 %v874
  %v1019 = vpop.f32.mrb[0].mxu0
  %v1020 = vadd.f32 0.0, %v1019
  %v1021 = vpop.f32.mrb[0].mxu0
  %v1022 = vadd.f32 0.0, %v1021
  %1023 = vdwg.mxu0
  %v1024 = vadd.f32 %v878, %v949
  %v1025 = vadd.f32 %v879, %v951
  %v1026 = vadd.f32 %v880, %v1020
  %v1027 = vadd.f32 %v881, %v1022
  %v1028 = vxor.u32 %v1024, 2147483648
  %v1029 = vxor.u32 %v1025, 2147483648
  %v1030 = vxor.u32 %v1026, 2147483648
  %v1031 = vmul.f32 %v1028, 1.442695
  %v1032 = vpow.pop %v1031
  %v1033 = vmul.f32 %v1029, 1.442695
  %v1034 = vpow.pop %v1033
  %v1035 = vmul.f32 %v1030, 1.442695
  %v1036 = vpow.pop %v1035
  %v1037 = vadd.f32 %v1032, 1.0
  %v1038 = vadd.f32 %v1034, 1.0
  %v1039 = vadd.f32 %v1036, 1.0
  %v1040 = vrcp.pop %v1037
  %v1041 = vmul.f32 1.0, %v1040
  %v1042 = vrcp.pop %v1038
  %v1043 = vmul.f32 1.0, %v1042
  %v1044 = vrcp.pop %v1039
  %v1045 = vmul.f32 1.0, %v1044
  %v1046 = vtanh.pop %v1027
  %v1047 = vmul.f32 %v1043, %v872
  %v1048 = vmul.f32 %v1041, %v1046
  %v1049 = vadd.f32 %v1047, %v1048
  %v1050 = vtanh.pop %v1049
  %v1051 = vmul.f32 %v1045, %v1050
  %s1052 = scalar_lea.vmem %s4, 16
  %1053 = vst [vmem:[%s1052] sm:$0xff] %v1051
  %s1054 = scalar_lea.vmem [#allocation5], 96
  %v1055 = vld [vmem:[%s1054] sm:$0xff]
  %v1056 = vld [vmem:[%s1054 + $0x8] sm:$0xff]
  %v1057 = vld [vmem:[%s1054 + $0x10] sm:$0xff]
  %v1058 = vld [vmem:[%s1054 + $0x18] sm:$0xff]
  %1059 = vmatprep.subr.mxu0 %v460
  %1060 = vmatpush1.msra.mxu0 %v459
  %1061 = vmatprep.subr.mxu0 %v464
  %1062 = vmatpush1.msra.mxu0 %v463
  %1063 = vmatprep.subr.mxu0 %v468
  %1064 = vmatpush1.msra.mxu0 %v467
  %1065 = vmatprep.subr.mxu0 %v472
  %1066 = vmatpush1.msra.mxu0 %v471
  %1067 = vmatprep.subr.mxu0 %v476
  %1068 = vmatpush1.msra.mxu0 %v475
  %1069 = vmatprep.subr.mxu0 %v480
  %1070 = vmatpush1.msra.mxu0 %v479
  %1071 = vmatprep.subr.mxu0 %v484
  %1072 = vmatpush1.msra.mxu0 %v483
  %1073 = vmatprep.subr.mxu0 %v488
  %1074 = vmatpush1.msra.mxu0 %v487
  %1075 = vmatprep.subr.mxu0 %v492
  %1076 = vmatpush1.msra.mxu0 %v491
  %1077 = vmatprep.subr.mxu0 %v496
  %1078 = vmatpush1.msra.mxu0 %v495
  %1079 = vmatprep.subr.mxu0 %v500
  %1080 = vmatpush1.msra.mxu0 %v499
  %1081 = vmatprep.subr.mxu0 %v504
  %1082 = vmatpush1.msra.mxu0 %v503
  %1083 = vmatprep.subr.mxu0 %v508
  %1084 = vmatpush1.msra.mxu0 %v507
  %1085 = vmatprep.subr.mxu0 %v512
  %1086 = vmatpush1.msra.mxu0 %v511
  %1087 = vmatprep.subr.mxu0 %v516
  %1088 = vmatpush1.msra.mxu0 %v515
  %1089 = vmatprep.subr.mxu0 %v520
  %1090 = vmatpush1.msra.mxu0 %v519
  %1091 = vmatprep.subr.mxu0 0.0
  %1092 = vmatpush1.msra.mxu0 0.0
  %1093 = vmatprep.subr.mxu0 0.0
  %1094 = vmatpush1.msra.mxu0 0.0
  %1095 = vmatprep.subr.mxu0 0.0
  %1096 = vmatpush1.msra.mxu0 0.0
  %1097 = vmatprep.subr.mxu0 0.0
  %1098 = vmatpush1.msra.mxu0 0.0
  %1099 = vmatprep.subr.mxu0 0.0
  %1100 = vmatpush1.msra.mxu0 0.0
  %1101 = vmatprep.subr.mxu0 0.0
  %1102 = vmatpush1.msra.mxu0 0.0
  %1103 = vmatprep.subr.mxu0 0.0
  %1104 = vmatpush1.msra.mxu0 0.0
  %1105 = vmatprep.subr.mxu0 0.0
  %1106 = vmatpush1.msra.mxu0 0.0
  %1107 = vmatprep.subr.mxu0 0.0
  %1108 = vmatpush1.msra.mxu0 0.0
  %1109 = vmatprep.subr.mxu0 0.0
  %1110 = vmatpush1.msra.mxu0 0.0
  %1111 = vmatprep.subr.mxu0 0.0
  %1112 = vmatpush1.msra.mxu0 0.0
  %1113 = vmatprep.subr.mxu0 0.0
  %1114 = vmatpush1.msra.mxu0 0.0
  %1115 = vmatprep.subr.mxu0 0.0
  %1116 = vmatpush1.msra.mxu0 0.0
  %1117 = vmatprep.subr.mxu0 0.0
  %1118 = vmatpush1.msra.mxu0 0.0
  %1119 = vmatprep.subr.mxu0 0.0
  %1120 = vmatpush1.msra.mxu0 0.0
  %1121 = vmatprep.subr.mxu0 0.0
  %1122 = vmatpush1.msra.mxu0 0.0
  %1123 = vmatprep.mubr.f32.mxu0 0.0
  %1124 = vmatmul.mubr.f32.gmra.mrb[0].mxu0 %v1051
  %v1125 = vpop.f32.mrb[0].mxu0
  %v1126 = vadd.f32 0.0, %v1125
  %v1127 = vpop.f32.mrb[0].mxu0
  %v1128 = vadd.f32 0.0, %v1127
  %1129 = vdwg.mxu0
  %1130 = vmatprep.subr.mxu0 %v462
  %1131 = vmatpush1.msra.mxu0 %v461
  %1132 = vmatprep.subr.mxu0 %v466
  %1133 = vmatpush1.msra.mxu0 %v465
  %1134 = vmatprep.subr.mxu0 %v470
  %1135 = vmatpush1.msra.mxu0 %v469
  %1136 = vmatprep.subr.mxu0 %v474
  %1137 = vmatpush1.msra.mxu0 %v473
  %1138 = vmatprep.subr.mxu0 %v478
  %1139 = vmatpush1.msra.mxu0 %v477
  %1140 = vmatprep.subr.mxu0 %v482
  %1141 = vmatpush1.msra.mxu0 %v481
  %1142 = vmatprep.subr.mxu0 %v486
  %1143 = vmatpush1.msra.mxu0 %v485
  %1144 = vmatprep.subr.mxu0 %v490
  %1145 = vmatpush1.msra.mxu0 %v489
  %1146 = vmatprep.subr.mxu0 %v494
  %1147 = vmatpush1.msra.mxu0 %v493
  %1148 = vmatprep.subr.mxu0 %v498
  %1149 = vmatpush1.msra.mxu0 %v497
  %1150 = vmatprep.subr.mxu0 %v502
  %1151 = vmatpush1.msra.mxu0 %v501
  %1152 = vmatprep.subr.mxu0 %v506
  %1153 = vmatpush1.msra.mxu0 %v505
  %1154 = vmatprep.subr.mxu0 %v510
  %1155 = vmatpush1.msra.mxu0 %v509
  %1156 = vmatprep.subr.mxu0 %v514
  %1157 = vmatpush1.msra.mxu0 %v513
  %1158 = vmatprep.subr.mxu0 %v518
  %1159 = vmatpush1.msra.mxu0 %v517
  %1160 = vmatprep.subr.mxu0 %v522
  %1161 = vmatpush1.msra.mxu0 %v521
  %1162 = vmatprep.subr.mxu0 0.0
  %1163 = vmatpush1.msra.mxu0 0.0
  %1164 = vmatprep.subr.mxu0 0.0
  %1165 = vmatpush1.msra.mxu0 0.0
  %1166 = vmatprep.subr.mxu0 0.0
  %1167 = vmatpush1.msra.mxu0 0.0
  %1168 = vmatprep.subr.mxu0 0.0
  %1169 = vmatpush1.msra.mxu0 0.0
  %1170 = vmatprep.subr.mxu0 0.0
  %1171 = vmatpush1.msra.mxu0 0.0
  %1172 = vmatprep.subr.mxu0 0.0
  %1173 = vmatpush1.msra.mxu0 0.0
  %1174 = vmatprep.subr.mxu0 0.0
  %1175 = vmatpush1.msra.mxu0 0.0
  %1176 = vmatprep.subr.mxu0 0.0
  %1177 = vmatpush1.msra.mxu0 0.0
  %1178 = vmatprep.subr.mxu0 0.0
  %1179 = vmatpush1.msra.mxu0 0.0
  %1180 = vmatprep.subr.mxu0 0.0
  %1181 = vmatpush1.msra.mxu0 0.0
  %1182 = vmatprep.subr.mxu0 0.0
  %1183 = vmatpush1.msra.mxu0 0.0
  %1184 = vmatprep.subr.mxu0 0.0
  %1185 = vmatpush1.msra.mxu0 0.0
  %1186 = vmatprep.subr.mxu0 0.0
  %1187 = vmatpush1.msra.mxu0 0.0
  %1188 = vmatprep.subr.mxu0 0.0
  %1189 = vmatpush1.msra.mxu0 0.0
  %1190 = vmatprep.subr.mxu0 0.0
  %1191 = vmatpush1.msra.mxu0 0.0
  %1192 = vmatprep.subr.mxu0 0.0
  %1193 = vmatpush1.msra.mxu0 0.0
  %1194 = vmatprep.mubr.f32.mxu0 0.0
  %1195 = vmatmul.mubr.f32.gmra.mrb[0].mxu0 %v1051
  %v1196 = vpop.f32.mrb[0].mxu0
  %v1197 = vadd.f32 0.0, %v1196
  %v1198 = vpop.f32.mrb[0].mxu0
  %v1199 = vadd.f32 0.0, %v1198
  %1200 = vdwg.mxu0
  %v1201 = vadd.f32 %v1055, %v1126
  %v1202 = vadd.f32 %v1056, %v1128
  %v1203 = vadd.f32 %v1057, %v1197
  %v1204 = vadd.f32 %v1058, %v1199
  %v1205 = vxor.u32 %v1201, 2147483648
  %v1206 = vxor.u32 %v1202, 2147483648
  %v1207 = vxor.u32 %v1203, 2147483648
  %v1208 = vmul.f32 %v1205, 1.442695
  %v1209 = vpow.pop %v1208
  %v1210 = vmul.f32 %v1206, 1.442695
  %v1211 = vpow.pop %v1210
  %v1212 = vmul.f32 %v1207, 1.442695
  %v1213 = vpow.pop %v1212
  %v1214 = vadd.f32 %v1209, 1.0
  %v1215 = vadd.f32 %v1211, 1.0
  %v1216 = vadd.f32 %v1213, 1.0
  %v1217 = vrcp.pop %v1214
  %v1218 = vmul.f32 1.0, %v1217
  %v1219 = vrcp.pop %v1215
  %v1220 = vmul.f32 1.0, %v1219
  %v1221 = vrcp.pop %v1216
  %v1222 = vmul.f32 1.0, %v1221
  %v1223 = vtanh.pop %v1204
  %v1224 = vmul.f32 %v1220, %v1049
  %v1225 = vmul.f32 %v1218, %v1223
  %v1226 = vadd.f32 %v1224, %v1225
  %v1227 = vtanh.pop %v1226
  %v1228 = vmul.f32 %v1222, %v1227
  %s1229 = scalar_lea.vmem %s4, 24
  %1230 = vst [vmem:[%s1229] sm:$0xff] %v1228
  %s1231 = scalar_lea.vmem [#allocation5], 128
  %v1232 = vld [vmem:[%s1231] sm:$0xff]
  %v1233 = vld [vmem:[%s1231 + $0x8] sm:$0xff]
  %v1234 = vld [vmem:[%s1231 + $0x10] sm:$0xff]
  %v1235 = vld [vmem:[%s1231 + $0x18] sm:$0xff]
  %1236 = vmatprep.subr.mxu0 %v460
  %1237 = vmatpush1.msra.mxu0 %v459
  %1238 = vmatprep.subr.mxu0 %v464
  %1239 = vmatpush1.msra.mxu0 %v463
  %1240 = vmatprep.subr.mxu0 %v468
  %1241 = vmatpush1.msra.mxu0 %v467
  %1242 = vmatprep.subr.mxu0 %v472
  %1243 = vmatpush1.msra.mxu0 %v471
  %1244 = vmatprep.subr.mxu0 %v476
  %1245 = vmatpush1.msra.mxu0 %v475
  %1246 = vmatprep.subr.mxu0 %v480
  %1247 = vmatpush1.msra.mxu0 %v479
  %1248 = vmatprep.subr.mxu0 %v484
  %1249 = vmatpush1.msra.mxu0 %v483
  %1250 = vmatprep.subr.mxu0 %v488
  %1251 = vmatpush1.msra.mxu0 %v487
  %1252 = vmatprep.subr.mxu0 %v492
  %1253 = vmatpush1.msra.mxu0 %v491
  %1254 = vmatprep.subr.mxu0 %v496
  %1255 = vmatpush1.msra.mxu0 %v495
  %1256 = vmatprep.subr.mxu0 %v500
  %1257 = vmatpush1.msra.mxu0 %v499
  %1258 = vmatprep.subr.mxu0 %v504
  %1259 = vmatpush1.msra.mxu0 %v503
  %1260 = vmatprep.subr.mxu0 %v508
  %1261 = vmatpush1.msra.mxu0 %v507
  %1262 = vmatprep.subr.mxu0 %v512
  %1263 = vmatpush1.msra.mxu0 %v511
  %1264 = vmatprep.subr.mxu0 %v516
  %1265 = vmatpush1.msra.mxu0 %v515
  %1266 = vmatprep.subr.mxu0 %v520
  %1267 = vmatpush1.msra.mxu0 %v519
  %1268 = vmatprep.subr.mxu0 0.0
  %1269 = vmatpush1.msra.mxu0 0.0
  %1270 = vmatprep.subr.mxu0 0.0
  %1271 = vmatpush1.msra.mxu0 0.0
  %1272 = vmatprep.subr.mxu0 0.0
  %1273 = vmatpush1.msra.mxu0 0.0
  %1274 = vmatprep.subr.mxu0 0.0
  %1275 = vmatpush1.msra.mxu0 0.0
  %1276 = vmatprep.subr.mxu0 0.0
  %1277 = vmatpush1.msra.mxu0 0.0
  %1278 = vmatprep.subr.mxu0 0.0
  %1279 = vmatpush1.msra.mxu0 0.0
  %1280 = vmatprep.subr.mxu0 0.0
  %1281 = vmatpush1.msra.mxu0 0.0
  %1282 = vmatprep.subr.mxu0 0.0
  %1283 = vmatpush1.msra.mxu0 0.0
  %1284 = vmatprep.subr.mxu0 0.0
  %1285 = vmatpush1.msra.mxu0 0.0
  %1286 = vmatprep.subr.mxu0 0.0
  %1287 = vmatpush1.msra.mxu0 0.0
  %1288 = vmatprep.subr.mxu0 0.0
  %1289 = vmatpush1.msra.mxu0 0.0
  %1290 = vmatprep.subr.mxu0 0.0
  %1291 = vmatpush1.msra.mxu0 0.0
  %1292 = vmatprep.subr.mxu0 0.0
  %1293 = vmatpush1.msra.mxu0 0.0
  %1294 = vmatprep.subr.mxu0 0.0
  %1295 = vmatpush1.msra.mxu0 0.0
  %1296 = vmatprep.subr.mxu0 0.0
  %1297 = vmatpush1.msra.mxu0 0.0
  %1298 = vmatprep.subr.mxu0 0.0
  %1299 = vmatpush1.msra.mxu0 0.0
  %1300 = vmatprep.mubr.f32.mxu0 0.0
  %1301 = vmatmul.mubr.f32.gmra.mrb[0].mxu0 %v1228
  %v1302 = vpop.f32.mrb[0].mxu0
  %v1303 = vadd.f32 0.0, %v1302
  %v1304 = vpop.f32.mrb[0].mxu0
  %v1305 = vadd.f32 0.0, %v1304
  %1306 = vdwg.mxu0
  %1307 = vmatprep.subr.mxu0 %v462
  %1308 = vmatpush1.msra.mxu0 %v461
  %1309 = vmatprep.subr.mxu0 %v466
  %1310 = vmatpush1.msra.mxu0 %v465
  %1311 = vmatprep.subr.mxu0 %v470
  %1312 = vmatpush1.msra.mxu0 %v469
  %1313 = vmatprep.subr.mxu0 %v474
  %1314 = vmatpush1.msra.mxu0 %v473
  %1315 = vmatprep.subr.mxu0 %v478
  %1316 = vmatpush1.msra.mxu0 %v477
  %1317 = vmatprep.subr.mxu0 %v482
  %1318 = vmatpush1.msra.mxu0 %v481
  %1319 = vmatprep.subr.mxu0 %v486
  %1320 = vmatpush1.msra.mxu0 %v485
  %1321 = vmatprep.subr.mxu0 %v490
  %1322 = vmatpush1.msra.mxu0 %v489
  %1323 = vmatprep.subr.mxu0 %v494
  %1324 = vmatpush1.msra.mxu0 %v493
  %1325 = vmatprep.subr.mxu0 %v498
  %1326 = vmatpush1.msra.mxu0 %v497
  %1327 = vmatprep.subr.mxu0 %v502
  %1328 = vmatpush1.msra.mxu0 %v501
  %1329 = vmatprep.subr.mxu0 %v506
  %1330 = vmatpush1.msra.mxu0 %v505
  %1331 = vmatprep.subr.mxu0 %v510
  %1332 = vmatpush1.msra.mxu0 %v509
  %1333 = vmatprep.subr.mxu0 %v514
  %1334 = vmatpush1.msra.mxu0 %v513
  %1335 = vmatprep.subr.mxu0 %v518
  %1336 = vmatpush1.msra.mxu0 %v517
  %1337 = vmatprep.subr.mxu0 %v522
  %1338 = vmatpush1.msra.mxu0 %v521
  %1339 = vmatprep.subr.mxu0 0.0
  %1340 = vmatpush1.msra.mxu0 0.0
  %1341 = vmatprep.subr.mxu0 0.0
  %1342 = vmatpush1.msra.mxu0 0.0
  %1343 = vmatprep.subr.mxu0 0.0
  %1344 = vmatpush1.msra.mxu0 0.0
  %1345 = vmatprep.subr.mxu0 0.0
  %1346 = vmatpush1.msra.mxu0 0.0
  %1347 = vmatprep.subr.mxu0 0.0
  %1348 = vmatpush1.msra.mxu0 0.0
  %1349 = vmatprep.subr.mxu0 0.0
  %1350 = vmatpush1.msra.mxu0 0.0
  %1351 = vmatprep.subr.mxu0 0.0
  %1352 = vmatpush1.msra.mxu0 0.0
  %1353 = vmatprep.subr.mxu0 0.0
  %1354 = vmatpush1.msra.mxu0 0.0
  %1355 = vmatprep.subr.mxu0 0.0
  %1356 = vmatpush1.msra.mxu0 0.0
  %1357 = vmatprep.subr.mxu0 0.0
  %1358 = vmatpush1.msra.mxu0 0.0
  %1359 = vmatprep.subr.mxu0 0.0
  %1360 = vmatpush1.msra.mxu0 0.0
  %1361 = vmatprep.subr.mxu0 0.0
  %1362 = vmatpush1.msra.mxu0 0.0
  %1363 = vmatprep.subr.mxu0 0.0
  %1364 = vmatpush1.msra.mxu0 0.0
  %1365 = vmatprep.subr.mxu0 0.0
  %1366 = vmatpush1.msra.mxu0 0.0
  %1367 = vmatprep.subr.mxu0 0.0
  %1368 = vmatpush1.msra.mxu0 0.0
  %1369 = vmatprep.subr.mxu0 0.0
  %1370 = vmatpush1.msra.mxu0 0.0
  %1371 = vmatprep.mubr.f32.mxu0 0.0
  %1372 = vmatmul.mubr.f32.gmra.mrb[0].mxu0 %v1228
  %v1373 = vpop.f32.mrb[0].mxu0
  %v1374 = vadd.f32 0.0, %v1373
  %v1375 = vpop.f32.mrb[0].mxu0
  %v1376 = vadd.f32 0.0, %v1375
  %1377 = vdwg.mxu0
  %v1378 = vadd.f32 %v1232, %v1303
  %v1379 = vadd.f32 %v1233, %v1305
  %v1380 = vadd.f32 %v1234, %v1374
  %v1381 = vadd.f32 %v1235, %v1376
  %v1382 = vxor.u32 %v1378, 2147483648
  %v1383 = vxor.u32 %v1379, 2147483648
  %v1384 = vxor.u32 %v1380, 2147483648
  %v1385 = vmul.f32 %v1382, 1.442695
  %v1386 = vpow.pop %v1385
  %v1387 = vmul.f32 %v1383, 1.442695
  %v1388 = vpow.pop %v1387
  %v1389 = vmul.f32 %v1384, 1.442695
  %v1390 = vpow.pop %v1389
  %v1391 = vadd.f32 %v1386, 1.0
  %v1392 = vadd.f32 %v1388, 1.0
  %v1393 = vadd.f32 %v1390, 1.0
  %v1394 = vrcp.pop %v1391
  %v1395 = vmul.f32 1.0, %v1394
  %v1396 = vrcp.pop %v1392
  %v1397 = vmul.f32 1.0, %v1396
  %v1398 = vrcp.pop %v1393
  %v1399 = vmul.f32 1.0, %v1398
  %v1400 = vtanh.pop %v1381
  %v1401 = vmul.f32 %v1397, %v1226
  %v1402 = vmul.f32 %v1395, %v1400
  %v1403 = vadd.f32 %v1401, %v1402
  %v1404 = vtanh.pop %v1403
  %v1405 = vmul.f32 %v1399, %v1404
  %s1406 = scalar_lea.vmem %s4, 32
  %1407 = vst [vmem:[%s1406] sm:$0xff] %v1405
  %s1408 = scalar_lea.vmem [#allocation5], 160
  %v1409 = vld [vmem:[%s1408] sm:$0xff]
  %v1410 = vld [vmem:[%s1408 + $0x8] sm:$0xff]
  %v1411 = vld [vmem:[%s1408 + $0x10] sm:$0xff]
  %v1412 = vld [vmem:[%s1408 + $0x18] sm:$0xff]
  %1413 = vmatprep.subr.mxu0 %v460
  %1414 = vmatpush1.msra.mxu0 %v459
  %1415 = vmatprep.subr.mxu0 %v464
  %1416 = vmatpush1.msra.mxu0 %v463
  %1417 = vmatprep.subr.mxu0 %v468
  %1418 = vmatpush1.msra.mxu0 %v467
  %1419 = vmatprep.subr.mxu0 %v472
  %1420 = vmatpush1.msra.mxu0 %v471
  %1421 = vmatprep.subr.mxu0 %v476
  %1422 = vmatpush1.msra.mxu0 %v475
  %1423 = vmatprep.subr.mxu0 %v480
  %1424 = vmatpush1.msra.mxu0 %v479
  %1425 = vmatprep.subr.mxu0 %v484
  %1426 = vmatpush1.msra.mxu0 %v483
  %1427 = vmatprep.subr.mxu0 %v488
  %1428 = vmatpush1.msra.mxu0 %v487
  %1429 = vmatprep.subr.mxu0 %v492
  %1430 = vmatpush1.msra.mxu0 %v491
  %1431 = vmatprep.subr.mxu0 %v496
  %1432 = vmatpush1.msra.mxu0 %v495
  %1433 = vmatprep.subr.mxu0 %v500
  %1434 = vmatpush1.msra.mxu0 %v499
  %1435 = vmatprep.subr.mxu0 %v504
  %1436 = vmatpush1.msra.mxu0 %v503
  %1437 = vmatprep.subr.mxu0 %v508
  %1438 = vmatpush1.msra.mxu0 %v507
  %1439 = vmatprep.subr.mxu0 %v512
  %1440 = vmatpush1.msra.mxu0 %v511
  %1441 = vmatprep.subr.mxu0 %v516
  %1442 = vmatpush1.msra.mxu0 %v515
  %1443 = vmatprep.subr.mxu0 %v520
  %1444 = vmatpush1.msra.mxu0 %v519
  %1445 = vmatprep.subr.mxu0 0.0
  %1446 = vmatpush1.msra.mxu0 0.0
  %1447 = vmatprep.subr.mxu0 0.0
  %1448 = vmatpush1.msra.mxu0 0.0
  %1449 = vmatprep.subr.mxu0 0.0
  %1450 = vmatpush1.msra.mxu0 0.0
  %1451 = vmatprep.subr.mxu0 0.0
  %1452 = vmatpush1.msra.mxu0 0.0
  %1453 = vmatprep.subr.mxu0 0.0
  %1454 = vmatpush1.msra.mxu0 0.0
  %1455 = vmatprep.subr.mxu0 0.0
  %1456 = vmatpush1.msra.mxu0 0.0
  %1457 = vmatprep.subr.mxu0 0.0
  %1458 = vmatpush1.msra.mxu0 0.0
  %1459 = vmatprep.subr.mxu0 0.0
  %1460 = vmatpush1.msra.mxu0 0.0
  %1461 = vmatprep.subr.mxu0 0.0
  %1462 = vmatpush1.msra.mxu0 0.0
  %1463 = vmatprep.subr.mxu0 0.0
  %1464 = vmatpush1.msra.mxu0 0.0
  %1465 = vmatprep.subr.mxu0 0.0
  %1466 = vmatpush1.msra.mxu0 0.0
  %1467 = vmatprep.subr.mxu0 0.0
  %1468 = vmatpush1.msra.mxu0 0.0
  %1469 = vmatprep.subr.mxu0 0.0
  %1470 = vmatpush1.msra.mxu0 0.0
  %1471 = vmatprep.subr.mxu0 0.0
  %1472 = vmatpush1.msra.mxu0 0.0
  %1473 = vmatprep.subr.mxu0 0.0
  %1474 = vmatpush1.msra.mxu0 0.0
  %1475 = vmatprep.subr.mxu0 0.0
  %1476 = vmatpush1.msra.mxu0 0.0
  %1477 = vmatprep.mubr.f32.mxu0 0.0
  %1478 = vmatmul.mubr.f32.gmra.mrb[0].mxu0 %v1405
  %v1479 = vpop.f32.mrb[0].mxu0
  %v1480 = vadd.f32 0.0, %v1479
  %v1481 = vpop.f32.mrb[0].mxu0
  %v1482 = vadd.f32 0.0, %v1481
  %1483 = vdwg.mxu0
  %1484 = vmatprep.subr.mxu0 %v462
  %1485 = vmatpush1.msra.mxu0 %v461
  %1486 = vmatprep.subr.mxu0 %v466
  %1487 = vmatpush1.msra.mxu0 %v465
  %1488 = vmatprep.subr.mxu0 %v470
  %1489 = vmatpush1.msra.mxu0 %v469
  %1490 = vmatprep.subr.mxu0 %v474
  %1491 = vmatpush1.msra.mxu0 %v473
  %1492 = vmatprep.subr.mxu0 %v478
  %1493 = vmatpush1.msra.mxu0 %v477
  %1494 = vmatprep.subr.mxu0 %v482
  %1495 = vmatpush1.msra.mxu0 %v481
  %1496 = vmatprep.subr.mxu0 %v486
  %1497 = vmatpush1.msra.mxu0 %v485
  %1498 = vmatprep.subr.mxu0 %v490
  %1499 = vmatpush1.msra.mxu0 %v489
  %1500 = vmatprep.subr.mxu0 %v494
  %1501 = vmatpush1.msra.mxu0 %v493
  %1502 = vmatprep.subr.mxu0 %v498
  %1503 = vmatpush1.msra.mxu0 %v497
  %1504 = vmatprep.subr.mxu0 %v502
  %1505 = vmatpush1.msra.mxu0 %v501
  %1506 = vmatprep.subr.mxu0 %v506
  %1507 = vmatpush1.msra.mxu0 %v505
  %1508 = vmatprep.subr.mxu0 %v510
  %1509 = vmatpush1.msra.mxu0 %v509
  %1510 = vmatprep.subr.mxu0 %v514
  %1511 = vmatpush1.msra.mxu0 %v513
  %1512 = vmatprep.subr.mxu0 %v518
  %1513 = vmatpush1.msra.mxu0 %v517
  %1514 = vmatprep.subr.mxu0 %v522
  %1515 = vmatpush1.msra.mxu0 %v521
  %1516 = vmatprep.subr.mxu0 0.0
  %1517 = vmatpush1.msra.mxu0 0.0
  %1518 = vmatprep.subr.mxu0 0.0
  %1519 = vmatpush1.msra.mxu0 0.0
  %1520 = vmatprep.subr.mxu0 0.0
  %1521 = vmatpush1.msra.mxu0 0.0
  %1522 = vmatprep.subr.mxu0 0.0
  %1523 = vmatpush1.msra.mxu0 0.0
  %1524 = vmatprep.subr.mxu0 0.0
  %1525 = vmatpush1.msra.mxu0 0.0
  %1526 = vmatprep.subr.mxu0 0.0
  %1527 = vmatpush1.msra.mxu0 0.0
  %1528 = vmatprep.subr.mxu0 0.0
  %1529 = vmatpush1.msra.mxu0 0.0
  %1530 = vmatprep.subr.mxu0 0.0
  %1531 = vmatpush1.msra.mxu0 0.0
  %1532 = vmatprep.subr.mxu0 0.0
  %1533 = vmatpush1.msra.mxu0 0.0
  %1534 = vmatprep.subr.mxu0 0.0
  %1535 = vmatpush1.msra.mxu0 0.0
  %1536 = vmatprep.subr.mxu0 0.0
  %1537 = vmatpush1.msra.mxu0 0.0
  %1538 = vmatprep.subr.mxu0 0.0
  %1539 = vmatpush1.msra.mxu0 0.0
  %1540 = vmatprep.subr.mxu0 0.0
  %1541 = vmatpush1.msra.mxu0 0.0
  %1542 = vmatprep.subr.mxu0 0.0
  %1543 = vmatpush1.msra.mxu0 0.0
  %1544 = vmatprep.subr.mxu0 0.0
  %1545 = vmatpush1.msra.mxu0 0.0
  %1546 = vmatprep.subr.mxu0 0.0
  %1547 = vmatpush1.msra.mxu0 0.0
  %1548 = vmatprep.mubr.f32.mxu0 0.0
  %1549 = vmatmul.mubr.f32.gmra.mrb[0].mxu0 %v1405
  %v1550 = vpop.f32.mrb[0].mxu0
  %v1551 = vadd.f32 0.0, %v1550
  %v1552 = vpop.f32.mrb[0].mxu0
  %v1553 = vadd.f32 0.0, %v1552
  %1554 = vdwg.mxu0
  %v1555 = vadd.f32 %v1409, %v1480
  %v1556 = vadd.f32 %v1410, %v1482
  %v1557 = vadd.f32 %v1411, %v1551
  %v1558 = vadd.f32 %v1412, %v1553
  %v1559 = vxor.u32 %v1555, 2147483648
  %v1560 = vxor.u32 %v1556, 2147483648
  %v1561 = vxor.u32 %v1557, 2147483648
  %v1562 = vmul.f32 %v1559, 1.442695
  %v1563 = vpow.pop %v1562
  %v1564 = vmul.f32 %v1560, 1.442695
  %v1565 = vpow.pop %v1564
  %v1566 = vmul.f32 %v1561, 1.442695
  %v1567 = vpow.pop %v1566
  %v1568 = vadd.f32 %v1563, 1.0
  %v1569 = vadd.f32 %v1565, 1.0
  %v1570 = vadd.f32 %v1567, 1.0
  %v1571 = vrcp.pop %v1568
  %v1572 = vmul.f32 1.0, %v1571
  %v1573 = vrcp.pop %v1569
  %v1574 = vmul.f32 1.0, %v1573
  %v1575 = vrcp.pop %v1570
  %v1576 = vmul.f32 1.0, %v1575
  %v1577 = vtanh.pop %v1558
  %v1578 = vmul.f32 %v1574, %v1403
  %v1579 = vmul.f32 %v1572, %v1577
  %v1580 = vadd.f32 %v1578, %v1579
  %v1581 = vtanh.pop %v1580
  %v1582 = vmul.f32 %v1576, %v1581
  %s1583 = scalar_lea.vmem %s4, 40
  %1584 = vst [vmem:[%s1583] sm:$0xff] %v1582
  %s1585 = scalar_lea.vmem [#allocation5], 192
  %v1586 = vld [vmem:[%s1585] sm:$0xff]
  %v1587 = vld [vmem:[%s1585 + $0x8] sm:$0xff]
  %v1588 = vld [vmem:[%s1585 + $0x10] sm:$0xff]
  %v1589 = vld [vmem:[%s1585 + $0x18] sm:$0xff]
  %1590 = vmatprep.subr.mxu0 %v460
  %1591 = vmatpush1.msra.mxu0 %v459
  %1592 = vmatprep.subr.mxu0 %v464
  %1593 = vmatpush1.msra.mxu0 %v463
  %1594 = vmatprep.subr.mxu0 %v468
  %1595 = vmatpush1.msra.mxu0 %v467
  %1596 = vmatprep.subr.mxu0 %v472
  %1597 = vmatpush1.msra.mxu0 %v471
  %1598 = vmatprep.subr.mxu0 %v476
  %1599 = vmatpush1.msra.mxu0 %v475
  %1600 = vmatprep.subr.mxu0 %v480
  %1601 = vmatpush1.msra.mxu0 %v479
  %1602 = vmatprep.subr.mxu0 %v484
  %1603 = vmatpush1.msra.mxu0 %v483
  %1604 = vmatprep.subr.mxu0 %v488
  %1605 = vmatpush1.msra.mxu0 %v487
  %1606 = vmatprep.subr.mxu0 %v492
  %1607 = vmatpush1.msra.mxu0 %v491
  %1608 = vmatprep.subr.mxu0 %v496
  %1609 = vmatpush1.msra.mxu0 %v495
  %1610 = vmatprep.subr.mxu0 %v500
  %1611 = vmatpush1.msra.mxu0 %v499
  %1612 = vmatprep.subr.mxu0 %v504
  %1613 = vmatpush1.msra.mxu0 %v503
  %1614 = vmatprep.subr.mxu0 %v508
  %1615 = vmatpush1.msra.mxu0 %v507
  %1616 = vmatprep.subr.mxu0 %v512
  %1617 = vmatpush1.msra.mxu0 %v511
  %1618 = vmatprep.subr.mxu0 %v516
  %1619 = vmatpush1.msra.mxu0 %v515
  %1620 = vmatprep.subr.mxu0 %v520
  %1621 = vmatpush1.msra.mxu0 %v519
  %1622 = vmatprep.subr.mxu0 0.0
  %1623 = vmatpush1.msra.mxu0 0.0
  %1624 = vmatprep.subr.mxu0 0.0
  %1625 = vmatpush1.msra.mxu0 0.0
  %1626 = vmatprep.subr.mxu0 0.0
  %1627 = vmatpush1.msra.mxu0 0.0
  %1628 = vmatprep.subr.mxu0 0.0
  %1629 = vmatpush1.msra.mxu0 0.0
  %1630 = vmatprep.subr.mxu0 0.0
  %1631 = vmatpush1.msra.mxu0 0.0
  %1632 = vmatprep.subr.mxu0 0.0
  %1633 = vmatpush1.msra.mxu0 0.0
  %1634 = vmatprep.subr.mxu0 0.0
  %1635 = vmatpush1.msra.mxu0 0.0
  %1636 = vmatprep.subr.mxu0 0.0
  %1637 = vmatpush1.msra.mxu0 0.0
  %1638 = vmatprep.subr.mxu0 0.0
  %1639 = vmatpush1.msra.mxu0 0.0
  %1640 = vmatprep.subr.mxu0 0.0
  %1641 = vmatpush1.msra.mxu0 0.0
  %1642 = vmatprep.subr.mxu0 0.0
  %1643 = vmatpush1.msra.mxu0 0.0
  %1644 = vmatprep.subr.mxu0 0.0
  %1645 = vmatpush1.msra.mxu0 0.0
  %1646 = vmatprep.subr.mxu0 0.0
  %1647 = vmatpush1.msra.mxu0 0.0
  %1648 = vmatprep.subr.mxu0 0.0
  %1649 = vmatpush1.msra.mxu0 0.0
  %1650 = vmatprep.subr.mxu0 0.0
  %1651 = vmatpush1.msra.mxu0 0.0
  %1652 = vmatprep.subr.mxu0 0.0
  %1653 = vmatpush1.msra.mxu0 0.0
  %1654 = vmatprep.mubr.f32.mxu0 0.0
  %1655 = vmatmul.mubr.f32.gmra.mrb[0].mxu0 %v1582
  %v1656 = vpop.f32.mrb[0].mxu0
  %v1657 = vadd.f32 0.0, %v1656
  %v1658 = vpop.f32.mrb[0].mxu0
  %v1659 = vadd.f32 0.0, %v1658
  %1660 = vdwg.mxu0
  %1661 = vmatprep.subr.mxu0 %v462
  %1662 = vmatpush1.msra.mxu0 %v461
  %1663 = vmatprep.subr.mxu0 %v466
  %1664 = vmatpush1.msra.mxu0 %v465
  %1665 = vmatprep.subr.mxu0 %v470
  %1666 = vmatpush1.msra.mxu0 %v469
  %1667 = vmatprep.subr.mxu0 %v474
  %1668 = vmatpush1.msra.mxu0 %v473
  %1669 = vmatprep.subr.mxu0 %v478
  %1670 = vmatpush1.msra.mxu0 %v477
  %1671 = vmatprep.subr.mxu0 %v482
  %1672 = vmatpush1.msra.mxu0 %v481
  %1673 = vmatprep.subr.mxu0 %v486
  %1674 = vmatpush1.msra.mxu0 %v485
  %1675 = vmatprep.subr.mxu0 %v490
  %1676 = vmatpush1.msra.mxu0 %v489
  %1677 = vmatprep.subr.mxu0 %v494
  %1678 = vmatpush1.msra.mxu0 %v493
  %1679 = vmatprep.subr.mxu0 %v498
  %1680 = vmatpush1.msra.mxu0 %v497
  %1681 = vmatprep.subr.mxu0 %v502
  %1682 = vmatpush1.msra.mxu0 %v501
  %1683 = vmatprep.subr.mxu0 %v506
  %1684 = vmatpush1.msra.mxu0 %v505
  %1685 = vmatprep.subr.mxu0 %v510
  %1686 = vmatpush1.msra.mxu0 %v509
  %1687 = vmatprep.subr.mxu0 %v514
  %1688 = vmatpush1.msra.mxu0 %v513
  %1689 = vmatprep.subr.mxu0 %v518
  %1690 = vmatpush1.msra.mxu0 %v517
  %1691 = vmatprep.subr.mxu0 %v522
  %1692 = vmatpush1.msra.mxu0 %v521
  %1693 = vmatprep.subr.mxu0 0.0
  %1694 = vmatpush1.msra.mxu0 0.0
  %1695 = vmatprep.subr.mxu0 0.0
  %1696 = vmatpush1.msra.mxu0 0.0
  %1697 = vmatprep.subr.mxu0 0.0
  %1698 = vmatpush1.msra.mxu0 0.0
  %1699 = vmatprep.subr.mxu0 0.0
  %1700 = vmatpush1.msra.mxu0 0.0
  %1701 = vmatprep.subr.mxu0 0.0
  %1702 = vmatpush1.msra.mxu0 0.0
  %1703 = vmatprep.subr.mxu0 0.0
  %1704 = vmatpush1.msra.mxu0 0.0
  %1705 = vmatprep.subr.mxu0 0.0
  %1706 = vmatpush1.msra.mxu0 0.0
  %1707 = vmatprep.subr.mxu0 0.0
  %1708 = vmatpush1.msra.mxu0 0.0
  %1709 = vmatprep.subr.mxu0 0.0
  %1710 = vmatpush1.msra.mxu0 0.0
  %1711 = vmatprep.subr.mxu0 0.0
  %1712 = vmatpush1.msra.mxu0 0.0
  %1713 = vmatprep.subr.mxu0 0.0
  %1714 = vmatpush1.msra.mxu0 0.0
  %1715 = vmatprep.subr.mxu0 0.0
  %1716 = vmatpush1.msra.mxu0 0.0
  %1717 = vmatprep.subr.mxu0 0.0
  %1718 = vmatpush1.msra.mxu0 0.0
  %1719 = vmatprep.subr.mxu0 0.0
  %1720 = vmatpush1.msra.mxu0 0.0
  %1721 = vmatprep.subr.mxu0 0.0
  %1722 = vmatpush1.msra.mxu0 0.0
  %1723 = vmatprep.subr.mxu0 0.0
  %1724 = vmatpush1.msra.mxu0 0.0
  %1725 = vmatprep.mubr.f32.mxu0 0.0
  %1726 = vmatmul.mubr.f32.gmra.mrb[0].mxu0 %v1582
  %v1727 = vpop.f32.mrb[0].mxu0
  %v1728 = vadd.f32 0.0, %v1727
  %v1729 = vpop.f32.mrb[0].mxu0
  %v1730 = vadd.f32 0.0, %v1729
  %1731 = vdwg.mxu0
  %v1732 = vadd.f32 %v1586, %v1657
  %v1733 = vadd.f32 %v1587, %v1659
  %v1734 = vadd.f32 %v1588, %v1728
  %v1735 = vadd.f32 %v1589, %v1730
  %v1736 = vxor.u32 %v1732, 2147483648
  %v1737 = vxor.u32 %v1733, 2147483648
  %v1738 = vxor.u32 %v1734, 2147483648
  %v1739 = vmul.f32 %v1736, 1.442695
  %v1740 = vpow.pop %v1739
  %v1741 = vmul.f32 %v1737, 1.442695
  %v1742 = vpow.pop %v1741
  %v1743 = vmul.f32 %v1738, 1.442695
  %v1744 = vpow.pop %v1743
  %v1745 = vadd.f32 %v1740, 1.0
  %v1746 = vadd.f32 %v1742, 1.0
  %v1747 = vadd.f32 %v1744, 1.0
  %v1748 = vrcp.pop %v1745
  %v1749 = vmul.f32 1.0, %v1748
  %v1750 = vrcp.pop %v1746
  %v1751 = vmul.f32 1.0, %v1750
  %v1752 = vrcp.pop %v1747
  %v1753 = vmul.f32 1.0, %v1752
  %v1754 = vtanh.pop %v1735
  %v1755 = vmul.f32 %v1751, %v1580
  %v1756 = vmul.f32 %v1749, %v1754
  %v1757 = vadd.f32 %v1755, %v1756
  %v1758 = vtanh.pop %v1757
  %v1759 = vmul.f32 %v1753, %v1758
  %s1760 = scalar_lea.vmem %s4, 48
  %1761 = vst [vmem:[%s1760] sm:$0xff] %v1759
  %s1762 = scalar_lea.vmem [#allocation5], 224
  %v1763 = vld [vmem:[%s1762] sm:$0xff]
  %v1764 = vld [vmem:[%s1762 + $0x8] sm:$0xff]
  %v1765 = vld [vmem:[%s1762 + $0x10] sm:$0xff]
  %v1766 = vld [vmem:[%s1762 + $0x18] sm:$0xff]
  %1767 = vmatprep.subr.mxu0 %v460
  %1768 = vmatpush1.msra.mxu0 %v459
  %1769 = vmatprep.subr.mxu0 %v464
  %1770 = vmatpush1.msra.mxu0 %v463
  %1771 = vmatprep.subr.mxu0 %v468
  %1772 = vmatpush1.msra.mxu0 %v467
  %1773 = vmatprep.subr.mxu0 %v472
  %1774 = vmatpush1.msra.mxu0 %v471
  %1775 = vmatprep.subr.mxu0 %v476
  %1776 = vmatpush1.msra.mxu0 %v475
  %1777 = vmatprep.subr.mxu0 %v480
  %1778 = vmatpush1.msra.mxu0 %v479
  %1779 = vmatprep.subr.mxu0 %v484
  %1780 = vmatpush1.msra.mxu0 %v483
  %1781 = vmatprep.subr.mxu0 %v488
  %1782 = vmatpush1.msra.mxu0 %v487
  %1783 = vmatprep.subr.mxu0 %v492
  %1784 = vmatpush1.msra.mxu0 %v491
  %1785 = vmatprep.subr.mxu0 %v496
  %1786 = vmatpush1.msra.mxu0 %v495
  %1787 = vmatprep.subr.mxu0 %v500
  %1788 = vmatpush1.msra.mxu0 %v499
  %1789 = vmatprep.subr.mxu0 %v504
  %1790 = vmatpush1.msra.mxu0 %v503
  %1791 = vmatprep.subr.mxu0 %v508
  %1792 = vmatpush1.msra.mxu0 %v507
  %1793 = vmatprep.subr.mxu0 %v512
  %1794 = vmatpush1.msra.mxu0 %v511
  %1795 = vmatprep.subr.mxu0 %v516
  %1796 = vmatpush1.msra.mxu0 %v515
  %1797 = vmatprep.subr.mxu0 %v520
  %1798 = vmatpush1.msra.mxu0 %v519
  %1799 = vmatprep.subr.mxu0 0.0
  %1800 = vmatpush1.msra.mxu0 0.0
  %1801 = vmatprep.subr.mxu0 0.0
  %1802 = vmatpush1.msra.mxu0 0.0
  %1803 = vmatprep.subr.mxu0 0.0
  %1804 = vmatpush1.msra.mxu0 0.0
  %1805 = vmatprep.subr.mxu0 0.0
  %1806 = vmatpush1.msra.mxu0 0.0
  %1807 = vmatprep.subr.mxu0 0.0
  %1808 = vmatpush1.msra.mxu0 0.0
  %1809 = vmatprep.subr.mxu0 0.0
  %1810 = vmatpush1.msra.mxu0 0.0
  %1811 = vmatprep.subr.mxu0 0.0
  %1812 = vmatpush1.msra.mxu0 0.0
  %1813 = vmatprep.subr.mxu0 0.0
  %1814 = vmatpush1.msra.mxu0 0.0
  %1815 = vmatprep.subr.mxu0 0.0
  %1816 = vmatpush1.msra.mxu0 0.0
  %1817 = vmatprep.subr.mxu0 0.0
  %1818 = vmatpush1.msra.mxu0 0.0
  %1819 = vmatprep.subr.mxu0 0.0
  %1820 = vmatpush1.msra.mxu0 0.0
  %1821 = vmatprep.subr.mxu0 0.0
  %1822 = vmatpush1.msra.mxu0 0.0
  %1823 = vmatprep.subr.mxu0 0.0
  %1824 = vmatpush1.msra.mxu0 0.0
  %1825 = vmatprep.subr.mxu0 0.0
  %1826 = vmatpush1.msra.mxu0 0.0
  %1827 = vmatprep.subr.mxu0 0.0
  %1828 = vmatpush1.msra.mxu0 0.0
  %1829 = vmatprep.subr.mxu0 0.0
  %1830 = vmatpush1.msra.mxu0 0.0
  %1831 = vmatprep.mubr.f32.mxu0 0.0
  %1832 = vmatmul.mubr.f32.gmra.mrb[0].mxu0 %v1759
  %v1833 = vpop.f32.mrb[0].mxu0
  %v1834 = vadd.f32 0.0, %v1833
  %v1835 = vpop.f32.mrb[0].mxu0
  %v1836 = vadd.f32 0.0, %v1835
  %1837 = vdwg.mxu0
  %1838 = vmatprep.subr.mxu0 %v462
  %1839 = vmatpush1.msra.mxu0 %v461
  %1840 = vmatprep.subr.mxu0 %v466
  %1841 = vmatpush1.msra.mxu0 %v465
  %1842 = vmatprep.subr.mxu0 %v470
  %1843 = vmatpush1.msra.mxu0 %v469
  %1844 = vmatprep.subr.mxu0 %v474
  %1845 = vmatpush1.msra.mxu0 %v473
  %1846 = vmatprep.subr.mxu0 %v478
  %1847 = vmatpush1.msra.mxu0 %v477
  %1848 = vmatprep.subr.mxu0 %v482
  %1849 = vmatpush1.msra.mxu0 %v481
  %1850 = vmatprep.subr.mxu0 %v486
  %1851 = vmatpush1.msra.mxu0 %v485
  %1852 = vmatprep.subr.mxu0 %v490
  %1853 = vmatpush1.msra.mxu0 %v489
  %1854 = vmatprep.subr.mxu0 %v494
  %1855 = vmatpush1.msra.mxu0 %v493
  %1856 = vmatprep.subr.mxu0 %v498
  %1857 = vmatpush1.msra.mxu0 %v497
  %1858 = vmatprep.subr.mxu0 %v502
  %1859 = vmatpush1.msra.mxu0 %v501
  %1860 = vmatprep.subr.mxu0 %v506
  %1861 = vmatpush1.msra.mxu0 %v505
  %1862 = vmatprep.subr.mxu0 %v510
  %1863 = vmatpush1.msra.mxu0 %v509
  %1864 = vmatprep.subr.mxu0 %v514
  %1865 = vmatpush1.msra.mxu0 %v513
  %1866 = vmatprep.subr.mxu0 %v518
  %1867 = vmatpush1.msra.mxu0 %v517
  %1868 = vmatprep.subr.mxu0 %v522
  %1869 = vmatpush1.msra.mxu0 %v521
  %1870 = vmatprep.subr.mxu0 0.0
  %1871 = vmatpush1.msra.mxu0 0.0
  %1872 = vmatprep.subr.mxu0 0.0
  %1873 = vmatpush1.msra.mxu0 0.0
  %1874 = vmatprep.subr.mxu0 0.0
  %1875 = vmatpush1.msra.mxu0 0.0
  %1876 = vmatprep.subr.mxu0 0.0
  %1877 = vmatpush1.msra.mxu0 0.0
  %1878 = vmatprep.subr.mxu0 0.0
  %1879 = vmatpush1.msra.mxu0 0.0
  %1880 = vmatprep.subr.mxu0 0.0
  %1881 = vmatpush1.msra.mxu0 0.0
  %1882 = vmatprep.subr.mxu0 0.0
  %1883 = vmatpush1.msra.mxu0 0.0
  %1884 = vmatprep.subr.mxu0 0.0
  %1885 = vmatpush1.msra.mxu0 0.0
  %1886 = vmatprep.subr.mxu0 0.0
  %1887 = vmatpush1.msra.mxu0 0.0
  %1888 = vmatprep.subr.mxu0 0.0
  %1889 = vmatpush1.msra.mxu0 0.0
  %1890 = vmatprep.subr.mxu0 0.0
  %1891 = vmatpush1.msra.mxu0 0.0
  %1892 = vmatprep.subr.mxu0 0.0
  %1893 = vmatpush1.msra.mxu0 0.0
  %1894 = vmatprep.subr.mxu0 0.0
  %1895 = vmatpush1.msra.mxu0 0.0
  %1896 = vmatprep.subr.mxu0 0.0
  %1897 = vmatpush1.msra.mxu0 0.0
  %1898 = vmatprep.subr.mxu0 0.0
  %1899 = vmatpush1.msra.mxu0 0.0
  %1900 = vmatprep.subr.mxu0 0.0
  %1901 = vmatpush1.msra.mxu0 0.0
  %1902 = vmatprep.mubr.f32.mxu0 0.0
  %1903 = vmatmul.mubr.f32.gmra.mrb[0].mxu0 %v1759
  %v1904 = vpop.f32.mrb[0].mxu0
  %v1905 = vadd.f32 0.0, %v1904
  %v1906 = vpop.f32.mrb[0].mxu0
  %v1907 = vadd.f32 0.0, %v1906
  %1908 = vdwg.mxu0
  %v1909 = vadd.f32 %v1763, %v1834
  %v1910 = vadd.f32 %v1764, %v1836
  %v1911 = vadd.f32 %v1765, %v1905
  %v1912 = vadd.f32 %v1766, %v1907
  %v1913 = vxor.u32 %v1909, 2147483648
  %v1914 = vxor.u32 %v1910, 2147483648
  %v1915 = vxor.u32 %v1911, 2147483648
  %v1916 = vmul.f32 %v1913, 1.442695
  %v1917 = vpow.pop %v1916
  %v1918 = vmul.f32 %v1914, 1.442695
  %v1919 = vpow.pop %v1918
  %v1920 = vmul.f32 %v1915, 1.442695
  %v1921 = vpow.pop %v1920
  %v1922 = vadd.f32 %v1917, 1.0
  %v1923 = vadd.f32 %v1919, 1.0
  %v1924 = vadd.f32 %v1921, 1.0
  %v1925 = vrcp.pop %v1922
  %v1926 = vmul.f32 1.0, %v1925
  %v1927 = vrcp.pop %v1923
  %v1928 = vmul.f32 1.0, %v1927
  %v1929 = vrcp.pop %v1924
  %v1930 = vmul.f32 1.0, %v1929
  %v1931 = vtanh.pop %v1912
  %v1932 = vmul.f32 %v1928, %v1757
  %v1933 = vmul.f32 %v1926, %v1931
  %v1934 = vadd.f32 %v1932, %v1933
  %v1935 = vtanh.pop %v1934
  %v1936 = vmul.f32 %v1930, %v1935
  %s1937 = scalar_lea.vmem %s4, 56
  %1938 = vst [vmem:[%s1937] sm:$0xff] %v1936
  %1939 = vst [vmem:[%s5] sm:$0xff] %v1936
  %1940 = vst [vmem:[%s6] sm:$0xff] %v1934
  // Predicated region
  $region56: #{encoder_forward.2} parent=0 // pred_check
    _
  $region57: #{encoder_forward.2} parent=0 // pred_check_branch
    %1942 = sbr.rel (0) target = $region59
  $region58: #{encoder_forward.2} parent=0 // pred_region
    _
  $region59: #{encoder_forward.2} parent=0 // pred_fallthru
    _
  // Predicated region
  $region60: #{encoder_forward.2} parent=0 // pred_check
    _
  $region61: #{encoder_forward.2} parent=0 // pred_check_branch
    %1944 = sbr.rel (0) target = $region63
  $region62: #{encoder_forward.2} parent=0 // pred_region
    _
  $region63: #{encoder_forward.2} parent=0 // pred_fallthru
    _
  // Predicated region
  $region64: #{encoder_forward.2} parent=0 // pred_check
    _
  $region65: #{encoder_forward.2} parent=0 // pred_check_branch
    %1946 = sbr.rel (0) target = $region67
  $region66: #{encoder_forward.2} parent=0 // pred_region
    _
  $region67: #{encoder_forward.2} parent=0 // pred_fallthru
    _
  // Predicated region
  $region68: #{encoder_forward.2} parent=0 // pred_check
    _
  $region69: #{encoder_forward.2} parent=0 // pred_check_branch
    %1948 = sbr.rel (0) target = $region71
  $region70: #{encoder_forward.2} parent=0 // pred_region
    _
  $region71: #{encoder_forward.2} parent=0 // pred_fallthru
    _
  // Predicated region
  $region72: #{encoder_forward.2} parent=0 // pred_check
    _
  $region73: #{encoder_forward.2} parent=0 // pred_check_branch
    %1950 = sbr.rel (0) target = $region75
  $region74: #{encoder_forward.2} parent=0 // pred_region
    _
  $region75: #{encoder_forward.2} parent=0 // pred_fallthru
    _
  // Predicated region
  $region76: #{encoder_forward.2} parent=0 // pred_check
    _
  $region77: #{encoder_forward.2} parent=0 // pred_check_branch
    %1952 = sbr.rel (0) target = $region79
  $region78: #{encoder_forward.2} parent=0 // pred_region
    _
  $region79: #{encoder_forward.2} parent=0 // pred_fallthru
    _
  %1953 = vsyncmov [#allocation6]
  %s1954 = vpop.sfrf %1953
  %p1955 = scmp.eq.s32.totalorder %s1954, 0
  %p1956 = pneg %p1955
  %1958 = shalt.err (%p1956)
  %s1959 = scalar_lea.sflag [#allocation6], 1
  %1960 = vsyncmov %s1959
  %s1961 = vpop.sfrf %1960
  %p1962 = scmp.eq.s32.totalorder %s1961, 0
  %p1963 = pneg %p1962
  %1965 = shalt.err (%p1963)
  %s1966 = scalar_lea.sflag [#allocation6], 2
  %1967 = vsyncmov %s1966
  %s1968 = vpop.sfrf %1967
  %p1969 = scmp.eq.s32.totalorder %s1968, 0
  %p1970 = pneg %p1969
  %1972 = shalt.err (%p1970)

// kernel: encoder_forward.3
$region0: #{encoder_forward.3}
  #allocation0 [shape = 'u32[]', space=smem, size = 0x4, offset = 0x4, fixed_abs, tag = 'smem constant byte address 0x4 - core index']
  #allocation1 [shape = 'u32[144,128]{1,0:T(1,128)}', space=vmem, size = 0x12000, scoped, tag = 'internal scratch']
  #allocation2 [shape = 'f32[128,512]{1,0:T(8,128)}', space=vmem, size = 0x40000, scoped, tag = 'scratch operand']
  #allocation3 [shape = 'f32[128,512]{1,0:T(8,128)}', space=vmem, size = 0x40000, scoped, tag = 'scratch operand']
  #allocation4 [shape = 'f32[1,512]{1,0:T(1,128)}', space=vmem, size = 0x800, scoped, tag = 'scratch operand']
  #allocation5 [shape = 'f32[8,8,512]{2,1,0:T(8,128)}', space=vmem, size = 0x20000, scoped, tag = 'scratch operand']
  #allocation6 [shape = 's32[3]{0}', space=sflag, size = 0xc, scoped, tag = 'scratch operand']
  #allocation9 [shape = 's32[]', space=sflag, size = 0x4, offset = 0, fixed_abs, tag = 'sflag constant byte address 0x0 - dummy sync flag']
  #allocation10 [shape = 's32[]', space=sflag, size = 0x4, offset = 0, fixed_abs, tag = 'sflag constant byte address 0x0 - dummy sync flag']
  #allocation11 [shape = 's32[]', space=sflag, size = 0x4, offset = 0, fixed_abs, tag = 'sflag constant byte address 0x0 - dummy sync flag']
  %s0 = inlined_call_operand.vmem [shape: f32[8,8,128], index: 0, kind: input, shape index: {}]
  %s1 = inlined_call_operand.vmem [shape: f32[128,512], index: 1, kind: input, shape index: {}]
  %s2 = inlined_call_operand.vmem [shape: f32[128,512], index: 2, kind: input, shape index: {}]
  %s3 = inlined_call_operand.vmem [shape: f32[1,512], index: 3, kind: input, shape index: {}]
  %s4 = inlined_call_operand.hbm [shape: f32[8,8,128], index: 4, kind: output, shape index: {0}]
  %s5 = inlined_call_operand.vmem [shape: f32[8,128], index: 5, kind: output, shape index: {1}]
  %s6 = inlined_call_operand.vmem [shape: f32[8,128], index: 6, kind: output, shape index: {2}]
  %7 = xla_tuple %s4, %s5, %s6
  %s8 = sld [smem:[#allocation0]]
  $region140: #{encoder_forward.3} parent=0
    _
  %s10 = ssub.s32 1, %s8
  %s11 = scalar_select 0, %s10, %s8
  $region1: #{encoder_forward.3} parent=0
    #allocation7 [shape = 'u8[32768]{0}', space=vmem, size = 0x8000, scoped, tag = 'output window, operand 0, single buffered']
    #allocation8 [shape = 's32[1]{0}', space=sflag, size = 0x4, scoped, tag = 'scoped memory for encoder_forward.3']
    %12 = vsyncpa [#allocation8], 0
    // Predicated region
    $region2: #{encoder_forward.3} parent=1 // pred_check
      _
    $region3: #{encoder_forward.3} parent=1 // pred_check_branch
      %14 = sbr.rel (0) target = $region5
    $region4: #{encoder_forward.3} parent=1 // pred_region
      _
    $region5: #{encoder_forward.3} parent=1 // pred_fallthru
      _
    %p15 = scmp.eq.s32.totalorder 0, 0
    // Predicated region
    $region6: #{encoder_forward.3} parent=1 // pred_check
      %p16 = pneg %p15
    $region7: #{encoder_forward.3} parent=1 // pred_check_branch
      %18 = sbr.rel (%p16) target = $region9
    $region8: #{encoder_forward.3} parent=1 // pred_region
      %19 = vst [vmem:[%s5] sm:$0xff] 0.0
      %20 = vst [vmem:[%s6] sm:$0xff] 0.0
      %p22 = scmp.lt.u32.totalorder 512, 8
      %p23 = pneg %p22
      // Predicated region
      $region10: #{encoder_forward.3} parent=8 // pred_check
        _
      $region11: #{encoder_forward.3} parent=8 // pred_check_branch
        %25 = sbr.rel (%p22) target = $region13
      $region12: #{encoder_forward.3} parent=8 // pred_region
        %s40 = sand.u32 512, 7
        %p41 = scmp.eq.s32.totalorder %s40, 0
        // Predicated region
        $region25: #{encoder_forward.3} parent=12 // pred_check
          %p42 = pneg %p41
        $region26: #{encoder_forward.3} parent=12 // pred_check_branch
          %44 = sbr.rel (%p42) target = $region28
        $region27: #{encoder_forward.3} parent=12 // pred_region
          loop: start=0, step=1, limit=1
          $region29: #{encoder_forward.3} parent=27 // loop_pre_header
            _
          $region30: #{encoder_forward.3} parent=27 // loop_header
            %s46 = sphi 0, %s50
            %p47 = scmp.ge.s32.totalorder %s46, 1
            %s51 = sphi %s1, %s1
            %s52 = sphi [#allocation2], [#allocation2]
          $region31: #{encoder_forward.3} parent=27 // loop_header_branch
            %49 = sbr.rel (%p47) target = $region35
          $region32: #{encoder_forward.3} parent=27 // loop_body
            %v53 = vld [vmem:[%s51] sm:$0xff]
            %54 = vst [vmem:[%s52] sm:$0xff] %v53
            %v55 = vld [vmem:[%s51 + $0x8] sm:$0xff]
            %56 = vst [vmem:[%s52 + $0x8] sm:$0xff] %v55
            %v57 = vld [vmem:[%s51 + $0x10] sm:$0xff]
            %58 = vst [vmem:[%s52 + $0x10] sm:$0xff] %v57
            %v59 = vld [vmem:[%s51 + $0x18] sm:$0xff]
            %60 = vst [vmem:[%s52 + $0x18] sm:$0xff] %v59
            %v61 = vld [vmem:[%s51 + $0x20] sm:$0xff]
            %62 = vst [vmem:[%s52 + $0x20] sm:$0xff] %v61
            %v63 = vld [vmem:[%s51 + $0x28] sm:$0xff]
            %64 = vst [vmem:[%s52 + $0x28] sm:$0xff] %v63
            %v65 = vld [vmem:[%s51 + $0x30] sm:$0xff]
            %66 = vst [vmem:[%s52 + $0x30] sm:$0xff] %v65
            %v67 = vld [vmem:[%s51 + $0x38] sm:$0xff]
            %68 = vst [vmem:[%s52 + $0x38] sm:$0xff] %v67
            %v69 = vld [vmem:[%s51 + $0x40] sm:$0xff]
            %70 = vst [vmem:[%s52 + $0x40] sm:$0xff] %v69
            %v71 = vld [vmem:[%s51 + $0x48] sm:$0xff]
            %72 = vst [vmem:[%s52 + $0x48] sm:$0xff] %v71
            %v73 = vld [vmem:[%s51 + $0x50] sm:$0xff]
            %74 = vst [vmem:[%s52 + $0x50] sm:$0xff] %v73
            %v75 = vld [vmem:[%s51 + $0x58] sm:$0xff]
            %76 = vst [vmem:[%s52 + $0x58] sm:$0xff] %v75
            %v77 = vld [vmem:[%s51 + $0x60] sm:$0xff]
            %78 = vst [vmem:[%s52 + $0x60] sm:$0xff] %v77
            %v79 = vld [vmem:[%s51 + $0x68] sm:$0xff]
            %80 = vst [vmem:[%s52 + $0x68] sm:$0xff] %v79
            %v81 = vld [vmem:[%s51 + $0x70] sm:$0xff]
            %82 = vst [vmem:[%s52 + $0x70] sm:$0xff] %v81
            %v83 = vld [vmem:[%s51 + $0x78] sm:$0xff]
            %84 = vst [vmem:[%s52 + $0x78] sm:$0xff] %v83
            %v85 = vld [vmem:[%s51 + $0x80] sm:$0xff]
            %86 = vst [vmem:[%s52 + $0x80] sm:$0xff] %v85
            %v87 = vld [vmem:[%s51 + $0x88] sm:$0xff]
            %88 = vst [vmem:[%s52 + $0x88] sm:$0xff] %v87
            %v89 = vld [vmem:[%s51 + $0x90] sm:$0xff]
            %90 = vst [vmem:[%s52 + $0x90] sm:$0xff] %v89
            %v91 = vld [vmem:[%s51 + $0x98] sm:$0xff]
            %92 = vst [vmem:[%s52 + $0x98] sm:$0xff] %v91
            %v93 = vld [vmem:[%s51 + $0xa0] sm:$0xff]
            %94 = vst [vmem:[%s52 + $0xa0] sm:$0xff] %v93
            %v95 = vld [vmem:[%s51 + $0xa8] sm:$0xff]
            %96 = vst [vmem:[%s52 + $0xa8] sm:$0xff] %v95
            %v97 = vld [vmem:[%s51 + $0xb0] sm:$0xff]
            %98 = vst [vmem:[%s52 + $0xb0] sm:$0xff] %v97
            %v99 = vld [vmem:[%s51 + $0xb8] sm:$0xff]
            %100 = vst [vmem:[%s52 + $0xb8] sm:$0xff] %v99
            %v101 = vld [vmem:[%s51 + $0xc0] sm:$0xff]
            %102 = vst [vmem:[%s52 + $0xc0] sm:$0xff] %v101
            %v103 = vld [vmem:[%s51 + $0xc8] sm:$0xff]
            %104 = vst [vmem:[%s52 + $0xc8] sm:$0xff] %v103
            %v105 = vld [vmem:[%s51 + $0xd0] sm:$0xff]
            %106 = vst [vmem:[%s52 + $0xd0] sm:$0xff] %v105
            %v107 = vld [vmem:[%s51 + $0xd8] sm:$0xff]
            %108 = vst [vmem:[%s52 + $0xd8] sm:$0xff] %v107
            %v109 = vld [vmem:[%s51 + $0xe0] sm:$0xff]
            %110 = vst [vmem:[%s52 + $0xe0] sm:$0xff] %v109
            %v111 = vld [vmem:[%s51 + $0xe8] sm:$0xff]
            %112 = vst [vmem:[%s52 + $0xe8] sm:$0xff] %v111
            %v113 = vld [vmem:[%s51 + $0xf0] sm:$0xff]
            %114 = vst [vmem:[%s52 + $0xf0] sm:$0xff] %v113
            %v115 = vld [vmem:[%s51 + $0xf8] sm:$0xff]
            %116 = vst [vmem:[%s52 + $0xf8] sm:$0xff] %v115
            %v117 = vld [vmem:[%s51 + $0x100] sm:$0xff]
            %118 = vst [vmem:[%s52 + $0x100] sm:$0xff] %v117
            %v119 = vld [vmem:[%s51 + $0x108] sm:$0xff]
            %120 = vst [vmem:[%s52 + $0x108] sm:$0xff] %v119
            %v121 = vld [vmem:[%s51 + $0x110] sm:$0xff]
            %122 = vst [vmem:[%s52 + $0x110] sm:$0xff] %v121
            %v123 = vld [vmem:[%s51 + $0x118] sm:$0xff]
            %124 = vst [vmem:[%s52 + $0x118] sm:$0xff] %v123
            %v125 = vld [vmem:[%s51 + $0x120] sm:$0xff]
            %126 = vst [vmem:[%s52 + $0x120] sm:$0xff] %v125
            %v127 = vld [vmem:[%s51 + $0x128] sm:$0xff]
            %128 = vst [vmem:[%s52 + $0x128] sm:$0xff] %v127
            %v129 = vld [vmem:[%s51 + $0x130] sm:$0xff]
            %130 = vst [vmem:[%s52 + $0x130] sm:$0xff] %v129
            %v131 = vld [vmem:[%s51 + $0x138] sm:$0xff]
            %132 = vst [vmem:[%s52 + $0x138] sm:$0xff] %v131
            %v133 = vld [vmem:[%s51 + $0x140] sm:$0xff]
            %134 = vst [vmem:[%s52 + $0x140] sm:$0xff] %v133
            %v135 = vld [vmem:[%s51 + $0x148] sm:$0xff]
            %136 = vst [vmem:[%s52 + $0x148] sm:$0xff] %v135
            %v137 = vld [vmem:[%s51 + $0x150] sm:$0xff]
            %138 = vst [vmem:[%s52 + $0x150] sm:$0xff] %v137
            %v139 = vld [vmem:[%s51 + $0x158] sm:$0xff]
            %140 = vst [vmem:[%s52 + $0x158] sm:$0xff] %v139
            %v141 = vld [vmem:[%s51 + $0x160] sm:$0xff]
            %142 = vst [vmem:[%s52 + $0x160] sm:$0xff] %v141
            %v143 = vld [vmem:[%s51 + $0x168] sm:$0xff]
            %144 = vst [vmem:[%s52 + $0x168] sm:$0xff] %v143
            %v145 = vld [vmem:[%s51 + $0x170] sm:$0xff]
            %146 = vst [vmem:[%s52 + $0x170] sm:$0xff] %v145
            %v147 = vld [vmem:[%s51 + $0x178] sm:$0xff]
            %148 = vst [vmem:[%s52 + $0x178] sm:$0xff] %v147
            %v149 = vld [vmem:[%s51 + $0x180] sm:$0xff]
            %150 = vst [vmem:[%s52 + $0x180] sm:$0xff] %v149
            %v151 = vld [vmem:[%s51 + $0x188] sm:$0xff]
            %152 = vst [vmem:[%s52 + $0x188] sm:$0xff] %v151
            %v153 = vld [vmem:[%s51 + $0x190] sm:$0xff]
            %154 = vst [vmem:[%s52 + $0x190] sm:$0xff] %v153
            %v155 = vld [vmem:[%s51 + $0x198] sm:$0xff]
            %156 = vst [vmem:[%s52 + $0x198] sm:$0xff] %v155
            %v157 = vld [vmem:[%s51 + $0x1a0] sm:$0xff]
            %158 = vst [vmem:[%s52 + $0x1a0] sm:$0xff] %v157
            %v159 = vld [vmem:[%s51 + $0x1a8] sm:$0xff]
            %160 = vst [vmem:[%s52 + $0x1a8] sm:$0xff] %v159
            %v161 = vld [vmem:[%s51 + $0x1b0] sm:$0xff]
            %162 = vst [vmem:[%s52 + $0x1b0] sm:$0xff] %v161
            %v163 = vld [vmem:[%s51 + $0x1b8] sm:$0xff]
            %164 = vst [vmem:[%s52 + $0x1b8] sm:$0xff] %v163
            %v165 = vld [vmem:[%s51 + $0x1c0] sm:$0xff]
            %166 = vst [vmem:[%s52 + $0x1c0] sm:$0xff] %v165
            %v167 = vld [vmem:[%s51 + $0x1c8] sm:$0xff]
            %168 = vst [vmem:[%s52 + $0x1c8] sm:$0xff] %v167
            %v169 = vld [vmem:[%s51 + $0x1d0] sm:$0xff]
            %170 = vst [vmem:[%s52 + $0x1d0] sm:$0xff] %v169
            %v171 = vld [vmem:[%s51 + $0x1d8] sm:$0xff]
            %172 = vst [vmem:[%s52 + $0x1d8] sm:$0xff] %v171
            %v173 = vld [vmem:[%s51 + $0x1e0] sm:$0xff]
            %174 = vst [vmem:[%s52 + $0x1e0] sm:$0xff] %v173
            %v175 = vld [vmem:[%s51 + $0x1e8] sm:$0xff]
            %176 = vst [vmem:[%s52 + $0x1e8] sm:$0xff] %v175
            %v177 = vld [vmem:[%s51 + $0x1f0] sm:$0xff]
            %178 = vst [vmem:[%s52 + $0x1f0] sm:$0xff] %v177
            %v179 = vld [vmem:[%s51 + $0x1f8] sm:$0xff]
            %180 = vst [vmem:[%s52 + $0x1f8] sm:$0xff] %v179
          $region33: #{encoder_forward.3} parent=27 // loop_footer
            %s50 = sadd.s32 1, %s46
          $region34: #{encoder_forward.3} parent=27 // loop_footer_branch
            %45 = sbr.rel target = $region30
          $region35: #{encoder_forward.3} parent=27 // loop_exit
            _
        $region28: #{encoder_forward.3} parent=12 // pred_fallthru
          _
        %p181 = pneg %p41
        // Predicated region
        $region36: #{encoder_forward.3} parent=12 // pred_check
          _
        $region37: #{encoder_forward.3} parent=12 // pred_check_branch
          %183 = sbr.rel (%p41) target = $region39
        $region38: #{encoder_forward.3} parent=12 // pred_region
          %s184 = sand.u32 512, 7
        $region39: #{encoder_forward.3} parent=12 // pred_fallthru
          _
      $region13: #{encoder_forward.3} parent=8 // pred_fallthru
        _
      // Predicated region
      $region14: #{encoder_forward.3} parent=8 // pred_check
        %p26 = pneg %p22
      $region15: #{encoder_forward.3} parent=8 // pred_check_branch
        %28 = sbr.rel (%p26) target = $region17
      $region16: #{encoder_forward.3} parent=8 // pred_region
        %s29 = sshllo.u32 0, 512
        loop: start=0, step=1, limit=1
        $region18: #{encoder_forward.3} parent=16 // loop_pre_header
          _
        $region19: #{encoder_forward.3} parent=16 // loop_header
          %s31 = sphi 0, %s35
          %p32 = scmp.ge.s32.totalorder %s31, 1
          %s36 = sphi %s1, %s1
          %s37 = sphi [#allocation2], [#allocation2]
        $region20: #{encoder_forward.3} parent=16 // loop_header_branch
          %34 = sbr.rel (%p32) target = $region24
        $region21: #{encoder_forward.3} parent=16 // loop_body
          %v38 = vld [vmem:[%s36] sm:%s29]
          %39 = vst [vmem:[%s37] sm:%s29] %v38
        $region22: #{encoder_forward.3} parent=16 // loop_footer
          %s35 = sadd.s32 1, %s31
        $region23: #{encoder_forward.3} parent=16 // loop_footer_branch
          %30 = sbr.rel target = $region19
        $region24: #{encoder_forward.3} parent=16 // loop_exit
          _
      $region17: #{encoder_forward.3} parent=8 // pred_fallthru
        _
      // Predicated region
      $region40: #{encoder_forward.3} parent=8 // pred_check
        _
      $region41: #{encoder_forward.3} parent=8 // pred_check_branch
        %187 = sbr.rel (0) target = $region43
      $region42: #{encoder_forward.3} parent=8 // pred_region
        %188 = vsyncadd [#allocation6], 8192
      $region43: #{encoder_forward.3} parent=8 // pred_fallthru
        _
      %s189 = scalar_lea.sflag [#allocation6], 1
      %p191 = scmp.lt.u32.totalorder 512, 8
      %p192 = pneg %p191
      // Predicated region
      $region44: #{encoder_forward.3} parent=8 // pred_check
        _
      $region45: #{encoder_forward.3} parent=8 // pred_check_branch
        %194 = sbr.rel (%p191) target = $region47
      $region46: #{encoder_forward.3} parent=8 // pred_region
        %s209 = sand.u32 512, 7
        %p210 = scmp.eq.s32.totalorder %s209, 0
        // Predicated region
        $region59: #{encoder_forward.3} parent=46 // pred_check
          %p211 = pneg %p210
        $region60: #{encoder_forward.3} parent=46 // pred_check_branch
          %213 = sbr.rel (%p211) target = $region62
        $region61: #{encoder_forward.3} parent=46 // pred_region
          loop: start=0, step=1, limit=1
          $region63: #{encoder_forward.3} parent=61 // loop_pre_header
            _
          $region64: #{encoder_forward.3} parent=61 // loop_header
            %s215 = sphi 0, %s219
            %p216 = scmp.ge.s32.totalorder %s215, 1
            %s220 = sphi %s2, %s2
            %s221 = sphi [#allocation3], [#allocation3]
          $region65: #{encoder_forward.3} parent=61 // loop_header_branch
            %218 = sbr.rel (%p216) target = $region69
          $region66: #{encoder_forward.3} parent=61 // loop_body
            %v222 = vld [vmem:[%s220] sm:$0xff]
            %223 = vst [vmem:[%s221] sm:$0xff] %v222
            %v224 = vld [vmem:[%s220 + $0x8] sm:$0xff]
            %225 = vst [vmem:[%s221 + $0x8] sm:$0xff] %v224
            %v226 = vld [vmem:[%s220 + $0x10] sm:$0xff]
            %227 = vst [vmem:[%s221 + $0x10] sm:$0xff] %v226
            %v228 = vld [vmem:[%s220 + $0x18] sm:$0xff]
            %229 = vst [vmem:[%s221 + $0x18] sm:$0xff] %v228
            %v230 = vld [vmem:[%s220 + $0x20] sm:$0xff]
            %231 = vst [vmem:[%s221 + $0x20] sm:$0xff] %v230
            %v232 = vld [vmem:[%s220 + $0x28] sm:$0xff]
            %233 = vst [vmem:[%s221 + $0x28] sm:$0xff] %v232
            %v234 = vld [vmem:[%s220 + $0x30] sm:$0xff]
            %235 = vst [vmem:[%s221 + $0x30] sm:$0xff] %v234
            %v236 = vld [vmem:[%s220 + $0x38] sm:$0xff]
            %237 = vst [vmem:[%s221 + $0x38] sm:$0xff] %v236
            %v238 = vld [vmem:[%s220 + $0x40] sm:$0xff]
            %239 = vst [vmem:[%s221 + $0x40] sm:$0xff] %v238
            %v240 = vld [vmem:[%s220 + $0x48] sm:$0xff]
            %241 = vst [vmem:[%s221 + $0x48] sm:$0xff] %v240
            %v242 = vld [vmem:[%s220 + $0x50] sm:$0xff]
            %243 = vst [vmem:[%s221 + $0x50] sm:$0xff] %v242
            %v244 = vld [vmem:[%s220 + $0x58] sm:$0xff]
            %245 = vst [vmem:[%s221 + $0x58] sm:$0xff] %v244
            %v246 = vld [vmem:[%s220 + $0x60] sm:$0xff]
            %247 = vst [vmem:[%s221 + $0x60] sm:$0xff] %v246
            %v248 = vld [vmem:[%s220 + $0x68] sm:$0xff]
            %249 = vst [vmem:[%s221 + $0x68] sm:$0xff] %v248
            %v250 = vld [vmem:[%s220 + $0x70] sm:$0xff]
            %251 = vst [vmem:[%s221 + $0x70] sm:$0xff] %v250
            %v252 = vld [vmem:[%s220 + $0x78] sm:$0xff]
            %253 = vst [vmem:[%s221 + $0x78] sm:$0xff] %v252
            %v254 = vld [vmem:[%s220 + $0x80] sm:$0xff]
            %255 = vst [vmem:[%s221 + $0x80] sm:$0xff] %v254
            %v256 = vld [vmem:[%s220 + $0x88] sm:$0xff]
            %257 = vst [vmem:[%s221 + $0x88] sm:$0xff] %v256
            %v258 = vld [vmem:[%s220 + $0x90] sm:$0xff]
            %259 = vst [vmem:[%s221 + $0x90] sm:$0xff] %v258
            %v260 = vld [vmem:[%s220 + $0x98] sm:$0xff]
            %261 = vst [vmem:[%s221 + $0x98] sm:$0xff] %v260
            %v262 = vld [vmem:[%s220 + $0xa0] sm:$0xff]
            %263 = vst [vmem:[%s221 + $0xa0] sm:$0xff] %v262
            %v264 = vld [vmem:[%s220 + $0xa8] sm:$0xff]
            %265 = vst [vmem:[%s221 + $0xa8] sm:$0xff] %v264
            %v266 = vld [vmem:[%s220 + $0xb0] sm:$0xff]
            %267 = vst [vmem:[%s221 + $0xb0] sm:$0xff] %v266
            %v268 = vld [vmem:[%s220 + $0xb8] sm:$0xff]
            %269 = vst [vmem:[%s221 + $0xb8] sm:$0xff] %v268
            %v270 = vld [vmem:[%s220 + $0xc0] sm:$0xff]
            %271 = vst [vmem:[%s221 + $0xc0] sm:$0xff] %v270
            %v272 = vld [vmem:[%s220 + $0xc8] sm:$0xff]
            %273 = vst [vmem:[%s221 + $0xc8] sm:$0xff] %v272
            %v274 = vld [vmem:[%s220 + $0xd0] sm:$0xff]
            %275 = vst [vmem:[%s221 + $0xd0] sm:$0xff] %v274
            %v276 = vld [vmem:[%s220 + $0xd8] sm:$0xff]
            %277 = vst [vmem:[%s221 + $0xd8] sm:$0xff] %v276
            %v278 = vld [vmem:[%s220 + $0xe0] sm:$0xff]
            %279 = vst [vmem:[%s221 + $0xe0] sm:$0xff] %v278
            %v280 = vld [vmem:[%s220 + $0xe8] sm:$0xff]
            %281 = vst [vmem:[%s221 + $0xe8] sm:$0xff] %v280
            %v282 = vld [vmem:[%s220 + $0xf0] sm:$0xff]
            %283 = vst [vmem:[%s221 + $0xf0] sm:$0xff] %v282
            %v284 = vld [vmem:[%s220 + $0xf8] sm:$0xff]
            %285 = vst [vmem:[%s221 + $0xf8] sm:$0xff] %v284
            %v286 = vld [vmem:[%s220 + $0x100] sm:$0xff]
            %287 = vst [vmem:[%s221 + $0x100] sm:$0xff] %v286
            %v288 = vld [vmem:[%s220 + $0x108] sm:$0xff]
            %289 = vst [vmem:[%s221 + $0x108] sm:$0xff] %v288
            %v290 = vld [vmem:[%s220 + $0x110] sm:$0xff]
            %291 = vst [vmem:[%s221 + $0x110] sm:$0xff] %v290
            %v292 = vld [vmem:[%s220 + $0x118] sm:$0xff]
            %293 = vst [vmem:[%s221 + $0x118] sm:$0xff] %v292
            %v294 = vld [vmem:[%s220 + $0x120] sm:$0xff]
            %295 = vst [vmem:[%s221 + $0x120] sm:$0xff] %v294
            %v296 = vld [vmem:[%s220 + $0x128] sm:$0xff]
            %297 = vst [vmem:[%s221 + $0x128] sm:$0xff] %v296
            %v298 = vld [vmem:[%s220 + $0x130] sm:$0xff]
            %299 = vst [vmem:[%s221 + $0x130] sm:$0xff] %v298
            %v300 = vld [vmem:[%s220 + $0x138] sm:$0xff]
            %301 = vst [vmem:[%s221 + $0x138] sm:$0xff] %v300
            %v302 = vld [vmem:[%s220 + $0x140] sm:$0xff]
            %303 = vst [vmem:[%s221 + $0x140] sm:$0xff] %v302
            %v304 = vld [vmem:[%s220 + $0x148] sm:$0xff]
            %305 = vst [vmem:[%s221 + $0x148] sm:$0xff] %v304
            %v306 = vld [vmem:[%s220 + $0x150] sm:$0xff]
            %307 = vst [vmem:[%s221 + $0x150] sm:$0xff] %v306
            %v308 = vld [vmem:[%s220 + $0x158] sm:$0xff]
            %309 = vst [vmem:[%s221 + $0x158] sm:$0xff] %v308
            %v310 = vld [vmem:[%s220 + $0x160] sm:$0xff]
            %311 = vst [vmem:[%s221 + $0x160] sm:$0xff] %v310
            %v312 = vld [vmem:[%s220 + $0x168] sm:$0xff]
            %313 = vst [vmem:[%s221 + $0x168] sm:$0xff] %v312
            %v314 = vld [vmem:[%s220 + $0x170] sm:$0xff]
            %315 = vst [vmem:[%s221 + $0x170] sm:$0xff] %v314
            %v316 = vld [vmem:[%s220 + $0x178] sm:$0xff]
            %317 = vst [vmem:[%s221 + $0x178] sm:$0xff] %v316
            %v318 = vld [vmem:[%s220 + $0x180] sm:$0xff]
            %319 = vst [vmem:[%s221 + $0x180] sm:$0xff] %v318
            %v320 = vld [vmem:[%s220 + $0x188] sm:$0xff]
            %321 = vst [vmem:[%s221 + $0x188] sm:$0xff] %v320
            %v322 = vld [vmem:[%s220 + $0x190] sm:$0xff]
            %323 = vst [vmem:[%s221 + $0x190] sm:$0xff] %v322
            %v324 = vld [vmem:[%s220 + $0x198] sm:$0xff]
            %325 = vst [vmem:[%s221 + $0x198] sm:$0xff] %v324
            %v326 = vld [vmem:[%s220 + $0x1a0] sm:$0xff]
            %327 = vst [vmem:[%s221 + $0x1a0] sm:$0xff] %v326
            %v328 = vld [vmem:[%s220 + $0x1a8] sm:$0xff]
            %329 = vst [vmem:[%s221 + $0x1a8] sm:$0xff] %v328
            %v330 = vld [vmem:[%s220 + $0x1b0] sm:$0xff]
            %331 = vst [vmem:[%s221 + $0x1b0] sm:$0xff] %v330
            %v332 = vld [vmem:[%s220 + $0x1b8] sm:$0xff]
            %333 = vst [vmem:[%s221 + $0x1b8] sm:$0xff] %v332
            %v334 = vld [vmem:[%s220 + $0x1c0] sm:$0xff]
            %335 = vst [vmem:[%s221 + $0x1c0] sm:$0xff] %v334
            %v336 = vld [vmem:[%s220 + $0x1c8] sm:$0xff]
            %337 = vst [vmem:[%s221 + $0x1c8] sm:$0xff] %v336
            %v338 = vld [vmem:[%s220 + $0x1d0] sm:$0xff]
            %339 = vst [vmem:[%s221 + $0x1d0] sm:$0xff] %v338
            %v340 = vld [vmem:[%s220 + $0x1d8] sm:$0xff]
            %341 = vst [vmem:[%s221 + $0x1d8] sm:$0xff] %v340
            %v342 = vld [vmem:[%s220 + $0x1e0] sm:$0xff]
            %343 = vst [vmem:[%s221 + $0x1e0] sm:$0xff] %v342
            %v344 = vld [vmem:[%s220 + $0x1e8] sm:$0xff]
            %345 = vst [vmem:[%s221 + $0x1e8] sm:$0xff] %v344
            %v346 = vld [vmem:[%s220 + $0x1f0] sm:$0xff]
            %347 = vst [vmem:[%s221 + $0x1f0] sm:$0xff] %v346
            %v348 = vld [vmem:[%s220 + $0x1f8] sm:$0xff]
            %349 = vst [vmem:[%s221 + $0x1f8] sm:$0xff] %v348
          $region67: #{encoder_forward.3} parent=61 // loop_footer
            %s219 = sadd.s32 1, %s215
          $region68: #{encoder_forward.3} parent=61 // loop_footer_branch
            %214 = sbr.rel target = $region64
          $region69: #{encoder_forward.3} parent=61 // loop_exit
            _
        $region62: #{encoder_forward.3} parent=46 // pred_fallthru
          _
        %p350 = pneg %p210
        // Predicated region
        $region70: #{encoder_forward.3} parent=46 // pred_check
          _
        $region71: #{encoder_forward.3} parent=46 // pred_check_branch
          %352 = sbr.rel (%p210) target = $region73
        $region72: #{encoder_forward.3} parent=46 // pred_region
          %s353 = sand.u32 512, 7
        $region73: #{encoder_forward.3} parent=46 // pred_fallthru
          _
      $region47: #{encoder_forward.3} parent=8 // pred_fallthru
        _
      // Predicated region
      $region48: #{encoder_forward.3} parent=8 // pred_check
        %p195 = pneg %p191
      $region49: #{encoder_forward.3} parent=8 // pred_check_branch
        %197 = sbr.rel (%p195) target = $region51
      $region50: #{encoder_forward.3} parent=8 // pred_region
        %s198 = sshllo.u32 0, 512
        loop: start=0, step=1, limit=1
        $region52: #{encoder_forward.3} parent=50 // loop_pre_header
          _
        $region53: #{encoder_forward.3} parent=50 // loop_header
          %s200 = sphi 0, %s204
          %p201 = scmp.ge.s32.totalorder %s200, 1
          %s205 = sphi %s2, %s2
          %s206 = sphi [#allocation3], [#allocation3]
        $region54: #{encoder_forward.3} parent=50 // loop_header_branch
          %203 = sbr.rel (%p201) target = $region58
        $region55: #{encoder_forward.3} parent=50 // loop_body
          %v207 = vld [vmem:[%s205] sm:%s198]
          %208 = vst [vmem:[%s206] sm:%s198] %v207
        $region56: #{encoder_forward.3} parent=50 // loop_footer
          %s204 = sadd.s32 1, %s200
        $region57: #{encoder_forward.3} parent=50 // loop_footer_branch
          %199 = sbr.rel target = $region53
        $region58: #{encoder_forward.3} parent=50 // loop_exit
          _
      $region51: #{encoder_forward.3} parent=8 // pred_fallthru
        _
      // Predicated region
      $region74: #{encoder_forward.3} parent=8 // pred_check
        _
      $region75: #{encoder_forward.3} parent=8 // pred_check_branch
        %356 = sbr.rel (0) target = $region77
      $region76: #{encoder_forward.3} parent=8 // pred_region
        %357 = vsyncadd %s189, 8192
      $region77: #{encoder_forward.3} parent=8 // pred_fallthru
        _
      %s358 = scalar_lea.sflag [#allocation6], 2
      %p360 = scmp.lt.u32.totalorder 4, 8
      %p361 = pneg %p360
      // Predicated region
      $region78: #{encoder_forward.3} parent=8 // pred_check
        _
      $region79: #{encoder_forward.3} parent=8 // pred_check_branch
        %363 = sbr.rel (%p360) target = $region81
      $region80: #{encoder_forward.3} parent=8 // pred_region
        %s378 = sand.u32 4, 7
        %p379 = scmp.eq.s32.totalorder %s378, 0
        %p380 = pneg %p379
        // Predicated region
        $region93: #{encoder_forward.3} parent=80 // pred_check
          _
        $region94: #{encoder_forward.3} parent=80 // pred_check_branch
          %382 = sbr.rel (%p379) target = $region96
        $region95: #{encoder_forward.3} parent=80 // pred_region
          %s383 = sand.u32 4, 7
          %s384 = ssub.s32 4, %s383
          %s385 = scalar_lea.vmem %s3, %s384
          %s386 = ssub.s32 4, %s383
          %s387 = scalar_lea.vmem [#allocation4], %s386
          %s388 = sshllo.u32 0, %s383
          loop: start=0, step=1, limit=1
          $region97: #{encoder_forward.3} parent=95 // loop_pre_header
            _
          $region98: #{encoder_forward.3} parent=95 // loop_header
            %s390 = sphi 0, %s394
            %p391 = scmp.ge.s32.totalorder %s390, 1
            %s395 = sphi %s385, %s385
            %s396 = sphi %s387, %s387
          $region99: #{encoder_forward.3} parent=95 // loop_header_branch
            %393 = sbr.rel (%p391) target = $region103
          $region100: #{encoder_forward.3} parent=95 // loop_body
            %v397 = vld [vmem:[%s395] sm:%s388]
            %398 = vst [vmem:[%s396] sm:%s388] %v397
          $region101: #{encoder_forward.3} parent=95 // loop_footer
            %s394 = sadd.s32 1, %s390
          $region102: #{encoder_forward.3} parent=95 // loop_footer_branch
            %389 = sbr.rel target = $region98
          $region103: #{encoder_forward.3} parent=95 // loop_exit
            _
        $region96: #{encoder_forward.3} parent=80 // pred_fallthru
          _
      $region81: #{encoder_forward.3} parent=8 // pred_fallthru
        _
      // Predicated region
      $region82: #{encoder_forward.3} parent=8 // pred_check
        %p364 = pneg %p360
      $region83: #{encoder_forward.3} parent=8 // pred_check_branch
        %366 = sbr.rel (%p364) target = $region85
      $region84: #{encoder_forward.3} parent=8 // pred_region
        %s367 = sshllo.u32 0, 4
        loop: start=0, step=1, limit=1
        $region86: #{encoder_forward.3} parent=84 // loop_pre_header
          _
        $region87: #{encoder_forward.3} parent=84 // loop_header
          %s369 = sphi 0, %s373
          %p370 = scmp.ge.s32.totalorder %s369, 1
          %s374 = sphi %s3, %s3
          %s375 = sphi [#allocation4], [#allocation4]
        $region88: #{encoder_forward.3} parent=84 // loop_header_branch
          %372 = sbr.rel (%p370) target = $region92
        $region89: #{encoder_forward.3} parent=84 // loop_body
          %v376 = vld [vmem:[%s374] sm:%s367]
          %377 = vst [vmem:[%s375] sm:%s367] %v376
        $region90: #{encoder_forward.3} parent=84 // loop_footer
          %s373 = sadd.s32 1, %s369
        $region91: #{encoder_forward.3} parent=84 // loop_footer_branch
          %368 = sbr.rel target = $region87
        $region92: #{encoder_forward.3} parent=84 // loop_exit
          _
      $region85: #{encoder_forward.3} parent=8 // pred_fallthru
        _
      // Predicated region
      $region104: #{encoder_forward.3} parent=8 // pred_check
        _
      $region105: #{encoder_forward.3} parent=8 // pred_check_branch
        %401 = sbr.rel (0) target = $region107
      $region106: #{encoder_forward.3} parent=8 // pred_region
        %402 = vsyncadd %s358, 64
      $region107: #{encoder_forward.3} parent=8 // pred_fallthru
        _
      %s403 = smul.u32 8, 16
      %s404 = smul.u32 %s403, 4
      %s405 = sshll.u32 %s404, 4
      %406 = dma.done [#allocation6], %s405
    $region9: #{encoder_forward.3} parent=1 // pred_fallthru
      _
    %v407 = vld [vmem:[%s0] sm:$0xff]
    %v408 = vld [vmem:[%s0 + $0x8] sm:$0xff]
    %v409 = vld [vmem:[%s0 + $0x10] sm:$0xff]
    %v410 = vld [vmem:[%s0 + $0x18] sm:$0xff]
    %v411 = vld [vmem:[%s0 + $0x20] sm:$0xff]
    %v412 = vld [vmem:[%s0 + $0x28] sm:$0xff]
    %v413 = vld [vmem:[%s0 + $0x30] sm:$0xff]
    %v414 = vld [vmem:[%s0 + $0x38] sm:$0xff]
    %v415 = vld [vmem:[#allocation2] sm:$0xff]
    %v416 = vld [vmem:[#allocation2 + $0x8] sm:$0xff]
    %v417 = vld [vmem:[#allocation2 + $0x10] sm:$0xff]
    %v418 = vld [vmem:[#allocation2 + $0x18] sm:$0xff]
    %v419 = vld [vmem:[#allocation2 + $0x20] sm:$0xff]
    %v420 = vld [vmem:[#allocation2 + $0x28] sm:$0xff]
    %v421 = vld [vmem:[#allocation2 + $0x30] sm:$0xff]
    %v422 = vld [vmem:[#allocation2 + $0x38] sm:$0xff]
    %v423 = vld [vmem:[#allocation2 + $0x40] sm:$0xff]
    %v424 = vld [vmem:[#allocation2 + $0x48] sm:$0xff]
    %v425 = vld [vmem:[#allocation2 + $0x50] sm:$0xff]
    %v426 = vld [vmem:[#allocation2 + $0x58] sm:$0xff]
    %v427 = vld [vmem:[#allocation2 + $0x60] sm:$0xff]
    %v428 = vld [vmem:[#allocation2 + $0x68] sm:$0xff]
    %v429 = vld [vmem:[#allocation2 + $0x70] sm:$0xff]
    %v430 = vld [vmem:[#allocation2 + $0x78] sm:$0xff]
    %v431 = vld [vmem:[#allocation2 + $0x80] sm:$0xff]
    %v432 = vld [vmem:[#allocation2 + $0x88] sm:$0xff]
    %v433 = vld [vmem:[#allocation2 + $0x90] sm:$0xff]
    %v434 = vld [vmem:[#allocation2 + $0x98] sm:$0xff]
    %v435 = vld [vmem:[#allocation2 + $0xa0] sm:$0xff]
    %v436 = vld [vmem:[#allocation2 + $0xa8] sm:$0xff]
    %v437 = vld [vmem:[#allocation2 + $0xb0] sm:$0xff]
    %v438 = vld [vmem:[#allocation2 + $0xb8] sm:$0xff]
    %v439 = vld [vmem:[#allocation2 + $0xc0] sm:$0xff]
    %v440 = vld [vmem:[#allocation2 + $0xc8] sm:$0xff]
    %v441 = vld [vmem:[#allocation2 + $0xd0] sm:$0xff]
    %v442 = vld [vmem:[#allocation2 + $0xd8] sm:$0xff]
    %v443 = vld [vmem:[#allocation2 + $0xe0] sm:$0xff]
    %v444 = vld [vmem:[#allocation2 + $0xe8] sm:$0xff]
    %v445 = vld [vmem:[#allocation2 + $0xf0] sm:$0xff]
    %v446 = vld [vmem:[#allocation2 + $0xf8] sm:$0xff]
    %v447 = vld [vmem:[#allocation2 + $0x100] sm:$0xff]
    %v448 = vld [vmem:[#allocation2 + $0x108] sm:$0xff]
    %v449 = vld [vmem:[#allocation2 + $0x110] sm:$0xff]
    %v450 = vld [vmem:[#allocation2 + $0x118] sm:$0xff]
    %v451 = vld [vmem:[#allocation2 + $0x120] sm:$0xff]
    %v452 = vld [vmem:[#allocation2 + $0x128] sm:$0xff]
    %v453 = vld [vmem:[#allocation2 + $0x130] sm:$0xff]
    %v454 = vld [vmem:[#allocation2 + $0x138] sm:$0xff]
    %v455 = vld [vmem:[#allocation2 + $0x140] sm:$0xff]
    %v456 = vld [vmem:[#allocation2 + $0x148] sm:$0xff]
    %v457 = vld [vmem:[#allocation2 + $0x150] sm:$0xff]
    %v458 = vld [vmem:[#allocation2 + $0x158] sm:$0xff]
    %v459 = vld [vmem:[#allocation2 + $0x160] sm:$0xff]
    %v460 = vld [vmem:[#allocation2 + $0x168] sm:$0xff]
    %v461 = vld [vmem:[#allocation2 + $0x170] sm:$0xff]
    %v462 = vld [vmem:[#allocation2 + $0x178] sm:$0xff]
    %v463 = vld [vmem:[#allocation2 + $0x180] sm:$0xff]
    %v464 = vld [vmem:[#allocation2 + $0x188] sm:$0xff]
    %v465 = vld [vmem:[#allocation2 + $0x190] sm:$0xff]
    %v466 = vld [vmem:[#allocation2 + $0x198] sm:$0xff]
    %v467 = vld [vmem:[#allocation2 + $0x1a0] sm:$0xff]
    %v468 = vld [vmem:[#allocation2 + $0x1a8] sm:$0xff]
    %v469 = vld [vmem:[#allocation2 + $0x1b0] sm:$0xff]
    %v470 = vld [vmem:[#allocation2 + $0x1b8] sm:$0xff]
    %v471 = vld [vmem:[#allocation2 + $0x1c0] sm:$0xff]
    %v472 = vld [vmem:[#allocation2 + $0x1c8] sm:$0xff]
    %v473 = vld [vmem:[#allocation2 + $0x1d0] sm:$0xff]
    %v474 = vld [vmem:[#allocation2 + $0x1d8] sm:$0xff]
    %v475 = vld [vmem:[#allocation2 + $0x1e0] sm:$0xff]
    %v476 = vld [vmem:[#allocation2 + $0x1e8] sm:$0xff]
    %v477 = vld [vmem:[#allocation2 + $0x1f0] sm:$0xff]
    %v478 = vld [vmem:[#allocation2 + $0x1f8] sm:$0xff]
    // Predicated region
    $region108: #{encoder_forward.3} parent=1 // pred_check
      %p479 = pneg %p15
    $region109: #{encoder_forward.3} parent=1 // pred_check_branch
      %481 = sbr.rel (%p479) target = $region111
    $region110: #{encoder_forward.3} parent=1 // pred_region
      %s482 = scalar_lea.sflag [#allocation6], 2
      %s483 = smul.u32 1, 4
      %s484 = sshll.u32 %s483, 4
      %485 = dma.done %s482, %s484
    $region111: #{encoder_forward.3} parent=1 // pred_fallthru
      _
    %v486 = vld [vmem:[#allocation4] sm:$0xf]
    %v488 = vlaneseq
    %v489 = vshrl.u32 %v488, 7
    %v490 = vsub.s32 0, %v489
    %v491 = vrot.slane %v486, %v490
    %v492 = vlaneseq
    %v493 = vshrl.u32 %v492, 7
    %v494 = vsub.s32 1, %v493
    %v495 = vrot.slane %v486, %v494
    %v496 = vlaneseq
    %v497 = vshrl.u32 %v496, 7
    %v498 = vsub.s32 2, %v497
    %v499 = vrot.slane %v486, %v498
    %v500 = vlaneseq
    %v501 = vshrl.u32 %v500, 7
    %v502 = vsub.s32 3, %v501
    %v503 = vrot.slane %v486, %v502
    %508 = vmatprep.subr.mxu0 %v416
    %509 = vmatpush1.msra.mxu0 %v415
    %510 = vmatprep.subr.mxu0 %v420
    %511 = vmatpush1.msra.mxu0 %v419
    %512 = vmatprep.subr.mxu0 %v424
    %513 = vmatpush1.msra.mxu0 %v423
    %514 = vmatprep.subr.mxu0 %v428
    %515 = vmatpush1.msra.mxu0 %v427
    %516 = vmatprep.subr.mxu0 %v432
    %517 = vmatpush1.msra.mxu0 %v431
    %518 = vmatprep.subr.mxu0 %v436
    %519 = vmatpush1.msra.mxu0 %v435
    %520 = vmatprep.subr.mxu0 %v440
    %521 = vmatpush1.msra.mxu0 %v439
    %522 = vmatprep.subr.mxu0 %v444
    %523 = vmatpush1.msra.mxu0 %v443
    %524 = vmatprep.subr.mxu0 %v448
    %525 = vmatpush1.msra.mxu0 %v447
    %526 = vmatprep.subr.mxu0 %v452
    %527 = vmatpush1.msra.mxu0 %v451
    %528 = vmatprep.subr.mxu0 %v456
    %529 = vmatpush1.msra.mxu0 %v455
    %530 = vmatprep.subr.mxu0 %v460
    %531 = vmatpush1.msra.mxu0 %v459
    %532 = vmatprep.subr.mxu0 %v464
    %533 = vmatpush1.msra.mxu0 %v463
    %534 = vmatprep.subr.mxu0 %v468
    %535 = vmatpush1.msra.mxu0 %v467
    %536 = vmatprep.subr.mxu0 %v472
    %537 = vmatpush1.msra.mxu0 %v471
    %538 = vmatprep.subr.mxu0 %v476
    %539 = vmatpush1.msra.mxu0 %v475
    %540 = vmatprep.subr.mxu0 0.0
    %541 = vmatpush1.msra.mxu0 0.0
    %542 = vmatprep.subr.mxu0 0.0
    %543 = vmatpush1.msra.mxu0 0.0
    %544 = vmatprep.subr.mxu0 0.0
    %545 = vmatpush1.msra.mxu0 0.0
    %546 = vmatprep.subr.mxu0 0.0
    %547 = vmatpush1.msra.mxu0 0.0
    %548 = vmatprep.subr.mxu0 0.0
    %549 = vmatpush1.msra.mxu0 0.0
    %550 = vmatprep.subr.mxu0 0.0
    %551 = vmatpush1.msra.mxu0 0.0
    %552 = vmatprep.subr.mxu0 0.0
    %553 = vmatpush1.msra.mxu0 0.0
    %554 = vmatprep.subr.mxu0 0.0
    %555 = vmatpush1.msra.mxu0 0.0
    %556 = vmatprep.subr.mxu0 0.0
    %557 = vmatpush1.msra.mxu0 0.0
    %558 = vmatprep.subr.mxu0 0.0
    %559 = vmatpush1.msra.mxu0 0.0
    %560 = vmatprep.subr.mxu0 0.0
    %561 = vmatpush1.msra.mxu0 0.0
    %562 = vmatprep.subr.mxu0 0.0
    %563 = vmatpush1.msra.mxu0 0.0
    %564 = vmatprep.subr.mxu0 0.0
    %565 = vmatpush1.msra.mxu0 0.0
    %566 = vmatprep.subr.mxu0 0.0
    %567 = vmatpush1.msra.mxu0 0.0
    %568 = vmatprep.subr.mxu0 0.0
    %569 = vmatpush1.msra.mxu0 0.0
    %570 = vmatprep.subr.mxu0 0.0
    %571 = vmatpush1.msra.mxu0 0.0
    %572 = vmatprep.mubr.f32.mxu0 0.0
    %573 = vmatmul.mubr.f32.gmra.mrb[0].mxu0 %v407
    %v574 = vpop.f32.mrb[0].mxu0
    %v575 = vadd.f32 %v491, %v574
    %v576 = vpop.f32.mrb[0].mxu0
    %v577 = vadd.f32 %v495, %v576
    %578 = vmatprep.mubr.f32.mxu0 0.0
    %579 = vmatmul.mubr.f32.gmra.mrb[0].mxu0 %v408
    %v580 = vpop.f32.mrb[0].mxu0
    %v581 = vadd.f32 %v491, %v580
    %v582 = vpop.f32.mrb[0].mxu0
    %v583 = vadd.f32 %v495, %v582
    %584 = vmatprep.mubr.f32.mxu0 0.0
    %585 = vmatmul.mubr.f32.gmra.mrb[0].mxu0 %v409
    %v586 = vpop.f32.mrb[0].mxu0
    %v587 = vadd.f32 %v491, %v586
    %v588 = vpop.f32.mrb[0].mxu0
    %v589 = vadd.f32 %v495, %v588
    %590 = vmatprep.mubr.f32.mxu0 0.0
    %591 = vmatmul.mubr.f32.gmra.mrb[0].mxu0 %v410
    %v592 = vpop.f32.mrb[0].mxu0
    %v593 = vadd.f32 %v491, %v592
    %v594 = vpop.f32.mrb[0].mxu0
    %v595 = vadd.f32 %v495, %v594
    %596 = vmatprep.mubr.f32.mxu0 0.0
    %597 = vmatmul.mubr.f32.gmra.mrb[0].mxu0 %v411
    %v598 = vpop.f32.mrb[0].mxu0
    %v599 = vadd.f32 %v491, %v598
    %v600 = vpop.f32.mrb[0].mxu0
    %v601 = vadd.f32 %v495, %v600
    %602 = vmatprep.mubr.f32.mxu0 0.0
    %603 = vmatmul.mubr.f32.gmra.mrb[0].mxu0 %v412
    %v604 = vpop.f32.mrb[0].mxu0
    %v605 = vadd.f32 %v491, %v604
    %v606 = vpop.f32.mrb[0].mxu0
    %v607 = vadd.f32 %v495, %v606
    %608 = vmatprep.mubr.f32.mxu0 0.0
    %609 = vmatmul.mubr.f32.gmra.mrb[0].mxu0 %v413
    %v610 = vpop.f32.mrb[0].mxu0
    %v611 = vadd.f32 %v491, %v610
    %v612 = vpop.f32.mrb[0].mxu0
    %v613 = vadd.f32 %v495, %v612
    %614 = vmatprep.mubr.f32.mxu0 0.0
    %615 = vmatmul.mubr.f32.gmra.mrb[0].mxu0 %v414
    %v616 = vpop.f32.mrb[0].mxu0
    %v617 = vadd.f32 %v491, %v616
    %v618 = vpop.f32.mrb[0].mxu0
    %v619 = vadd.f32 %v495, %v618
    %620 = vdwg.mxu0
    %621 = vmatprep.subr.mxu0 %v418
    %622 = vmatpush1.msra.mxu0 %v417
    %623 = vmatprep.subr.mxu0 %v422
    %624 = vmatpush1.msra.mxu0 %v421
    %625 = vmatprep.subr.mxu0 %v426
    %626 = vmatpush1.msra.mxu0 %v425
    %627 = vmatprep.subr.mxu0 %v430
    %628 = vmatpush1.msra.mxu0 %v429
    %629 = vmatprep.subr.mxu0 %v434
    %630 = vmatpush1.msra.mxu0 %v433
    %631 = vmatprep.subr.mxu0 %v438
    %632 = vmatpush1.msra.mxu0 %v437
    %633 = vmatprep.subr.mxu0 %v442
    %634 = vmatpush1.msra.mxu0 %v441
    %635 = vmatprep.subr.mxu0 %v446
    %636 = vmatpush1.msra.mxu0 %v445
    %637 = vmatprep.subr.mxu0 %v450
    %638 = vmatpush1.msra.mxu0 %v449
    %639 = vmatprep.subr.mxu0 %v454
    %640 = vmatpush1.msra.mxu0 %v453
    %641 = vmatprep.subr.mxu0 %v458
    %642 = vmatpush1.msra.mxu0 %v457
    %643 = vmatprep.subr.mxu0 %v462
    %644 = vmatpush1.msra.mxu0 %v461
    %645 = vmatprep.subr.mxu0 %v466
    %646 = vmatpush1.msra.mxu0 %v465
    %647 = vmatprep.subr.mxu0 %v470
    %648 = vmatpush1.msra.mxu0 %v469
    %649 = vmatprep.subr.mxu0 %v474
    %650 = vmatpush1.msra.mxu0 %v473
    %651 = vmatprep.subr.mxu0 %v478
    %652 = vmatpush1.msra.mxu0 %v477
    %653 = vmatprep.subr.mxu0 0.0
    %654 = vmatpush1.msra.mxu0 0.0
    %655 = vmatprep.subr.mxu0 0.0
    %656 = vmatpush1.msra.mxu0 0.0
    %657 = vmatprep.subr.mxu0 0.0
    %658 = vmatpush1.msra.mxu0 0.0
    %659 = vmatprep.subr.mxu0 0.0
    %660 = vmatpush1.msra.mxu0 0.0
    %661 = vmatprep.subr.mxu0 0.0
    %662 = vmatpush1.msra.mxu0 0.0
    %663 = vmatprep.subr.mxu0 0.0
    %664 = vmatpush1.msra.mxu0 0.0
    %665 = vmatprep.subr.mxu0 0.0
    %666 = vmatpush1.msra.mxu0 0.0
    %667 = vmatprep.subr.mxu0 0.0
    %668 = vmatpush1.msra.mxu0 0.0
    %669 = vmatprep.subr.mxu0 0.0
    %670 = vmatpush1.msra.mxu0 0.0
    %671 = vmatprep.subr.mxu0 0.0
    %672 = vmatpush1.msra.mxu0 0.0
    %673 = vmatprep.subr.mxu0 0.0
    %674 = vmatpush1.msra.mxu0 0.0
    %675 = vmatprep.subr.mxu0 0.0
    %676 = vmatpush1.msra.mxu0 0.0
    %677 = vmatprep.subr.mxu0 0.0
    %678 = vmatpush1.msra.mxu0 0.0
    %679 = vmatprep.subr.mxu0 0.0
    %680 = vmatpush1.msra.mxu0 0.0
    %681 = vmatprep.subr.mxu0 0.0
    %682 = vmatpush1.msra.mxu0 0.0
    %683 = vmatprep.subr.mxu0 0.0
    %684 = vmatpush1.msra.mxu0 0.0
    %685 = vmatprep.mubr.f32.mxu0 0.0
    %686 = vmatmul.mubr.f32.gmra.mrb[0].mxu0 %v407
    %v687 = vpop.f32.mrb[0].mxu0
    %v688 = vadd.f32 %v499, %v687
    %v689 = vpop.f32.mrb[0].mxu0
    %v690 = vadd.f32 %v503, %v689
    %691 = vmatprep.mubr.f32.mxu0 0.0
    %692 = vmatmul.mubr.f32.gmra.mrb[0].mxu0 %v408
    %v693 = vpop.f32.mrb[0].mxu0
    %v694 = vadd.f32 %v499, %v693
    %v695 = vpop.f32.mrb[0].mxu0
    %v696 = vadd.f32 %v503, %v695
    %697 = vmatprep.mubr.f32.mxu0 0.0
    %698 = vmatmul.mubr.f32.gmra.mrb[0].mxu0 %v409
    %v699 = vpop.f32.mrb[0].mxu0
    %v700 = vadd.f32 %v499, %v699
    %v701 = vpop.f32.mrb[0].mxu0
    %v702 = vadd.f32 %v503, %v701
    %703 = vmatprep.mubr.f32.mxu0 0.0
    %704 = vmatmul.mubr.f32.gmra.mrb[0].mxu0 %v410
    %v705 = vpop.f32.mrb[0].mxu0
    %v706 = vadd.f32 %v499, %v705
    %v707 = vpop.f32.mrb[0].mxu0
    %v708 = vadd.f32 %v503, %v707
    %709 = vmatprep.mubr.f32.mxu0 0.0
    %710 = vmatmul.mubr.f32.gmra.mrb[0].mxu0 %v411
    %v711 = vpop.f32.mrb[0].mxu0
    %v712 = vadd.f32 %v499, %v711
    %v713 = vpop.f32.mrb[0].mxu0
    %v714 = vadd.f32 %v503, %v713
    %715 = vmatprep.mubr.f32.mxu0 0.0
    %716 = vmatmul.mubr.f32.gmra.mrb[0].mxu0 %v412
    %v717 = vpop.f32.mrb[0].mxu0
    %v718 = vadd.f32 %v499, %v717
    %v719 = vpop.f32.mrb[0].mxu0
    %v720 = vadd.f32 %v503, %v719
    %721 = vmatprep.mubr.f32.mxu0 0.0
    %722 = vmatmul.mubr.f32.gmra.mrb[0].mxu0 %v413
    %v723 = vpop.f32.mrb[0].mxu0
    %v724 = vadd.f32 %v499, %v723
    %v725 = vpop.f32.mrb[0].mxu0
    %v726 = vadd.f32 %v503, %v725
    %727 = vmatprep.mubr.f32.mxu0 0.0
    %728 = vmatmul.mubr.f32.gmra.mrb[0].mxu0 %v414
    %v729 = vpop.f32.mrb[0].mxu0
    %v730 = vadd.f32 %v499, %v729
    %v731 = vpop.f32.mrb[0].mxu0
    %v732 = vadd.f32 %v503, %v731
    %733 = vdwg.mxu0
    %734 = vst [vmem:[#allocation5] sm:$0xff] %v575
    %735 = vst [vmem:[#allocation5 + $0x8] sm:$0xff] %v577
    %736 = vst [vmem:[#allocation5 + $0x10] sm:$0xff] %v688
    %737 = vst [vmem:[#allocation5 + $0x18] sm:$0xff] %v690
    %738 = vst [vmem:[#allocation5 + $0x20] sm:$0xff] %v581
    %739 = vst [vmem:[#allocation5 + $0x28] sm:$0xff] %v583
    %740 = vst [vmem:[#allocation5 + $0x30] sm:$0xff] %v694
    %741 = vst [vmem:[#allocation5 + $0x38] sm:$0xff] %v696
    %742 = vst [vmem:[#allocation5 + $0x40] sm:$0xff] %v587
    %743 = vst [vmem:[#allocation5 + $0x48] sm:$0xff] %v589
    %744 = vst [vmem:[#allocation5 + $0x50] sm:$0xff] %v700
    %745 = vst [vmem:[#allocation5 + $0x58] sm:$0xff] %v702
    %746 = vst [vmem:[#allocation5 + $0x60] sm:$0xff] %v593
    %747 = vst [vmem:[#allocation5 + $0x68] sm:$0xff] %v595
    %748 = vst [vmem:[#allocation5 + $0x70] sm:$0xff] %v706
    %749 = vst [vmem:[#allocation5 + $0x78] sm:$0xff] %v708
    %750 = vst [vmem:[#allocation5 + $0x80] sm:$0xff] %v599
    %751 = vst [vmem:[#allocation5 + $0x88] sm:$0xff] %v601
    %752 = vst [vmem:[#allocation5 + $0x90] sm:$0xff] %v712
    %753 = vst [vmem:[#allocation5 + $0x98] sm:$0xff] %v714
    %754 = vst [vmem:[#allocation5 + $0xa0] sm:$0xff] %v605
    %755 = vst [vmem:[#allocation5 + $0xa8] sm:$0xff] %v607
    %756 = vst [vmem:[#allocation5 + $0xb0] sm:$0xff] %v718
    %757 = vst [vmem:[#allocation5 + $0xb8] sm:$0xff] %v720
    %758 = vst [vmem:[#allocation5 + $0xc0] sm:$0xff] %v611
    %759 = vst [vmem:[#allocation5 + $0xc8] sm:$0xff] %v613
    %760 = vst [vmem:[#allocation5 + $0xd0] sm:$0xff] %v724
    %761 = vst [vmem:[#allocation5 + $0xd8] sm:$0xff] %v726
    %762 = vst [vmem:[#allocation5 + $0xe0] sm:$0xff] %v617
    %763 = vst [vmem:[#allocation5 + $0xe8] sm:$0xff] %v619
    %764 = vst [vmem:[#allocation5 + $0xf0] sm:$0xff] %v730
    %765 = vst [vmem:[#allocation5 + $0xf8] sm:$0xff] %v732
    // Predicated region
    $region112: #{encoder_forward.3} parent=1 // pred_check
      %p766 = pneg %p15
    $region113: #{encoder_forward.3} parent=1 // pred_check_branch
      %768 = sbr.rel (%p766) target = $region115
    $region114: #{encoder_forward.3} parent=1 // pred_region
      %s769 = scalar_lea.sflag [#allocation6], 1
      %s770 = smul.u32 8, 16
      %s771 = smul.u32 %s770, 4
      %s772 = sshll.u32 %s771, 4
      %773 = dma.done %s769, %s772
    $region115: #{encoder_forward.3} parent=1 // pred_fallthru
      _
    %v774 = vld [vmem:[#allocation3] sm:$0xff]
    %v775 = vld [vmem:[#allocation3 + $0x8] sm:$0xff]
    %v776 = vld [vmem:[#allocation3 + $0x10] sm:$0xff]
    %v777 = vld [vmem:[#allocation3 + $0x18] sm:$0xff]
    %v778 = vld [vmem:[#allocation3 + $0x20] sm:$0xff]
    %v779 = vld [vmem:[#allocation3 + $0x28] sm:$0xff]
    %v780 = vld [vmem:[#allocation3 + $0x30] sm:$0xff]
    %v781 = vld [vmem:[#allocation3 + $0x38] sm:$0xff]
    %v782 = vld [vmem:[#allocation3 + $0x40] sm:$0xff]
    %v783 = vld [vmem:[#allocation3 + $0x48] sm:$0xff]
    %v784 = vld [vmem:[#allocation3 + $0x50] sm:$0xff]
    %v785 = vld [vmem:[#allocation3 + $0x58] sm:$0xff]
    %v786 = vld [vmem:[#allocation3 + $0x60] sm:$0xff]
    %v787 = vld [vmem:[#allocation3 + $0x68] sm:$0xff]
    %v788 = vld [vmem:[#allocation3 + $0x70] sm:$0xff]
    %v789 = vld [vmem:[#allocation3 + $0x78] sm:$0xff]
    %v790 = vld [vmem:[#allocation3 + $0x80] sm:$0xff]
    %v791 = vld [vmem:[#allocation3 + $0x88] sm:$0xff]
    %v792 = vld [vmem:[#allocation3 + $0x90] sm:$0xff]
    %v793 = vld [vmem:[#allocation3 + $0x98] sm:$0xff]
    %v794 = vld [vmem:[#allocation3 + $0xa0] sm:$0xff]
    %v795 = vld [vmem:[#allocation3 + $0xa8] sm:$0xff]
    %v796 = vld [vmem:[#allocation3 + $0xb0] sm:$0xff]
    %v797 = vld [vmem:[#allocation3 + $0xb8] sm:$0xff]
    %v798 = vld [vmem:[#allocation3 + $0xc0] sm:$0xff]
    %v799 = vld [vmem:[#allocation3 + $0xc8] sm:$0xff]
    %v800 = vld [vmem:[#allocation3 + $0xd0] sm:$0xff]
    %v801 = vld [vmem:[#allocation3 + $0xd8] sm:$0xff]
    %v802 = vld [vmem:[#allocation3 + $0xe0] sm:$0xff]
    %v803 = vld [vmem:[#allocation3 + $0xe8] sm:$0xff]
    %v804 = vld [vmem:[#allocation3 + $0xf0] sm:$0xff]
    %v805 = vld [vmem:[#allocation3 + $0xf8] sm:$0xff]
    %v806 = vld [vmem:[#allocation3 + $0x100] sm:$0xff]
    %v807 = vld [vmem:[#allocation3 + $0x108] sm:$0xff]
    %v808 = vld [vmem:[#allocation3 + $0x110] sm:$0xff]
    %v809 = vld [vmem:[#allocation3 + $0x118] sm:$0xff]
    %v810 = vld [vmem:[#allocation3 + $0x120] sm:$0xff]
    %v811 = vld [vmem:[#allocation3 + $0x128] sm:$0xff]
    %v812 = vld [vmem:[#allocation3 + $0x130] sm:$0xff]
    %v813 = vld [vmem:[#allocation3 + $0x138] sm:$0xff]
    %v814 = vld [vmem:[#allocation3 + $0x140] sm:$0xff]
    %v815 = vld [vmem:[#allocation3 + $0x148] sm:$0xff]
    %v816 = vld [vmem:[#allocation3 + $0x150] sm:$0xff]
    %v817 = vld [vmem:[#allocation3 + $0x158] sm:$0xff]
    %v818 = vld [vmem:[#allocation3 + $0x160] sm:$0xff]
    %v819 = vld [vmem:[#allocation3 + $0x168] sm:$0xff]
    %v820 = vld [vmem:[#allocation3 + $0x170] sm:$0xff]
    %v821 = vld [vmem:[#allocation3 + $0x178] sm:$0xff]
    %v822 = vld [vmem:[#allocation3 + $0x180] sm:$0xff]
    %v823 = vld [vmem:[#allocation3 + $0x188] sm:$0xff]
    %v824 = vld [vmem:[#allocation3 + $0x190] sm:$0xff]
    %v825 = vld [vmem:[#allocation3 + $0x198] sm:$0xff]
    %v826 = vld [vmem:[#allocation3 + $0x1a0] sm:$0xff]
    %v827 = vld [vmem:[#allocation3 + $0x1a8] sm:$0xff]
    %v828 = vld [vmem:[#allocation3 + $0x1b0] sm:$0xff]
    %v829 = vld [vmem:[#allocation3 + $0x1b8] sm:$0xff]
    %v830 = vld [vmem:[#allocation3 + $0x1c0] sm:$0xff]
    %v831 = vld [vmem:[#allocation3 + $0x1c8] sm:$0xff]
    %v832 = vld [vmem:[#allocation3 + $0x1d0] sm:$0xff]
    %v833 = vld [vmem:[#allocation3 + $0x1d8] sm:$0xff]
    %v834 = vld [vmem:[#allocation3 + $0x1e0] sm:$0xff]
    %v835 = vld [vmem:[#allocation3 + $0x1e8] sm:$0xff]
    %v836 = vld [vmem:[#allocation3 + $0x1f0] sm:$0xff]
    %v837 = vld [vmem:[#allocation3 + $0x1f8] sm:$0xff]
    %v838 = vld [vmem:[%s5] sm:$0xff]
    %v839 = vld [vmem:[%s6] sm:$0xff]
    %v840 = vld [vmem:[#allocation5] sm:$0xff]
    %v841 = vld [vmem:[#allocation5 + $0x8] sm:$0xff]
    %v842 = vld [vmem:[#allocation5 + $0x10] sm:$0xff]
    %v843 = vld [vmem:[#allocation5 + $0x18] sm:$0xff]
    %844 = vmatprep.subr.mxu0 %v775
    %845 = vmatpush1.msra.mxu0 %v774
    %846 = vmatprep.subr.mxu0 %v779
    %847 = vmatpush1.msra.mxu0 %v778
    %848 = vmatprep.subr.mxu0 %v783
    %849 = vmatpush1.msra.mxu0 %v782
    %850 = vmatprep.subr.mxu0 %v787
    %851 = vmatpush1.msra.mxu0 %v786
    %852 = vmatprep.subr.mxu0 %v791
    %853 = vmatpush1.msra.mxu0 %v790
    %854 = vmatprep.subr.mxu0 %v795
    %855 = vmatpush1.msra.mxu0 %v794
    %856 = vmatprep.subr.mxu0 %v799
    %857 = vmatpush1.msra.mxu0 %v798
    %858 = vmatprep.subr.mxu0 %v803
    %859 = vmatpush1.msra.mxu0 %v802
    %860 = vmatprep.subr.mxu0 %v807
    %861 = vmatpush1.msra.mxu0 %v806
    %862 = vmatprep.subr.mxu0 %v811
    %863 = vmatpush1.msra.mxu0 %v810
    %864 = vmatprep.subr.mxu0 %v815
    %865 = vmatpush1.msra.mxu0 %v814
    %866 = vmatprep.subr.mxu0 %v819
    %867 = vmatpush1.msra.mxu0 %v818
    %868 = vmatprep.subr.mxu0 %v823
    %869 = vmatpush1.msra.mxu0 %v822
    %870 = vmatprep.subr.mxu0 %v827
    %871 = vmatpush1.msra.mxu0 %v826
    %872 = vmatprep.subr.mxu0 %v831
    %873 = vmatpush1.msra.mxu0 %v830
    %874 = vmatprep.subr.mxu0 %v835
    %875 = vmatpush1.msra.mxu0 %v834
    %876 = vmatprep.subr.mxu0 0.0
    %877 = vmatpush1.msra.mxu0 0.0
    %878 = vmatprep.subr.mxu0 0.0
    %879 = vmatpush1.msra.mxu0 0.0
    %880 = vmatprep.subr.mxu0 0.0
    %881 = vmatpush1.msra.mxu0 0.0
    %882 = vmatprep.subr.mxu0 0.0
    %883 = vmatpush1.msra.mxu0 0.0
    %884 = vmatprep.subr.mxu0 0.0
    %885 = vmatpush1.msra.mxu0 0.0
    %886 = vmatprep.subr.mxu0 0.0
    %887 = vmatpush1.msra.mxu0 0.0
    %888 = vmatprep.subr.mxu0 0.0
    %889 = vmatpush1.msra.mxu0 0.0
    %890 = vmatprep.subr.mxu0 0.0
    %891 = vmatpush1.msra.mxu0 0.0
    %892 = vmatprep.subr.mxu0 0.0
    %893 = vmatpush1.msra.mxu0 0.0
    %894 = vmatprep.subr.mxu0 0.0
    %895 = vmatpush1.msra.mxu0 0.0
    %896 = vmatprep.subr.mxu0 0.0
    %897 = vmatpush1.msra.mxu0 0.0
    %898 = vmatprep.subr.mxu0 0.0
    %899 = vmatpush1.msra.mxu0 0.0
    %900 = vmatprep.subr.mxu0 0.0
    %901 = vmatpush1.msra.mxu0 0.0
    %902 = vmatprep.subr.mxu0 0.0
    %903 = vmatpush1.msra.mxu0 0.0
    %904 = vmatprep.subr.mxu0 0.0
    %905 = vmatpush1.msra.mxu0 0.0
    %906 = vmatprep.subr.mxu0 0.0
    %907 = vmatpush1.msra.mxu0 0.0
    %908 = vmatprep.mubr.f32.mxu0 0.0
    %909 = vmatmul.mubr.f32.gmra.mrb[0].mxu0 %v838
    %v910 = vpop.f32.mrb[0].mxu0
    %v911 = vadd.f32 0.0, %v910
    %v912 = vpop.f32.mrb[0].mxu0
    %v913 = vadd.f32 0.0, %v912
    %914 = vdwg.mxu0
    %915 = vmatprep.subr.mxu0 %v777
    %916 = vmatpush1.msra.mxu0 %v776
    %917 = vmatprep.subr.mxu0 %v781
    %918 = vmatpush1.msra.mxu0 %v780
    %919 = vmatprep.subr.mxu0 %v785
    %920 = vmatpush1.msra.mxu0 %v784
    %921 = vmatprep.subr.mxu0 %v789
    %922 = vmatpush1.msra.mxu0 %v788
    %923 = vmatprep.subr.mxu0 %v793
    %924 = vmatpush1.msra.mxu0 %v792
    %925 = vmatprep.subr.mxu0 %v797
    %926 = vmatpush1.msra.mxu0 %v796
    %927 = vmatprep.subr.mxu0 %v801
    %928 = vmatpush1.msra.mxu0 %v800
    %929 = vmatprep.subr.mxu0 %v805
    %930 = vmatpush1.msra.mxu0 %v804
    %931 = vmatprep.subr.mxu0 %v809
    %932 = vmatpush1.msra.mxu0 %v808
    %933 = vmatprep.subr.mxu0 %v813
    %934 = vmatpush1.msra.mxu0 %v812
    %935 = vmatprep.subr.mxu0 %v817
    %936 = vmatpush1.msra.mxu0 %v816
    %937 = vmatprep.subr.mxu0 %v821
    %938 = vmatpush1.msra.mxu0 %v820
    %939 = vmatprep.subr.mxu0 %v825
    %940 = vmatpush1.msra.mxu0 %v824
    %941 = vmatprep.subr.mxu0 %v829
    %942 = vmatpush1.msra.mxu0 %v828
    %943 = vmatprep.subr.mxu0 %v833
    %944 = vmatpush1.msra.mxu0 %v832
    %945 = vmatprep.subr.mxu0 %v837
    %946 = vmatpush1.msra.mxu0 %v836
    %947 = vmatprep.subr.mxu0 0.0
    %948 = vmatpush1.msra.mxu0 0.0
    %949 = vmatprep.subr.mxu0 0.0
    %950 = vmatpush1.msra.mxu0 0.0
    %951 = vmatprep.subr.mxu0 0.0
    %952 = vmatpush1.msra.mxu0 0.0
    %953 = vmatprep.subr.mxu0 0.0
    %954 = vmatpush1.msra.mxu0 0.0
    %955 = vmatprep.subr.mxu0 0.0
    %956 = vmatpush1.msra.mxu0 0.0
    %957 = vmatprep.subr.mxu0 0.0
    %958 = vmatpush1.msra.mxu0 0.0
    %959 = vmatprep.subr.mxu0 0.0
    %960 = vmatpush1.msra.mxu0 0.0
    %961 = vmatprep.subr.mxu0 0.0
    %962 = vmatpush1.msra.mxu0 0.0
    %963 = vmatprep.subr.mxu0 0.0
    %964 = vmatpush1.msra.mxu0 0.0
    %965 = vmatprep.subr.mxu0 0.0
    %966 = vmatpush1.msra.mxu0 0.0
    %967 = vmatprep.subr.mxu0 0.0
    %968 = vmatpush1.msra.mxu0 0.0
    %969 = vmatprep.subr.mxu0 0.0
    %970 = vmatpush1.msra.mxu0 0.0
    %971 = vmatprep.subr.mxu0 0.0
    %972 = vmatpush1.msra.mxu0 0.0
    %973 = vmatprep.subr.mxu0 0.0
    %974 = vmatpush1.msra.mxu0 0.0
    %975 = vmatprep.subr.mxu0 0.0
    %976 = vmatpush1.msra.mxu0 0.0
    %977 = vmatprep.subr.mxu0 0.0
    %978 = vmatpush1.msra.mxu0 0.0
    %979 = vmatprep.mubr.f32.mxu0 0.0
    %980 = vmatmul.mubr.f32.gmra.mrb[0].mxu0 %v838
    %v981 = vpop.f32.mrb[0].mxu0
    %v982 = vadd.f32 0.0, %v981
    %v983 = vpop.f32.mrb[0].mxu0
    %v984 = vadd.f32 0.0, %v983
    %985 = vdwg.mxu0
    %v986 = vadd.f32 %v840, %v911
    %v987 = vadd.f32 %v841, %v913
    %v988 = vadd.f32 %v842, %v982
    %v989 = vadd.f32 %v843, %v984
    %v990 = vxor.u32 %v986, 2147483648
    %v991 = vxor.u32 %v987, 2147483648
    %v992 = vxor.u32 %v988, 2147483648
    %v993 = vmul.f32 %v990, 1.442695
    %v994 = vpow.pop %v993
    %v995 = vmul.f32 %v991, 1.442695
    %v996 = vpow.pop %v995
    %v997 = vmul.f32 %v992, 1.442695
    %v998 = vpow.pop %v997
    %v999 = vadd.f32 %v994, 1.0
    %v1000 = vadd.f32 %v996, 1.0
    %v1001 = vadd.f32 %v998, 1.0
    %v1002 = vrcp.pop %v999
    %v1003 = vmul.f32 1.0, %v1002
    %v1004 = vrcp.pop %v1000
    %v1005 = vmul.f32 1.0, %v1004
    %v1006 = vrcp.pop %v1001
    %v1007 = vmul.f32 1.0, %v1006
    %v1008 = vtanh.pop %v989
    %v1009 = vmul.f32 %v1005, %v839
    %v1010 = vmul.f32 %v1003, %v1008
    %v1011 = vadd.f32 %v1009, %v1010
    %v1012 = vtanh.pop %v1011
    %v1013 = vmul.f32 %v1007, %v1012
    %1014 = vst [vmem:[#allocation7] sm:$0xff] %v1013
    %s1015 = scalar_lea.vmem [#allocation5], 32
    %v1016 = vld [vmem:[%s1015] sm:$0xff]
    %v1017 = vld [vmem:[%s1015 + $0x8] sm:$0xff]
    %v1018 = vld [vmem:[%s1015 + $0x10] sm:$0xff]
    %v1019 = vld [vmem:[%s1015 + $0x18] sm:$0xff]
    %1020 = vmatprep.subr.mxu0 %v775
    %1021 = vmatpush1.msra.mxu0 %v774
    %1022 = vmatprep.subr.mxu0 %v779
    %1023 = vmatpush1.msra.mxu0 %v778
    %1024 = vmatprep.subr.mxu0 %v783
    %1025 = vmatpush1.msra.mxu0 %v782
    %1026 = vmatprep.subr.mxu0 %v787
    %1027 = vmatpush1.msra.mxu0 %v786
    %1028 = vmatprep.subr.mxu0 %v791
    %1029 = vmatpush1.msra.mxu0 %v790
    %1030 = vmatprep.subr.mxu0 %v795
    %1031 = vmatpush1.msra.mxu0 %v794
    %1032 = vmatprep.subr.mxu0 %v799
    %1033 = vmatpush1.msra.mxu0 %v798
    %1034 = vmatprep.subr.mxu0 %v803
    %1035 = vmatpush1.msra.mxu0 %v802
    %1036 = vmatprep.subr.mxu0 %v807
    %1037 = vmatpush1.msra.mxu0 %v806
    %1038 = vmatprep.subr.mxu0 %v811
    %1039 = vmatpush1.msra.mxu0 %v810
    %1040 = vmatprep.subr.mxu0 %v815
    %1041 = vmatpush1.msra.mxu0 %v814
    %1042 = vmatprep.subr.mxu0 %v819
    %1043 = vmatpush1.msra.mxu0 %v818
    %1044 = vmatprep.subr.mxu0 %v823
    %1045 = vmatpush1.msra.mxu0 %v822
    %1046 = vmatprep.subr.mxu0 %v827
    %1047 = vmatpush1.msra.mxu0 %v826
    %1048 = vmatprep.subr.mxu0 %v831
    %1049 = vmatpush1.msra.mxu0 %v830
    %1050 = vmatprep.subr.mxu0 %v835
    %1051 = vmatpush1.msra.mxu0 %v834
    %1052 = vmatprep.subr.mxu0 0.0
    %1053 = vmatpush1.msra.mxu0 0.0
    %1054 = vmatprep.subr.mxu0 0.0
    %1055 = vmatpush1.msra.mxu0 0.0
    %1056 = vmatprep.subr.mxu0 0.0
    %1057 = vmatpush1.msra.mxu0 0.0
    %1058 = vmatprep.subr.mxu0 0.0
    %1059 = vmatpush1.msra.mxu0 0.0
    %1060 = vmatprep.subr.mxu0 0.0
    %1061 = vmatpush1.msra.mxu0 0.0
    %1062 = vmatprep.subr.mxu0 0.0
    %1063 = vmatpush1.msra.mxu0 0.0
    %1064 = vmatprep.subr.mxu0 0.0
    %1065 = vmatpush1.msra.mxu0 0.0
    %1066 = vmatprep.subr.mxu0 0.0
    %1067 = vmatpush1.msra.mxu0 0.0
    %1068 = vmatprep.subr.mxu0 0.0
    %1069 = vmatpush1.msra.mxu0 0.0
    %1070 = vmatprep.subr.mxu0 0.0
    %1071 = vmatpush1.msra.mxu0 0.0
    %1072 = vmatprep.subr.mxu0 0.0
    %1073 = vmatpush1.msra.mxu0 0.0
    %1074 = vmatprep.subr.mxu0 0.0
    %1075 = vmatpush1.msra.mxu0 0.0
    %1076 = vmatprep.subr.mxu0 0.0
    %1077 = vmatpush1.msra.mxu0 0.0
    %1078 = vmatprep.subr.mxu0 0.0
    %1079 = vmatpush1.msra.mxu0 0.0
    %1080 = vmatprep.subr.mxu0 0.0
    %1081 = vmatpush1.msra.mxu0 0.0
    %1082 = vmatprep.subr.mxu0 0.0
    %1083 = vmatpush1.msra.mxu0 0.0
    %1084 = vmatprep.mubr.f32.mxu0 0.0
    %1085 = vmatmul.mubr.f32.gmra.mrb[0].mxu0 %v1013
    %v1086 = vpop.f32.mrb[0].mxu0
    %v1087 = vadd.f32 0.0, %v1086
    %v1088 = vpop.f32.mrb[0].mxu0
    %v1089 = vadd.f32 0.0, %v1088
    %1090 = vdwg.mxu0
    %1091 = vmatprep.subr.mxu0 %v777
    %1092 = vmatpush1.msra.mxu0 %v776
    %1093 = vmatprep.subr.mxu0 %v781
    %1094 = vmatpush1.msra.mxu0 %v780
    %1095 = vmatprep.subr.mxu0 %v785
    %1096 = vmatpush1.msra.mxu0 %v784
    %1097 = vmatprep.subr.mxu0 %v789
    %1098 = vmatpush1.msra.mxu0 %v788
    %1099 = vmatprep.subr.mxu0 %v793
    %1100 = vmatpush1.msra.mxu0 %v792
    %1101 = vmatprep.subr.mxu0 %v797
    %1102 = vmatpush1.msra.mxu0 %v796
    %1103 = vmatprep.subr.mxu0 %v801
    %1104 = vmatpush1.msra.mxu0 %v800
    %1105 = vmatprep.subr.mxu0 %v805
    %1106 = vmatpush1.msra.mxu0 %v804
    %1107 = vmatprep.subr.mxu0 %v809
    %1108 = vmatpush1.msra.mxu0 %v808
    %1109 = vmatprep.subr.mxu0 %v813
    %1110 = vmatpush1.msra.mxu0 %v812
    %1111 = vmatprep.subr.mxu0 %v817
    %1112 = vmatpush1.msra.mxu0 %v816
    %1113 = vmatprep.subr.mxu0 %v821
    %1114 = vmatpush1.msra.mxu0 %v820
    %1115 = vmatprep.subr.mxu0 %v825
    %1116 = vmatpush1.msra.mxu0 %v824
    %1117 = vmatprep.subr.mxu0 %v829
    %1118 = vmatpush1.msra.mxu0 %v828
    %1119 = vmatprep.subr.mxu0 %v833
    %1120 = vmatpush1.msra.mxu0 %v832
    %1121 = vmatprep.subr.mxu0 %v837
    %1122 = vmatpush1.msra.mxu0 %v836
    %1123 = vmatprep.subr.mxu0 0.0
    %1124 = vmatpush1.msra.mxu0 0.0
    %1125 = vmatprep.subr.mxu0 0.0
    %1126 = vmatpush1.msra.mxu0 0.0
    %1127 = vmatprep.subr.mxu0 0.0
    %1128 = vmatpush1.msra.mxu0 0.0
    %1129 = vmatprep.subr.mxu0 0.0
    %1130 = vmatpush1.msra.mxu0 0.0
    %1131 = vmatprep.subr.mxu0 0.0
    %1132 = vmatpush1.msra.mxu0 0.0
    %1133 = vmatprep.subr.mxu0 0.0
    %1134 = vmatpush1.msra.mxu0 0.0
    %1135 = vmatprep.subr.mxu0 0.0
    %1136 = vmatpush1.msra.mxu0 0.0
    %1137 = vmatprep.subr.mxu0 0.0
    %1138 = vmatpush1.msra.mxu0 0.0
    %1139 = vmatprep.subr.mxu0 0.0
    %1140 = vmatpush1.msra.mxu0 0.0
    %1141 = vmatprep.subr.mxu0 0.0
    %1142 = vmatpush1.msra.mxu0 0.0
    %1143 = vmatprep.subr.mxu0 0.0
    %1144 = vmatpush1.msra.mxu0 0.0
    %1145 = vmatprep.subr.mxu0 0.0
    %1146 = vmatpush1.msra.mxu0 0.0
    %1147 = vmatprep.subr.mxu0 0.0
    %1148 = vmatpush1.msra.mxu0 0.0
    %1149 = vmatprep.subr.mxu0 0.0
    %1150 = vmatpush1.msra.mxu0 0.0
    %1151 = vmatprep.subr.mxu0 0.0
    %1152 = vmatpush1.msra.mxu0 0.0
    %1153 = vmatprep.subr.mxu0 0.0
    %1154 = vmatpush1.msra.mxu0 0.0
    %1155 = vmatprep.mubr.f32.mxu0 0.0
    %1156 = vmatmul.mubr.f32.gmra.mrb[0].mxu0 %v1013
    %v1157 = vpop.f32.mrb[0].mxu0
    %v1158 = vadd.f32 0.0, %v1157
    %v1159 = vpop.f32.mrb[0].mxu0
    %v1160 = vadd.f32 0.0, %v1159
    %1161 = vdwg.mxu0
    %v1162 = vadd.f32 %v1016, %v1087
    %v1163 = vadd.f32 %v1017, %v1089
    %v1164 = vadd.f32 %v1018, %v1158
    %v1165 = vadd.f32 %v1019, %v1160
    %v1166 = vxor.u32 %v1162, 2147483648
    %v1167 = vxor.u32 %v1163, 2147483648
    %v1168 = vxor.u32 %v1164, 2147483648
    %v1169 = vmul.f32 %v1166, 1.442695
    %v1170 = vpow.pop %v1169
    %v1171 = vmul.f32 %v1167, 1.442695
    %v1172 = vpow.pop %v1171
    %v1173 = vmul.f32 %v1168, 1.442695
    %v1174 = vpow.pop %v1173
    %v1175 = vadd.f32 %v1170, 1.0
    %v1176 = vadd.f32 %v1172, 1.0
    %v1177 = vadd.f32 %v1174, 1.0
    %v1178 = vrcp.pop %v1175
    %v1179 = vmul.f32 1.0, %v1178
    %v1180 = vrcp.pop %v1176
    %v1181 = vmul.f32 1.0, %v1180
    %v1182 = vrcp.pop %v1177
    %v1183 = vmul.f32 1.0, %v1182
    %v1184 = vtanh.pop %v1165
    %v1185 = vmul.f32 %v1181, %v1011
    %v1186 = vmul.f32 %v1179, %v1184
    %v1187 = vadd.f32 %v1185, %v1186
    %v1188 = vtanh.pop %v1187
    %v1189 = vmul.f32 %v1183, %v1188
    %s1190 = scalar_lea.vmem [#allocation7], 8
    %1191 = vst [vmem:[%s1190] sm:$0xff] %v1189
    %s1192 = scalar_lea.vmem [#allocation5], 64
    %v1193 = vld [vmem:[%s1192] sm:$0xff]
    %v1194 = vld [vmem:[%s1192 + $0x8] sm:$0xff]
    %v1195 = vld [vmem:[%s1192 + $0x10] sm:$0xff]
    %v1196 = vld [vmem:[%s1192 + $0x18] sm:$0xff]
    %1197 = vmatprep.subr.mxu0 %v775
    %1198 = vmatpush1.msra.mxu0 %v774
    %1199 = vmatprep.subr.mxu0 %v779
    %1200 = vmatpush1.msra.mxu0 %v778
    %1201 = vmatprep.subr.mxu0 %v783
    %1202 = vmatpush1.msra.mxu0 %v782
    %1203 = vmatprep.subr.mxu0 %v787
    %1204 = vmatpush1.msra.mxu0 %v786
    %1205 = vmatprep.subr.mxu0 %v791
    %1206 = vmatpush1.msra.mxu0 %v790
    %1207 = vmatprep.subr.mxu0 %v795
    %1208 = vmatpush1.msra.mxu0 %v794
    %1209 = vmatprep.subr.mxu0 %v799
    %1210 = vmatpush1.msra.mxu0 %v798
    %1211 = vmatprep.subr.mxu0 %v803
    %1212 = vmatpush1.msra.mxu0 %v802
    %1213 = vmatprep.subr.mxu0 %v807
    %1214 = vmatpush1.msra.mxu0 %v806
    %1215 = vmatprep.subr.mxu0 %v811
    %1216 = vmatpush1.msra.mxu0 %v810
    %1217 = vmatprep.subr.mxu0 %v815
    %1218 = vmatpush1.msra.mxu0 %v814
    %1219 = vmatprep.subr.mxu0 %v819
    %1220 = vmatpush1.msra.mxu0 %v818
    %1221 = vmatprep.subr.mxu0 %v823
    %1222 = vmatpush1.msra.mxu0 %v822
    %1223 = vmatprep.subr.mxu0 %v827
    %1224 = vmatpush1.msra.mxu0 %v826
    %1225 = vmatprep.subr.mxu0 %v831
    %1226 = vmatpush1.msra.mxu0 %v830
    %1227 = vmatprep.subr.mxu0 %v835
    %1228 = vmatpush1.msra.mxu0 %v834
    %1229 = vmatprep.subr.mxu0 0.0
    %1230 = vmatpush1.msra.mxu0 0.0
    %1231 = vmatprep.subr.mxu0 0.0
    %1232 = vmatpush1.msra.mxu0 0.0
    %1233 = vmatprep.subr.mxu0 0.0
    %1234 = vmatpush1.msra.mxu0 0.0
    %1235 = vmatprep.subr.mxu0 0.0
    %1236 = vmatpush1.msra.mxu0 0.0
    %1237 = vmatprep.subr.mxu0 0.0
    %1238 = vmatpush1.msra.mxu0 0.0
    %1239 = vmatprep.subr.mxu0 0.0
    %1240 = vmatpush1.msra.mxu0 0.0
    %1241 = vmatprep.subr.mxu0 0.0
    %1242 = vmatpush1.msra.mxu0 0.0
    %1243 = vmatprep.subr.mxu0 0.0
    %1244 = vmatpush1.msra.mxu0 0.0
    %1245 = vmatprep.subr.mxu0 0.0
    %1246 = vmatpush1.msra.mxu0 0.0
    %1247 = vmatprep.subr.mxu0 0.0
    %1248 = vmatpush1.msra.mxu0 0.0
    %1249 = vmatprep.subr.mxu0 0.0
    %1250 = vmatpush1.msra.mxu0 0.0
    %1251 = vmatprep.subr.mxu0 0.0
    %1252 = vmatpush1.msra.mxu0 0.0
    %1253 = vmatprep.subr.mxu0 0.0
    %1254 = vmatpush1.msra.mxu0 0.0
    %1255 = vmatprep.subr.mxu0 0.0
    %1256 = vmatpush1.msra.mxu0 0.0
    %1257 = vmatprep.subr.mxu0 0.0
    %1258 = vmatpush1.msra.mxu0 0.0
    %1259 = vmatprep.subr.mxu0 0.0
    %1260 = vmatpush1.msra.mxu0 0.0
    %1261 = vmatprep.mubr.f32.mxu0 0.0
    %1262 = vmatmul.mubr.f32.gmra.mrb[0].mxu0 %v1189
    %v1263 = vpop.f32.mrb[0].mxu0
    %v1264 = vadd.f32 0.0, %v1263
    %v1265 = vpop.f32.mrb[0].mxu0
    %v1266 = vadd.f32 0.0, %v1265
    %1267 = vdwg.mxu0
    %1268 = vmatprep.subr.mxu0 %v777
    %1269 = vmatpush1.msra.mxu0 %v776
    %1270 = vmatprep.subr.mxu0 %v781
    %1271 = vmatpush1.msra.mxu0 %v780
    %1272 = vmatprep.subr.mxu0 %v785
    %1273 = vmatpush1.msra.mxu0 %v784
    %1274 = vmatprep.subr.mxu0 %v789
    %1275 = vmatpush1.msra.mxu0 %v788
    %1276 = vmatprep.subr.mxu0 %v793
    %1277 = vmatpush1.msra.mxu0 %v792
    %1278 = vmatprep.subr.mxu0 %v797
    %1279 = vmatpush1.msra.mxu0 %v796
    %1280 = vmatprep.subr.mxu0 %v801
    %1281 = vmatpush1.msra.mxu0 %v800
    %1282 = vmatprep.subr.mxu0 %v805
    %1283 = vmatpush1.msra.mxu0 %v804
    %1284 = vmatprep.subr.mxu0 %v809
    %1285 = vmatpush1.msra.mxu0 %v808
    %1286 = vmatprep.subr.mxu0 %v813
    %1287 = vmatpush1.msra.mxu0 %v812
    %1288 = vmatprep.subr.mxu0 %v817
    %1289 = vmatpush1.msra.mxu0 %v816
    %1290 = vmatprep.subr.mxu0 %v821
    %1291 = vmatpush1.msra.mxu0 %v820
    %1292 = vmatprep.subr.mxu0 %v825
    %1293 = vmatpush1.msra.mxu0 %v824
    %1294 = vmatprep.subr.mxu0 %v829
    %1295 = vmatpush1.msra.mxu0 %v828
    %1296 = vmatprep.subr.mxu0 %v833
    %1297 = vmatpush1.msra.mxu0 %v832
    %1298 = vmatprep.subr.mxu0 %v837
    %1299 = vmatpush1.msra.mxu0 %v836
    %1300 = vmatprep.subr.mxu0 0.0
    %1301 = vmatpush1.msra.mxu0 0.0
    %1302 = vmatprep.subr.mxu0 0.0
    %1303 = vmatpush1.msra.mxu0 0.0
    %1304 = vmatprep.subr.mxu0 0.0
    %1305 = vmatpush1.msra.mxu0 0.0
    %1306 = vmatprep.subr.mxu0 0.0
    %1307 = vmatpush1.msra.mxu0 0.0
    %1308 = vmatprep.subr.mxu0 0.0
    %1309 = vmatpush1.msra.mxu0 0.0
    %1310 = vmatprep.subr.mxu0 0.0
    %1311 = vmatpush1.msra.mxu0 0.0
    %1312 = vmatprep.subr.mxu0 0.0
    %1313 = vmatpush1.msra.mxu0 0.0
    %1314 = vmatprep.subr.mxu0 0.0
    %1315 = vmatpush1.msra.mxu0 0.0
    %1316 = vmatprep.subr.mxu0 0.0
    %1317 = vmatpush1.msra.mxu0 0.0
    %1318 = vmatprep.subr.mxu0 0.0
    %1319 = vmatpush1.msra.mxu0 0.0
    %1320 = vmatprep.subr.mxu0 0.0
    %1321 = vmatpush1.msra.mxu0 0.0
    %1322 = vmatprep.subr.mxu0 0.0
    %1323 = vmatpush1.msra.mxu0 0.0
    %1324 = vmatprep.subr.mxu0 0.0
    %1325 = vmatpush1.msra.mxu0 0.0
    %1326 = vmatprep.subr.mxu0 0.0
    %1327 = vmatpush1.msra.mxu0 0.0
    %1328 = vmatprep.subr.mxu0 0.0
    %1329 = vmatpush1.msra.mxu0 0.0
    %1330 = vmatprep.subr.mxu0 0.0
    %1331 = vmatpush1.msra.mxu0 0.0
    %1332 = vmatprep.mubr.f32.mxu0 0.0
    %1333 = vmatmul.mubr.f32.gmra.mrb[0].mxu0 %v1189
    %v1334 = vpop.f32.mrb[0].mxu0
    %v1335 = vadd.f32 0.0, %v1334
    %v1336 = vpop.f32.mrb[0].mxu0
    %v1337 = vadd.f32 0.0, %v1336
    %1338 = vdwg.mxu0
    %v1339 = vadd.f32 %v1193, %v1264
    %v1340 = vadd.f32 %v1194, %v1266
    %v1341 = vadd.f32 %v1195, %v1335
    %v1342 = vadd.f32 %v1196, %v1337
    %v1343 = vxor.u32 %v1339, 2147483648
    %v1344 = vxor.u32 %v1340, 2147483648
    %v1345 = vxor.u32 %v1341, 2147483648
    %v1346 = vmul.f32 %v1343, 1.442695
    %v1347 = vpow.pop %v1346
    %v1348 = vmul.f32 %v1344, 1.442695
    %v1349 = vpow.pop %v1348
    %v1350 = vmul.f32 %v1345, 1.442695
    %v1351 = vpow.pop %v1350
    %v1352 = vadd.f32 %v1347, 1.0
    %v1353 = vadd.f32 %v1349, 1.0
    %v1354 = vadd.f32 %v1351, 1.0
    %v1355 = vrcp.pop %v1352
    %v1356 = vmul.f32 1.0, %v1355
    %v1357 = vrcp.pop %v1353
    %v1358 = vmul.f32 1.0, %v1357
    %v1359 = vrcp.pop %v1354
    %v1360 = vmul.f32 1.0, %v1359
    %v1361 = vtanh.pop %v1342
    %v1362 = vmul.f32 %v1358, %v1187
    %v1363 = vmul.f32 %v1356, %v1361
    %v1364 = vadd.f32 %v1362, %v1363
    %v1365 = vtanh.pop %v1364
    %v1366 = vmul.f32 %v1360, %v1365
    %s1367 = scalar_lea.vmem [#allocation7], 16
    %1368 = vst [vmem:[%s1367] sm:$0xff] %v1366
    %s1369 = scalar_lea.vmem [#allocation5], 96
    %v1370 = vld [vmem:[%s1369] sm:$0xff]
    %v1371 = vld [vmem:[%s1369 + $0x8] sm:$0xff]
    %v1372 = vld [vmem:[%s1369 + $0x10] sm:$0xff]
    %v1373 = vld [vmem:[%s1369 + $0x18] sm:$0xff]
    %1374 = vmatprep.subr.mxu0 %v775
    %1375 = vmatpush1.msra.mxu0 %v774
    %1376 = vmatprep.subr.mxu0 %v779
    %1377 = vmatpush1.msra.mxu0 %v778
    %1378 = vmatprep.subr.mxu0 %v783
    %1379 = vmatpush1.msra.mxu0 %v782
    %1380 = vmatprep.subr.mxu0 %v787
    %1381 = vmatpush1.msra.mxu0 %v786
    %1382 = vmatprep.subr.mxu0 %v791
    %1383 = vmatpush1.msra.mxu0 %v790
    %1384 = vmatprep.subr.mxu0 %v795
    %1385 = vmatpush1.msra.mxu0 %v794
    %1386 = vmatprep.subr.mxu0 %v799
    %1387 = vmatpush1.msra.mxu0 %v798
    %1388 = vmatprep.subr.mxu0 %v803
    %1389 = vmatpush1.msra.mxu0 %v802
    %1390 = vmatprep.subr.mxu0 %v807
    %1391 = vmatpush1.msra.mxu0 %v806
    %1392 = vmatprep.subr.mxu0 %v811
    %1393 = vmatpush1.msra.mxu0 %v810
    %1394 = vmatprep.subr.mxu0 %v815
    %1395 = vmatpush1.msra.mxu0 %v814
    %1396 = vmatprep.subr.mxu0 %v819
    %1397 = vmatpush1.msra.mxu0 %v818
    %1398 = vmatprep.subr.mxu0 %v823
    %1399 = vmatpush1.msra.mxu0 %v822
    %1400 = vmatprep.subr.mxu0 %v827
    %1401 = vmatpush1.msra.mxu0 %v826
    %1402 = vmatprep.subr.mxu0 %v831
    %1403 = vmatpush1.msra.mxu0 %v830
    %1404 = vmatprep.subr.mxu0 %v835
    %1405 = vmatpush1.msra.mxu0 %v834
    %1406 = vmatprep.subr.mxu0 0.0
    %1407 = vmatpush1.msra.mxu0 0.0
    %1408 = vmatprep.subr.mxu0 0.0
    %1409 = vmatpush1.msra.mxu0 0.0
    %1410 = vmatprep.subr.mxu0 0.0
    %1411 = vmatpush1.msra.mxu0 0.0
    %1412 = vmatprep.subr.mxu0 0.0
    %1413 = vmatpush1.msra.mxu0 0.0
    %1414 = vmatprep.subr.mxu0 0.0
    %1415 = vmatpush1.msra.mxu0 0.0
    %1416 = vmatprep.subr.mxu0 0.0
    %1417 = vmatpush1.msra.mxu0 0.0
    %1418 = vmatprep.subr.mxu0 0.0
    %1419 = vmatpush1.msra.mxu0 0.0
    %1420 = vmatprep.subr.mxu0 0.0
    %1421 = vmatpush1.msra.mxu0 0.0
    %1422 = vmatprep.subr.mxu0 0.0
    %1423 = vmatpush1.msra.mxu0 0.0
    %1424 = vmatprep.subr.mxu0 0.0
    %1425 = vmatpush1.msra.mxu0 0.0
    %1426 = vmatprep.subr.mxu0 0.0
    %1427 = vmatpush1.msra.mxu0 0.0
    %1428 = vmatprep.subr.mxu0 0.0
    %1429 = vmatpush1.msra.mxu0 0.0
    %1430 = vmatprep.subr.mxu0 0.0
    %1431 = vmatpush1.msra.mxu0 0.0
    %1432 = vmatprep.subr.mxu0 0.0
    %1433 = vmatpush1.msra.mxu0 0.0
    %1434 = vmatprep.subr.mxu0 0.0
    %1435 = vmatpush1.msra.mxu0 0.0
    %1436 = vmatprep.subr.mxu0 0.0
    %1437 = vmatpush1.msra.mxu0 0.0
    %1438 = vmatprep.mubr.f32.mxu0 0.0
    %1439 = vmatmul.mubr.f32.gmra.mrb[0].mxu0 %v1366
    %v1440 = vpop.f32.mrb[0].mxu0
    %v1441 = vadd.f32 0.0, %v1440
    %v1442 = vpop.f32.mrb[0].mxu0
    %v1443 = vadd.f32 0.0, %v1442
    %1444 = vdwg.mxu0
    %1445 = vmatprep.subr.mxu0 %v777
    %1446 = vmatpush1.msra.mxu0 %v776
    %1447 = vmatprep.subr.mxu0 %v781
    %1448 = vmatpush1.msra.mxu0 %v780
    %1449 = vmatprep.subr.mxu0 %v785
    %1450 = vmatpush1.msra.mxu0 %v784
    %1451 = vmatprep.subr.mxu0 %v789
    %1452 = vmatpush1.msra.mxu0 %v788
    %1453 = vmatprep.subr.mxu0 %v793
    %1454 = vmatpush1.msra.mxu0 %v792
    %1455 = vmatprep.subr.mxu0 %v797
    %1456 = vmatpush1.msra.mxu0 %v796
    %1457 = vmatprep.subr.mxu0 %v801
    %1458 = vmatpush1.msra.mxu0 %v800
    %1459 = vmatprep.subr.mxu0 %v805
    %1460 = vmatpush1.msra.mxu0 %v804
    %1461 = vmatprep.subr.mxu0 %v809
    %1462 = vmatpush1.msra.mxu0 %v808
    %1463 = vmatprep.subr.mxu0 %v813
    %1464 = vmatpush1.msra.mxu0 %v812
    %1465 = vmatprep.subr.mxu0 %v817
    %1466 = vmatpush1.msra.mxu0 %v816
    %1467 = vmatprep.subr.mxu0 %v821
    %1468 = vmatpush1.msra.mxu0 %v820
    %1469 = vmatprep.subr.mxu0 %v825
    %1470 = vmatpush1.msra.mxu0 %v824
    %1471 = vmatprep.subr.mxu0 %v829
    %1472 = vmatpush1.msra.mxu0 %v828
    %1473 = vmatprep.subr.mxu0 %v833
    %1474 = vmatpush1.msra.mxu0 %v832
    %1475 = vmatprep.subr.mxu0 %v837
    %1476 = vmatpush1.msra.mxu0 %v836
    %1477 = vmatprep.subr.mxu0 0.0
    %1478 = vmatpush1.msra.mxu0 0.0
    %1479 = vmatprep.subr.mxu0 0.0
    %1480 = vmatpush1.msra.mxu0 0.0
    %1481 = vmatprep.subr.mxu0 0.0
    %1482 = vmatpush1.msra.mxu0 0.0
    %1483 = vmatprep.subr.mxu0 0.0
    %1484 = vmatpush1.msra.mxu0 0.0
    %1485 = vmatprep.subr.mxu0 0.0
    %1486 = vmatpush1.msra.mxu0 0.0
    %1487 = vmatprep.subr.mxu0 0.0
    %1488 = vmatpush1.msra.mxu0 0.0
    %1489 = vmatprep.subr.mxu0 0.0
    %1490 = vmatpush1.msra.mxu0 0.0
    %1491 = vmatprep.subr.mxu0 0.0
    %1492 = vmatpush1.msra.mxu0 0.0
    %1493 = vmatprep.subr.mxu0 0.0
    %1494 = vmatpush1.msra.mxu0 0.0
    %1495 = vmatprep.subr.mxu0 0.0
    %1496 = vmatpush1.msra.mxu0 0.0
    %1497 = vmatprep.subr.mxu0 0.0
    %1498 = vmatpush1.msra.mxu0 0.0
    %1499 = vmatprep.subr.mxu0 0.0
    %1500 = vmatpush1.msra.mxu0 0.0
    %1501 = vmatprep.subr.mxu0 0.0
    %1502 = vmatpush1.msra.mxu0 0.0
    %1503 = vmatprep.subr.mxu0 0.0
    %1504 = vmatpush1.msra.mxu0 0.0
    %1505 = vmatprep.subr.mxu0 0.0
    %1506 = vmatpush1.msra.mxu0 0.0
    %1507 = vmatprep.subr.mxu0 0.0
    %1508 = vmatpush1.msra.mxu0 0.0
    %1509 = vmatprep.mubr.f32.mxu0 0.0
    %1510 = vmatmul.mubr.f32.gmra.mrb[0].mxu0 %v1366
    %v1511 = vpop.f32.mrb[0].mxu0
    %v1512 = vadd.f32 0.0, %v1511
    %v1513 = vpop.f32.mrb[0].mxu0
    %v1514 = vadd.f32 0.0, %v1513
    %1515 = vdwg.mxu0
    %v1516 = vadd.f32 %v1370, %v1441
    %v1517 = vadd.f32 %v1371, %v1443
    %v1518 = vadd.f32 %v1372, %v1512
    %v1519 = vadd.f32 %v1373, %v1514
    %v1520 = vxor.u32 %v1516, 2147483648
    %v1521 = vxor.u32 %v1517, 2147483648
    %v1522 = vxor.u32 %v1518, 2147483648
    %v1523 = vmul.f32 %v1520, 1.442695
    %v1524 = vpow.pop %v1523
    %v1525 = vmul.f32 %v1521, 1.442695
    %v1526 = vpow.pop %v1525
    %v1527 = vmul.f32 %v1522, 1.442695
    %v1528 = vpow.pop %v1527
    %v1529 = vadd.f32 %v1524, 1.0
    %v1530 = vadd.f32 %v1526, 1.0
    %v1531 = vadd.f32 %v1528, 1.0
    %v1532 = vrcp.pop %v1529
    %v1533 = vmul.f32 1.0, %v1532
    %v1534 = vrcp.pop %v1530
    %v1535 = vmul.f32 1.0, %v1534
    %v1536 = vrcp.pop %v1531
    %v1537 = vmul.f32 1.0, %v1536
    %v1538 = vtanh.pop %v1519
    %v1539 = vmul.f32 %v1535, %v1364
    %v1540 = vmul.f32 %v1533, %v1538
    %v1541 = vadd.f32 %v1539, %v1540
    %v1542 = vtanh.pop %v1541
    %v1543 = vmul.f32 %v1537, %v1542
    %s1544 = scalar_lea.vmem [#allocation7], 24
    %1545 = vst [vmem:[%s1544] sm:$0xff] %v1543
    %s1546 = scalar_lea.vmem [#allocation5], 128
    %v1547 = vld [vmem:[%s1546] sm:$0xff]
    %v1548 = vld [vmem:[%s1546 + $0x8] sm:$0xff]
    %v1549 = vld [vmem:[%s1546 + $0x10] sm:$0xff]
    %v1550 = vld [vmem:[%s1546 + $0x18] sm:$0xff]
    %1551 = vmatprep.subr.mxu0 %v775
    %1552 = vmatpush1.msra.mxu0 %v774
    %1553 = vmatprep.subr.mxu0 %v779
    %1554 = vmatpush1.msra.mxu0 %v778
    %1555 = vmatprep.subr.mxu0 %v783
    %1556 = vmatpush1.msra.mxu0 %v782
    %1557 = vmatprep.subr.mxu0 %v787
    %1558 = vmatpush1.msra.mxu0 %v786
    %1559 = vmatprep.subr.mxu0 %v791
    %1560 = vmatpush1.msra.mxu0 %v790
    %1561 = vmatprep.subr.mxu0 %v795
    %1562 = vmatpush1.msra.mxu0 %v794
    %1563 = vmatprep.subr.mxu0 %v799
    %1564 = vmatpush1.msra.mxu0 %v798
    %1565 = vmatprep.subr.mxu0 %v803
    %1566 = vmatpush1.msra.mxu0 %v802
    %1567 = vmatprep.subr.mxu0 %v807
    %1568 = vmatpush1.msra.mxu0 %v806
    %1569 = vmatprep.subr.mxu0 %v811
    %1570 = vmatpush1.msra.mxu0 %v810
    %1571 = vmatprep.subr.mxu0 %v815
    %1572 = vmatpush1.msra.mxu0 %v814
    %1573 = vmatprep.subr.mxu0 %v819
    %1574 = vmatpush1.msra.mxu0 %v818
    %1575 = vmatprep.subr.mxu0 %v823
    %1576 = vmatpush1.msra.mxu0 %v822
    %1577 = vmatprep.subr.mxu0 %v827
    %1578 = vmatpush1.msra.mxu0 %v826
    %1579 = vmatprep.subr.mxu0 %v831
    %1580 = vmatpush1.msra.mxu0 %v830
    %1581 = vmatprep.subr.mxu0 %v835
    %1582 = vmatpush1.msra.mxu0 %v834
    %1583 = vmatprep.subr.mxu0 0.0
    %1584 = vmatpush1.msra.mxu0 0.0
    %1585 = vmatprep.subr.mxu0 0.0
    %1586 = vmatpush1.msra.mxu0 0.0
    %1587 = vmatprep.subr.mxu0 0.0
    %1588 = vmatpush1.msra.mxu0 0.0
    %1589 = vmatprep.subr.mxu0 0.0
    %1590 = vmatpush1.msra.mxu0 0.0
    %1591 = vmatprep.subr.mxu0 0.0
    %1592 = vmatpush1.msra.mxu0 0.0
    %1593 = vmatprep.subr.mxu0 0.0
    %1594 = vmatpush1.msra.mxu0 0.0
    %1595 = vmatprep.subr.mxu0 0.0
    %1596 = vmatpush1.msra.mxu0 0.0
    %1597 = vmatprep.subr.mxu0 0.0
    %1598 = vmatpush1.msra.mxu0 0.0
    %1599 = vmatprep.subr.mxu0 0.0
    %1600 = vmatpush1.msra.mxu0 0.0
    %1601 = vmatprep.subr.mxu0 0.0
    %1602 = vmatpush1.msra.mxu0 0.0
    %1603 = vmatprep.subr.mxu0 0.0
    %1604 = vmatpush1.msra.mxu0 0.0
    %1605 = vmatprep.subr.mxu0 0.0
    %1606 = vmatpush1.msra.mxu0 0.0
    %1607 = vmatprep.subr.mxu0 0.0
    %1608 = vmatpush1.msra.mxu0 0.0
    %1609 = vmatprep.subr.mxu0 0.0
    %1610 = vmatpush1.msra.mxu0 0.0
    %1611 = vmatprep.subr.mxu0 0.0
    %1612 = vmatpush1.msra.mxu0 0.0
    %1613 = vmatprep.subr.mxu0 0.0
    %1614 = vmatpush1.msra.mxu0 0.0
    %1615 = vmatprep.mubr.f32.mxu0 0.0
    %1616 = vmatmul.mubr.f32.gmra.mrb[0].mxu0 %v1543
    %v1617 = vpop.f32.mrb[0].mxu0
    %v1618 = vadd.f32 0.0, %v1617
    %v1619 = vpop.f32.mrb[0].mxu0
    %v1620 = vadd.f32 0.0, %v1619
    %1621 = vdwg.mxu0
    %1622 = vmatprep.subr.mxu0 %v777
    %1623 = vmatpush1.msra.mxu0 %v776
    %1624 = vmatprep.subr.mxu0 %v781
    %1625 = vmatpush1.msra.mxu0 %v780
    %1626 = vmatprep.subr.mxu0 %v785
    %1627 = vmatpush1.msra.mxu0 %v784
    %1628 = vmatprep.subr.mxu0 %v789
    %1629 = vmatpush1.msra.mxu0 %v788
    %1630 = vmatprep.subr.mxu0 %v793
    %1631 = vmatpush1.msra.mxu0 %v792
    %1632 = vmatprep.subr.mxu0 %v797
    %1633 = vmatpush1.msra.mxu0 %v796
    %1634 = vmatprep.subr.mxu0 %v801
    %1635 = vmatpush1.msra.mxu0 %v800
    %1636 = vmatprep.subr.mxu0 %v805
    %1637 = vmatpush1.msra.mxu0 %v804
    %1638 = vmatprep.subr.mxu0 %v809
    %1639 = vmatpush1.msra.mxu0 %v808
    %1640 = vmatprep.subr.mxu0 %v813
    %1641 = vmatpush1.msra.mxu0 %v812
    %1642 = vmatprep.subr.mxu0 %v817
    %1643 = vmatpush1.msra.mxu0 %v816
    %1644 = vmatprep.subr.mxu0 %v821
    %1645 = vmatpush1.msra.mxu0 %v820
    %1646 = vmatprep.subr.mxu0 %v825
    %1647 = vmatpush1.msra.mxu0 %v824
    %1648 = vmatprep.subr.mxu0 %v829
    %1649 = vmatpush1.msra.mxu0 %v828
    %1650 = vmatprep.subr.mxu0 %v833
    %1651 = vmatpush1.msra.mxu0 %v832
    %1652 = vmatprep.subr.mxu0 %v837
    %1653 = vmatpush1.msra.mxu0 %v836
    %1654 = vmatprep.subr.mxu0 0.0
    %1655 = vmatpush1.msra.mxu0 0.0
    %1656 = vmatprep.subr.mxu0 0.0
    %1657 = vmatpush1.msra.mxu0 0.0
    %1658 = vmatprep.subr.mxu0 0.0
    %1659 = vmatpush1.msra.mxu0 0.0
    %1660 = vmatprep.subr.mxu0 0.0
    %1661 = vmatpush1.msra.mxu0 0.0
    %1662 = vmatprep.subr.mxu0 0.0
    %1663 = vmatpush1.msra.mxu0 0.0
    %1664 = vmatprep.subr.mxu0 0.0
    %1665 = vmatpush1.msra.mxu0 0.0
    %1666 = vmatprep.subr.mxu0 0.0
    %1667 = vmatpush1.msra.mxu0 0.0
    %1668 = vmatprep.subr.mxu0 0.0
    %1669 = vmatpush1.msra.mxu0 0.0
    %1670 = vmatprep.subr.mxu0 0.0
    %1671 = vmatpush1.msra.mxu0 0.0
    %1672 = vmatprep.subr.mxu0 0.0
    %1673 = vmatpush1.msra.mxu0 0.0
    %1674 = vmatprep.subr.mxu0 0.0
    %1675 = vmatpush1.msra.mxu0 0.0
    %1676 = vmatprep.subr.mxu0 0.0
    %1677 = vmatpush1.msra.mxu0 0.0
    %1678 = vmatprep.subr.mxu0 0.0
    %1679 = vmatpush1.msra.mxu0 0.0
    %1680 = vmatprep.subr.mxu0 0.0
    %1681 = vmatpush1.msra.mxu0 0.0
    %1682 = vmatprep.subr.mxu0 0.0
    %1683 = vmatpush1.msra.mxu0 0.0
    %1684 = vmatprep.subr.mxu0 0.0
    %1685 = vmatpush1.msra.mxu0 0.0
    %1686 = vmatprep.mubr.f32.mxu0 0.0
    %1687 = vmatmul.mubr.f32.gmra.mrb[0].mxu0 %v1543
    %v1688 = vpop.f32.mrb[0].mxu0
    %v1689 = vadd.f32 0.0, %v1688
    %v1690 = vpop.f32.mrb[0].mxu0
    %v1691 = vadd.f32 0.0, %v1690
    %1692 = vdwg.mxu0
    %v1693 = vadd.f32 %v1547, %v1618
    %v1694 = vadd.f32 %v1548, %v1620
    %v1695 = vadd.f32 %v1549, %v1689
    %v1696 = vadd.f32 %v1550, %v1691
    %v1697 = vxor.u32 %v1693, 2147483648
    %v1698 = vxor.u32 %v1694, 2147483648
    %v1699 = vxor.u32 %v1695, 2147483648
    %v1700 = vmul.f32 %v1697, 1.442695
    %v1701 = vpow.pop %v1700
    %v1702 = vmul.f32 %v1698, 1.442695
    %v1703 = vpow.pop %v1702
    %v1704 = vmul.f32 %v1699, 1.442695
    %v1705 = vpow.pop %v1704
    %v1706 = vadd.f32 %v1701, 1.0
    %v1707 = vadd.f32 %v1703, 1.0
    %v1708 = vadd.f32 %v1705, 1.0
    %v1709 = vrcp.pop %v1706
    %v1710 = vmul.f32 1.0, %v1709
    %v1711 = vrcp.pop %v1707
    %v1712 = vmul.f32 1.0, %v1711
    %v1713 = vrcp.pop %v1708
    %v1714 = vmul.f32 1.0, %v1713
    %v1715 = vtanh.pop %v1696
    %v1716 = vmul.f32 %v1712, %v1541
    %v1717 = vmul.f32 %v1710, %v1715
    %v1718 = vadd.f32 %v1716, %v1717
    %v1719 = vtanh.pop %v1718
    %v1720 = vmul.f32 %v1714, %v1719
    %s1721 = scalar_lea.vmem [#allocation7], 32
    %1722 = vst [vmem:[%s1721] sm:$0xff] %v1720
    %s1723 = scalar_lea.vmem [#allocation5], 160
    %v1724 = vld [vmem:[%s1723] sm:$0xff]
    %v1725 = vld [vmem:[%s1723 + $0x8] sm:$0xff]
    %v1726 = vld [vmem:[%s1723 + $0x10] sm:$0xff]
    %v1727 = vld [vmem:[%s1723 + $0x18] sm:$0xff]
    %1728 = vmatprep.subr.mxu0 %v775
    %1729 = vmatpush1.msra.mxu0 %v774
    %1730 = vmatprep.subr.mxu0 %v779
    %1731 = vmatpush1.msra.mxu0 %v778
    %1732 = vmatprep.subr.mxu0 %v783
    %1733 = vmatpush1.msra.mxu0 %v782
    %1734 = vmatprep.subr.mxu0 %v787
    %1735 = vmatpush1.msra.mxu0 %v786
    %1736 = vmatprep.subr.mxu0 %v791
    %1737 = vmatpush1.msra.mxu0 %v790
    %1738 = vmatprep.subr.mxu0 %v795
    %1739 = vmatpush1.msra.mxu0 %v794
    %1740 = vmatprep.subr.mxu0 %v799
    %1741 = vmatpush1.msra.mxu0 %v798
    %1742 = vmatprep.subr.mxu0 %v803
    %1743 = vmatpush1.msra.mxu0 %v802
    %1744 = vmatprep.subr.mxu0 %v807
    %1745 = vmatpush1.msra.mxu0 %v806
    %1746 = vmatprep.subr.mxu0 %v811
    %1747 = vmatpush1.msra.mxu0 %v810
    %1748 = vmatprep.subr.mxu0 %v815
    %1749 = vmatpush1.msra.mxu0 %v814
    %1750 = vmatprep.subr.mxu0 %v819
    %1751 = vmatpush1.msra.mxu0 %v818
    %1752 = vmatprep.subr.mxu0 %v823
    %1753 = vmatpush1.msra.mxu0 %v822
    %1754 = vmatprep.subr.mxu0 %v827
    %1755 = vmatpush1.msra.mxu0 %v826
    %1756 = vmatprep.subr.mxu0 %v831
    %1757 = vmatpush1.msra.mxu0 %v830
    %1758 = vmatprep.subr.mxu0 %v835
    %1759 = vmatpush1.msra.mxu0 %v834
    %1760 = vmatprep.subr.mxu0 0.0
    %1761 = vmatpush1.msra.mxu0 0.0
    %1762 = vmatprep.subr.mxu0 0.0
    %1763 = vmatpush1.msra.mxu0 0.0
    %1764 = vmatprep.subr.mxu0 0.0
    %1765 = vmatpush1.msra.mxu0 0.0
    %1766 = vmatprep.subr.mxu0 0.0
    %1767 = vmatpush1.msra.mxu0 0.0
    %1768 = vmatprep.subr.mxu0 0.0
    %1769 = vmatpush1.msra.mxu0 0.0
    %1770 = vmatprep.subr.mxu0 0.0
    %1771 = vmatpush1.msra.mxu0 0.0
    %1772 = vmatprep.subr.mxu0 0.0
    %1773 = vmatpush1.msra.mxu0 0.0
    %1774 = vmatprep.subr.mxu0 0.0
    %1775 = vmatpush1.msra.mxu0 0.0
    %1776 = vmatprep.subr.mxu0 0.0
    %1777 = vmatpush1.msra.mxu0 0.0
    %1778 = vmatprep.subr.mxu0 0.0
    %1779 = vmatpush1.msra.mxu0 0.0
    %1780 = vmatprep.subr.mxu0 0.0
    %1781 = vmatpush1.msra.mxu0 0.0
    %1782 = vmatprep.subr.mxu0 0.0
    %1783 = vmatpush1.msra.mxu0 0.0
    %1784 = vmatprep.subr.mxu0 0.0
    %1785 = vmatpush1.msra.mxu0 0.0
    %1786 = vmatprep.subr.mxu0 0.0
    %1787 = vmatpush1.msra.mxu0 0.0
    %1788 = vmatprep.subr.mxu0 0.0
    %1789 = vmatpush1.msra.mxu0 0.0
    %1790 = vmatprep.subr.mxu0 0.0
    %1791 = vmatpush1.msra.mxu0 0.0
    %1792 = vmatprep.mubr.f32.mxu0 0.0
    %1793 = vmatmul.mubr.f32.gmra.mrb[0].mxu0 %v1720
    %v1794 = vpop.f32.mrb[0].mxu0
    %v1795 = vadd.f32 0.0, %v1794
    %v1796 = vpop.f32.mrb[0].mxu0
    %v1797 = vadd.f32 0.0, %v1796
    %1798 = vdwg.mxu0
    %1799 = vmatprep.subr.mxu0 %v777
    %1800 = vmatpush1.msra.mxu0 %v776
    %1801 = vmatprep.subr.mxu0 %v781
    %1802 = vmatpush1.msra.mxu0 %v780
    %1803 = vmatprep.subr.mxu0 %v785
    %1804 = vmatpush1.msra.mxu0 %v784
    %1805 = vmatprep.subr.mxu0 %v789
    %1806 = vmatpush1.msra.mxu0 %v788
    %1807 = vmatprep.subr.mxu0 %v793
    %1808 = vmatpush1.msra.mxu0 %v792
    %1809 = vmatprep.subr.mxu0 %v797
    %1810 = vmatpush1.msra.mxu0 %v796
    %1811 = vmatprep.subr.mxu0 %v801
    %1812 = vmatpush1.msra.mxu0 %v800
    %1813 = vmatprep.subr.mxu0 %v805
    %1814 = vmatpush1.msra.mxu0 %v804
    %1815 = vmatprep.subr.mxu0 %v809
    %1816 = vmatpush1.msra.mxu0 %v808
    %1817 = vmatprep.subr.mxu0 %v813
    %1818 = vmatpush1.msra.mxu0 %v812
    %1819 = vmatprep.subr.mxu0 %v817
    %1820 = vmatpush1.msra.mxu0 %v816
    %1821 = vmatprep.subr.mxu0 %v821
    %1822 = vmatpush1.msra.mxu0 %v820
    %1823 = vmatprep.subr.mxu0 %v825
    %1824 = vmatpush1.msra.mxu0 %v824
    %1825 = vmatprep.subr.mxu0 %v829
    %1826 = vmatpush1.msra.mxu0 %v828
    %1827 = vmatprep.subr.mxu0 %v833
    %1828 = vmatpush1.msra.mxu0 %v832
    %1829 = vmatprep.subr.mxu0 %v837
    %1830 = vmatpush1.msra.mxu0 %v836
    %1831 = vmatprep.subr.mxu0 0.0
    %1832 = vmatpush1.msra.mxu0 0.0
    %1833 = vmatprep.subr.mxu0 0.0
    %1834 = vmatpush1.msra.mxu0 0.0
    %1835 = vmatprep.subr.mxu0 0.0
    %1836 = vmatpush1.msra.mxu0 0.0
    %1837 = vmatprep.subr.mxu0 0.0
    %1838 = vmatpush1.msra.mxu0 0.0
    %1839 = vmatprep.subr.mxu0 0.0
    %1840 = vmatpush1.msra.mxu0 0.0
    %1841 = vmatprep.subr.mxu0 0.0
    %1842 = vmatpush1.msra.mxu0 0.0
    %1843 = vmatprep.subr.mxu0 0.0
    %1844 = vmatpush1.msra.mxu0 0.0
    %1845 = vmatprep.subr.mxu0 0.0
    %1846 = vmatpush1.msra.mxu0 0.0
    %1847 = vmatprep.subr.mxu0 0.0
    %1848 = vmatpush1.msra.mxu0 0.0
    %1849 = vmatprep.subr.mxu0 0.0
    %1850 = vmatpush1.msra.mxu0 0.0
    %1851 = vmatprep.subr.mxu0 0.0
    %1852 = vmatpush1.msra.mxu0 0.0
    %1853 = vmatprep.subr.mxu0 0.0
    %1854 = vmatpush1.msra.mxu0 0.0
    %1855 = vmatprep.subr.mxu0 0.0
    %1856 = vmatpush1.msra.mxu0 0.0
    %1857 = vmatprep.subr.mxu0 0.0
    %1858 = vmatpush1.msra.mxu0 0.0
    %1859 = vmatprep.subr.mxu0 0.0
    %1860 = vmatpush1.msra.mxu0 0.0
    %1861 = vmatprep.subr.mxu0 0.0
    %1862 = vmatpush1.msra.mxu0 0.0
    %1863 = vmatprep.mubr.f32.mxu0 0.0
    %1864 = vmatmul.mubr.f32.gmra.mrb[0].mxu0 %v1720
    %v1865 = vpop.f32.mrb[0].mxu0
    %v1866 = vadd.f32 0.0, %v1865
    %v1867 = vpop.f32.mrb[0].mxu0
    %v1868 = vadd.f32 0.0, %v1867
    %1869 = vdwg.mxu0
    %v1870 = vadd.f32 %v1724, %v1795
    %v1871 = vadd.f32 %v1725, %v1797
    %v1872 = vadd.f32 %v1726, %v1866
    %v1873 = vadd.f32 %v1727, %v1868
    %v1874 = vxor.u32 %v1870, 2147483648
    %v1875 = vxor.u32 %v1871, 2147483648
    %v1876 = vxor.u32 %v1872, 2147483648
    %v1877 = vmul.f32 %v1874, 1.442695
    %v1878 = vpow.pop %v1877
    %v1879 = vmul.f32 %v1875, 1.442695
    %v1880 = vpow.pop %v1879
    %v1881 = vmul.f32 %v1876, 1.442695
    %v1882 = vpow.pop %v1881
    %v1883 = vadd.f32 %v1878, 1.0
    %v1884 = vadd.f32 %v1880, 1.0
    %v1885 = vadd.f32 %v1882, 1.0
    %v1886 = vrcp.pop %v1883
    %v1887 = vmul.f32 1.0, %v1886
    %v1888 = vrcp.pop %v1884
    %v1889 = vmul.f32 1.0, %v1888
    %v1890 = vrcp.pop %v1885
    %v1891 = vmul.f32 1.0, %v1890
    %v1892 = vtanh.pop %v1873
    %v1893 = vmul.f32 %v1889, %v1718
    %v1894 = vmul.f32 %v1887, %v1892
    %v1895 = vadd.f32 %v1893, %v1894
    %v1896 = vtanh.pop %v1895
    %v1897 = vmul.f32 %v1891, %v1896
    %s1898 = scalar_lea.vmem [#allocation7], 40
    %1899 = vst [vmem:[%s1898] sm:$0xff] %v1897
    %s1900 = scalar_lea.vmem [#allocation5], 192
    %v1901 = vld [vmem:[%s1900] sm:$0xff]
    %v1902 = vld [vmem:[%s1900 + $0x8] sm:$0xff]
    %v1903 = vld [vmem:[%s1900 + $0x10] sm:$0xff]
    %v1904 = vld [vmem:[%s1900 + $0x18] sm:$0xff]
    %1905 = vmatprep.subr.mxu0 %v775
    %1906 = vmatpush1.msra.mxu0 %v774
    %1907 = vmatprep.subr.mxu0 %v779
    %1908 = vmatpush1.msra.mxu0 %v778
    %1909 = vmatprep.subr.mxu0 %v783
    %1910 = vmatpush1.msra.mxu0 %v782
    %1911 = vmatprep.subr.mxu0 %v787
    %1912 = vmatpush1.msra.mxu0 %v786
    %1913 = vmatprep.subr.mxu0 %v791
    %1914 = vmatpush1.msra.mxu0 %v790
    %1915 = vmatprep.subr.mxu0 %v795
    %1916 = vmatpush1.msra.mxu0 %v794
    %1917 = vmatprep.subr.mxu0 %v799
    %1918 = vmatpush1.msra.mxu0 %v798
    %1919 = vmatprep.subr.mxu0 %v803
    %1920 = vmatpush1.msra.mxu0 %v802
    %1921 = vmatprep.subr.mxu0 %v807
    %1922 = vmatpush1.msra.mxu0 %v806
    %1923 = vmatprep.subr.mxu0 %v811
    %1924 = vmatpush1.msra.mxu0 %v810
    %1925 = vmatprep.subr.mxu0 %v815
    %1926 = vmatpush1.msra.mxu0 %v814
    %1927 = vmatprep.subr.mxu0 %v819
    %1928 = vmatpush1.msra.mxu0 %v818
    %1929 = vmatprep.subr.mxu0 %v823
    %1930 = vmatpush1.msra.mxu0 %v822
    %1931 = vmatprep.subr.mxu0 %v827
    %1932 = vmatpush1.msra.mxu0 %v826
    %1933 = vmatprep.subr.mxu0 %v831
    %1934 = vmatpush1.msra.mxu0 %v830
    %1935 = vmatprep.subr.mxu0 %v835
    %1936 = vmatpush1.msra.mxu0 %v834
    %1937 = vmatprep.subr.mxu0 0.0
    %1938 = vmatpush1.msra.mxu0 0.0
    %1939 = vmatprep.subr.mxu0 0.0
    %1940 = vmatpush1.msra.mxu0 0.0
    %1941 = vmatprep.subr.mxu0 0.0
    %1942 = vmatpush1.msra.mxu0 0.0
    %1943 = vmatprep.subr.mxu0 0.0
    %1944 = vmatpush1.msra.mxu0 0.0
    %1945 = vmatprep.subr.mxu0 0.0
    %1946 = vmatpush1.msra.mxu0 0.0
    %1947 = vmatprep.subr.mxu0 0.0
    %1948 = vmatpush1.msra.mxu0 0.0
    %1949 = vmatprep.subr.mxu0 0.0
    %1950 = vmatpush1.msra.mxu0 0.0
    %1951 = vmatprep.subr.mxu0 0.0
    %1952 = vmatpush1.msra.mxu0 0.0
    %1953 = vmatprep.subr.mxu0 0.0
    %1954 = vmatpush1.msra.mxu0 0.0
    %1955 = vmatprep.subr.mxu0 0.0
    %1956 = vmatpush1.msra.mxu0 0.0
    %1957 = vmatprep.subr.mxu0 0.0
    %1958 = vmatpush1.msra.mxu0 0.0
    %1959 = vmatprep.subr.mxu0 0.0
    %1960 = vmatpush1.msra.mxu0 0.0
    %1961 = vmatprep.subr.mxu0 0.0
    %1962 = vmatpush1.msra.mxu0 0.0
    %1963 = vmatprep.subr.mxu0 0.0
    %1964 = vmatpush1.msra.mxu0 0.0
    %1965 = vmatprep.subr.mxu0 0.0
    %1966 = vmatpush1.msra.mxu0 0.0
    %1967 = vmatprep.subr.mxu0 0.0
    %1968 = vmatpush1.msra.mxu0 0.0
    %1969 = vmatprep.mubr.f32.mxu0 0.0
    %1970 = vmatmul.mubr.f32.gmra.mrb[0].mxu0 %v1897
    %v1971 = vpop.f32.mrb[0].mxu0
    %v1972 = vadd.f32 0.0, %v1971
    %v1973 = vpop.f32.mrb[0].mxu0
    %v1974 = vadd.f32 0.0, %v1973
    %1975 = vdwg.mxu0
    %1976 = vmatprep.subr.mxu0 %v777
    %1977 = vmatpush1.msra.mxu0 %v776
    %1978 = vmatprep.subr.mxu0 %v781
    %1979 = vmatpush1.msra.mxu0 %v780
    %1980 = vmatprep.subr.mxu0 %v785
    %1981 = vmatpush1.msra.mxu0 %v784
    %1982 = vmatprep.subr.mxu0 %v789
    %1983 = vmatpush1.msra.mxu0 %v788
    %1984 = vmatprep.subr.mxu0 %v793
    %1985 = vmatpush1.msra.mxu0 %v792
    %1986 = vmatprep.subr.mxu0 %v797
    %1987 = vmatpush1.msra.mxu0 %v796
    %1988 = vmatprep.subr.mxu0 %v801
    %1989 = vmatpush1.msra.mxu0 %v800
    %1990 = vmatprep.subr.mxu0 %v805
    %1991 = vmatpush1.msra.mxu0 %v804
    %1992 = vmatprep.subr.mxu0 %v809
    %1993 = vmatpush1.msra.mxu0 %v808
    %1994 = vmatprep.subr.mxu0 %v813
    %1995 = vmatpush1.msra.mxu0 %v812
    %1996 = vmatprep.subr.mxu0 %v817
    %1997 = vmatpush1.msra.mxu0 %v816
    %1998 = vmatprep.subr.mxu0 %v821
    %1999 = vmatpush1.msra.mxu0 %v820
    %2000 = vmatprep.subr.mxu0 %v825
    %2001 = vmatpush1.msra.mxu0 %v824
    %2002 = vmatprep.subr.mxu0 %v829
    %2003 = vmatpush1.msra.mxu0 %v828
    %2004 = vmatprep.subr.mxu0 %v833
    %2005 = vmatpush1.msra.mxu0 %v832
    %2006 = vmatprep.subr.mxu0 %v837
    %2007 = vmatpush1.msra.mxu0 %v836
    %2008 = vmatprep.subr.mxu0 0.0
    %2009 = vmatpush1.msra.mxu0 0.0
    %2010 = vmatprep.subr.mxu0 0.0
    %2011 = vmatpush1.msra.mxu0 0.0
    %2012 = vmatprep.subr.mxu0 0.0
    %2013 = vmatpush1.msra.mxu0 0.0
    %2014 = vmatprep.subr.mxu0 0.0
    %2015 = vmatpush1.msra.mxu0 0.0
    %2016 = vmatprep.subr.mxu0 0.0
    %2017 = vmatpush1.msra.mxu0 0.0
    %2018 = vmatprep.subr.mxu0 0.0
    %2019 = vmatpush1.msra.mxu0 0.0
    %2020 = vmatprep.subr.mxu0 0.0
    %2021 = vmatpush1.msra.mxu0 0.0
    %2022 = vmatprep.subr.mxu0 0.0
    %2023 = vmatpush1.msra.mxu0 0.0
    %2024 = vmatprep.subr.mxu0 0.0
    %2025 = vmatpush1.msra.mxu0 0.0
    %2026 = vmatprep.subr.mxu0 0.0
    %2027 = vmatpush1.msra.mxu0 0.0
    %2028 = vmatprep.subr.mxu0 0.0
    %2029 = vmatpush1.msra.mxu0 0.0
    %2030 = vmatprep.subr.mxu0 0.0
    %2031 = vmatpush1.msra.mxu0 0.0
    %2032 = vmatprep.subr.mxu0 0.0
    %2033 = vmatpush1.msra.mxu0 0.0
    %2034 = vmatprep.subr.mxu0 0.0
    %2035 = vmatpush1.msra.mxu0 0.0
    %2036 = vmatprep.subr.mxu0 0.0
    %2037 = vmatpush1.msra.mxu0 0.0
    %2038 = vmatprep.subr.mxu0 0.0
    %2039 = vmatpush1.msra.mxu0 0.0
    %2040 = vmatprep.mubr.f32.mxu0 0.0
    %2041 = vmatmul.mubr.f32.gmra.mrb[0].mxu0 %v1897
    %v2042 = vpop.f32.mrb[0].mxu0
    %v2043 = vadd.f32 0.0, %v2042
    %v2044 = vpop.f32.mrb[0].mxu0
    %v2045 = vadd.f32 0.0, %v2044
    %2046 = vdwg.mxu0
    %v2047 = vadd.f32 %v1901, %v1972
    %v2048 = vadd.f32 %v1902, %v1974
    %v2049 = vadd.f32 %v1903, %v2043
    %v2050 = vadd.f32 %v1904, %v2045
    %v2051 = vxor.u32 %v2047, 2147483648
    %v2052 = vxor.u32 %v2048, 2147483648
    %v2053 = vxor.u32 %v2049, 2147483648
    %v2054 = vmul.f32 %v2051, 1.442695
    %v2055 = vpow.pop %v2054
    %v2056 = vmul.f32 %v2052, 1.442695
    %v2057 = vpow.pop %v2056
    %v2058 = vmul.f32 %v2053, 1.442695
    %v2059 = vpow.pop %v2058
    %v2060 = vadd.f32 %v2055, 1.0
    %v2061 = vadd.f32 %v2057, 1.0
    %v2062 = vadd.f32 %v2059, 1.0
    %v2063 = vrcp.pop %v2060
    %v2064 = vmul.f32 1.0, %v2063
    %v2065 = vrcp.pop %v2061
    %v2066 = vmul.f32 1.0, %v2065
    %v2067 = vrcp.pop %v2062
    %v2068 = vmul.f32 1.0, %v2067
    %v2069 = vtanh.pop %v2050
    %v2070 = vmul.f32 %v2066, %v1895
    %v2071 = vmul.f32 %v2064, %v2069
    %v2072 = vadd.f32 %v2070, %v2071
    %v2073 = vtanh.pop %v2072
    %v2074 = vmul.f32 %v2068, %v2073
    %s2075 = scalar_lea.vmem [#allocation7], 48
    %2076 = vst [vmem:[%s2075] sm:$0xff] %v2074
    %s2077 = scalar_lea.vmem [#allocation5], 224
    %v2078 = vld [vmem:[%s2077] sm:$0xff]
    %v2079 = vld [vmem:[%s2077 + $0x8] sm:$0xff]
    %v2080 = vld [vmem:[%s2077 + $0x10] sm:$0xff]
    %v2081 = vld [vmem:[%s2077 + $0x18] sm:$0xff]
    %2082 = vmatprep.subr.mxu0 %v775
    %2083 = vmatpush1.msra.mxu0 %v774
    %2084 = vmatprep.subr.mxu0 %v779
    %2085 = vmatpush1.msra.mxu0 %v778
    %2086 = vmatprep.subr.mxu0 %v783
    %2087 = vmatpush1.msra.mxu0 %v782
    %2088 = vmatprep.subr.mxu0 %v787
    %2089 = vmatpush1.msra.mxu0 %v786
    %2090 = vmatprep.subr.mxu0 %v791
    %2091 = vmatpush1.msra.mxu0 %v790
    %2092 = vmatprep.subr.mxu0 %v795
    %2093 = vmatpush1.msra.mxu0 %v794
    %2094 = vmatprep.subr.mxu0 %v799
    %2095 = vmatpush1.msra.mxu0 %v798
    %2096 = vmatprep.subr.mxu0 %v803
    %2097 = vmatpush1.msra.mxu0 %v802
    %2098 = vmatprep.subr.mxu0 %v807
    %2099 = vmatpush1.msra.mxu0 %v806
    %2100 = vmatprep.subr.mxu0 %v811
    %2101 = vmatpush1.msra.mxu0 %v810
    %2102 = vmatprep.subr.mxu0 %v815
    %2103 = vmatpush1.msra.mxu0 %v814
    %2104 = vmatprep.subr.mxu0 %v819
    %2105 = vmatpush1.msra.mxu0 %v818
    %2106 = vmatprep.subr.mxu0 %v823
    %2107 = vmatpush1.msra.mxu0 %v822
    %2108 = vmatprep.subr.mxu0 %v827
    %2109 = vmatpush1.msra.mxu0 %v826
    %2110 = vmatprep.subr.mxu0 %v831
    %2111 = vmatpush1.msra.mxu0 %v830
    %2112 = vmatprep.subr.mxu0 %v835
    %2113 = vmatpush1.msra.mxu0 %v834
    %2114 = vmatprep.subr.mxu0 0.0
    %2115 = vmatpush1.msra.mxu0 0.0
    %2116 = vmatprep.subr.mxu0 0.0
    %2117 = vmatpush1.msra.mxu0 0.0
    %2118 = vmatprep.subr.mxu0 0.0
    %2119 = vmatpush1.msra.mxu0 0.0
    %2120 = vmatprep.subr.mxu0 0.0
    %2121 = vmatpush1.msra.mxu0 0.0
    %2122 = vmatprep.subr.mxu0 0.0
    %2123 = vmatpush1.msra.mxu0 0.0
    %2124 = vmatprep.subr.mxu0 0.0
    %2125 = vmatpush1.msra.mxu0 0.0
    %2126 = vmatprep.subr.mxu0 0.0
    %2127 = vmatpush1.msra.mxu0 0.0
    %2128 = vmatprep.subr.mxu0 0.0
    %2129 = vmatpush1.msra.mxu0 0.0
    %2130 = vmatprep.subr.mxu0 0.0
    %2131 = vmatpush1.msra.mxu0 0.0
    %2132 = vmatprep.subr.mxu0 0.0
    %2133 = vmatpush1.msra.mxu0 0.0
    %2134 = vmatprep.subr.mxu0 0.0
    %2135 = vmatpush1.msra.mxu0 0.0
    %2136 = vmatprep.subr.mxu0 0.0
    %2137 = vmatpush1.msra.mxu0 0.0
    %2138 = vmatprep.subr.mxu0 0.0
    %2139 = vmatpush1.msra.mxu0 0.0
    %2140 = vmatprep.subr.mxu0 0.0
    %2141 = vmatpush1.msra.mxu0 0.0
    %2142 = vmatprep.subr.mxu0 0.0
    %2143 = vmatpush1.msra.mxu0 0.0
    %2144 = vmatprep.subr.mxu0 0.0
    %2145 = vmatpush1.msra.mxu0 0.0
    %2146 = vmatprep.mubr.f32.mxu0 0.0
    %2147 = vmatmul.mubr.f32.gmra.mrb[0].mxu0 %v2074
    %v2148 = vpop.f32.mrb[0].mxu0
    %v2149 = vadd.f32 0.0, %v2148
    %v2150 = vpop.f32.mrb[0].mxu0
    %v2151 = vadd.f32 0.0, %v2150
    %2152 = vdwg.mxu0
    %2153 = vmatprep.subr.mxu0 %v777
    %2154 = vmatpush1.msra.mxu0 %v776
    %2155 = vmatprep.subr.mxu0 %v781
    %2156 = vmatpush1.msra.mxu0 %v780
    %2157 = vmatprep.subr.mxu0 %v785
    %2158 = vmatpush1.msra.mxu0 %v784
    %2159 = vmatprep.subr.mxu0 %v789
    %2160 = vmatpush1.msra.mxu0 %v788
    %2161 = vmatprep.subr.mxu0 %v793
    %2162 = vmatpush1.msra.mxu0 %v792
    %2163 = vmatprep.subr.mxu0 %v797
    %2164 = vmatpush1.msra.mxu0 %v796
    %2165 = vmatprep.subr.mxu0 %v801
    %2166 = vmatpush1.msra.mxu0 %v800
    %2167 = vmatprep.subr.mxu0 %v805
    %2168 = vmatpush1.msra.mxu0 %v804
    %2169 = vmatprep.subr.mxu0 %v809
    %2170 = vmatpush1.msra.mxu0 %v808
    %2171 = vmatprep.subr.mxu0 %v813
    %2172 = vmatpush1.msra.mxu0 %v812
    %2173 = vmatprep.subr.mxu0 %v817
    %2174 = vmatpush1.msra.mxu0 %v816
    %2175 = vmatprep.subr.mxu0 %v821
    %2176 = vmatpush1.msra.mxu0 %v820
    %2177 = vmatprep.subr.mxu0 %v825
    %2178 = vmatpush1.msra.mxu0 %v824
    %2179 = vmatprep.subr.mxu0 %v829
    %2180 = vmatpush1.msra.mxu0 %v828
    %2181 = vmatprep.subr.mxu0 %v833
    %2182 = vmatpush1.msra.mxu0 %v832
    %2183 = vmatprep.subr.mxu0 %v837
    %2184 = vmatpush1.msra.mxu0 %v836
    %2185 = vmatprep.subr.mxu0 0.0
    %2186 = vmatpush1.msra.mxu0 0.0
    %2187 = vmatprep.subr.mxu0 0.0
    %2188 = vmatpush1.msra.mxu0 0.0
    %2189 = vmatprep.subr.mxu0 0.0
    %2190 = vmatpush1.msra.mxu0 0.0
    %2191 = vmatprep.subr.mxu0 0.0
    %2192 = vmatpush1.msra.mxu0 0.0
    %2193 = vmatprep.subr.mxu0 0.0
    %2194 = vmatpush1.msra.mxu0 0.0
    %2195 = vmatprep.subr.mxu0 0.0
    %2196 = vmatpush1.msra.mxu0 0.0
    %2197 = vmatprep.subr.mxu0 0.0
    %2198 = vmatpush1.msra.mxu0 0.0
    %2199 = vmatprep.subr.mxu0 0.0
    %2200 = vmatpush1.msra.mxu0 0.0
    %2201 = vmatprep.subr.mxu0 0.0
    %2202 = vmatpush1.msra.mxu0 0.0
    %2203 = vmatprep.subr.mxu0 0.0
    %2204 = vmatpush1.msra.mxu0 0.0
    %2205 = vmatprep.subr.mxu0 0.0
    %2206 = vmatpush1.msra.mxu0 0.0
    %2207 = vmatprep.subr.mxu0 0.0
    %2208 = vmatpush1.msra.mxu0 0.0
    %2209 = vmatprep.subr.mxu0 0.0
    %2210 = vmatpush1.msra.mxu0 0.0
    %2211 = vmatprep.subr.mxu0 0.0
    %2212 = vmatpush1.msra.mxu0 0.0
    %2213 = vmatprep.subr.mxu0 0.0
    %2214 = vmatpush1.msra.mxu0 0.0
    %2215 = vmatprep.subr.mxu0 0.0
    %2216 = vmatpush1.msra.mxu0 0.0
    %2217 = vmatprep.mubr.f32.mxu0 0.0
    %2218 = vmatmul.mubr.f32.gmra.mrb[0].mxu0 %v2074
    %v2219 = vpop.f32.mrb[0].mxu0
    %v2220 = vadd.f32 0.0, %v2219
    %v2221 = vpop.f32.mrb[0].mxu0
    %v2222 = vadd.f32 0.0, %v2221
    %2223 = vdwg.mxu0
    %v2224 = vadd.f32 %v2078, %v2149
    %v2225 = vadd.f32 %v2079, %v2151
    %v2226 = vadd.f32 %v2080, %v2220
    %v2227 = vadd.f32 %v2081, %v2222
    %v2228 = vxor.u32 %v2224, 2147483648
    %v2229 = vxor.u32 %v2225, 2147483648
    %v2230 = vxor.u32 %v2226, 2147483648
    %v2231 = vmul.f32 %v2228, 1.442695
    %v2232 = vpow.pop %v2231
    %v2233 = vmul.f32 %v2229, 1.442695
    %v2234 = vpow.pop %v2233
    %v2235 = vmul.f32 %v2230, 1.442695
    %v2236 = vpow.pop %v2235
    %v2237 = vadd.f32 %v2232, 1.0
    %v2238 = vadd.f32 %v2234, 1.0
    %v2239 = vadd.f32 %v2236, 1.0
    %v2240 = vrcp.pop %v2237
    %v2241 = vmul.f32 1.0, %v2240
    %v2242 = vrcp.pop %v2238
    %v2243 = vmul.f32 1.0, %v2242
    %v2244 = vrcp.pop %v2239
    %v2245 = vmul.f32 1.0, %v2244
    %v2246 = vtanh.pop %v2227
    %v2247 = vmul.f32 %v2243, %v2072
    %v2248 = vmul.f32 %v2241, %v2246
    %v2249 = vadd.f32 %v2247, %v2248
    %v2250 = vtanh.pop %v2249
    %v2251 = vmul.f32 %v2245, %v2250
    %s2252 = scalar_lea.vmem [#allocation7], 56
    %2253 = vst [vmem:[%s2252] sm:$0xff] %v2251
    %2254 = vst [vmem:[%s5] sm:$0xff] %v2251
    %2255 = vst [vmem:[%s6] sm:$0xff] %v2249
    // Predicated region
    $region116: #{encoder_forward.3} parent=1 // pred_check
      _
    $region117: #{encoder_forward.3} parent=1 // pred_check_branch
      %2257 = sbr.rel (0) target = $region119
    $region118: #{encoder_forward.3} parent=1 // pred_region
      %s2259 = ssub.s32 1024, 1024
      %2260 = vsyncadd [#allocation8], %s2259
      %s2261 = sshll.u32 [#allocation7], 4
      %s2262 = int_to_ptr.vmem [resolvable:$true] %s2261
      %2267 = dma.vmem_to_hbm [thread:$0]  %s2262, 1024, %s4, [#allocation8], 128, 128, 8
    $region119: #{encoder_forward.3} parent=1 // pred_fallthru
      _
    // Predicated region
    $region120: #{encoder_forward.3} parent=1 // pred_check
      _
    $region121: #{encoder_forward.3} parent=1 // pred_check_branch
      %2269 = sbr.rel (0) target = $region123
    $region122: #{encoder_forward.3} parent=1 // pred_region
      _
    $region123: #{encoder_forward.3} parent=1 // pred_fallthru
      _
    // Predicated region
    $region124: #{encoder_forward.3} parent=1 // pred_check
      _
    $region125: #{encoder_forward.3} parent=1 // pred_check_branch
      %2271 = sbr.rel (0) target = $region127
    $region126: #{encoder_forward.3} parent=1 // pred_region
      _
    $region127: #{encoder_forward.3} parent=1 // pred_fallthru
      _
    // Predicated region
    $region128: #{encoder_forward.3} parent=1 // pred_check
      _
    $region129: #{encoder_forward.3} parent=1 // pred_check_branch
      %2273 = sbr.rel (0) target = $region131
    $region130: #{encoder_forward.3} parent=1 // pred_region
      %2274 = dma.done [#allocation8], 1024
    $region131: #{encoder_forward.3} parent=1 // pred_fallthru
      _
    // Predicated region
    $region132: #{encoder_forward.3} parent=1 // pred_check
      _
    $region133: #{encoder_forward.3} parent=1 // pred_check_branch
      %2276 = sbr.rel (0) target = $region135
    $region134: #{encoder_forward.3} parent=1 // pred_region
      _
    $region135: #{encoder_forward.3} parent=1 // pred_fallthru
      _
    // Predicated region
    $region136: #{encoder_forward.3} parent=1 // pred_check
      _
    $region137: #{encoder_forward.3} parent=1 // pred_check_branch
      %2278 = sbr.rel (0) target = $region139
    $region138: #{encoder_forward.3} parent=1 // pred_region
      _
    $region139: #{encoder_forward.3} parent=1 // pred_fallthru
      _
    %2279 = vsyncpa [#allocation8], 1
  %2280 = vsyncmov [#allocation6]
  %s2281 = vpop.sfrf %2280
  %p2282 = scmp.eq.s32.totalorder %s2281, 0
  %p2283 = pneg %p2282
  %2285 = shalt.err (%p2283)
  %s2286 = scalar_lea.sflag [#allocation6], 1
  %2287 = vsyncmov %s2286
  %s2288 = vpop.sfrf %2287
  %p2289 = scmp.eq.s32.totalorder %s2288, 0
  %p2290 = pneg %p2289
  %2292 = shalt.err (%p2290)
  %s2293 = scalar_lea.sflag [#allocation6], 2
  %2294 = vsyncmov %s2293
  %s2295 = vpop.sfrf %2294
  %p2296 = scmp.eq.s32.totalorder %s2295, 0
  %p2297 = pneg %p2296
  %2299 = shalt.err (%p2297)

</llo_original>
